<compile_context>
chip_gen: v6e
topology: v6e:2x2x1
jax: 0.10.0
libtpu: 0.0.40
codegen_flags: <defaults>
</compile_context>

<pallas_src>
import jax
import jax.numpy as jnp
from jax.experimental import pallas as pl
from jax.experimental.pallas import tpu as pltpu


def _make_resblock_kernel(H, W, C):
    Wp = W + 2
    P = (H + 2) * Wp          # padded spatial positions, flattened
    M = Wp + 1                # max |tap offset| on the flat axis
    E = P + 2 * M             # extended flat axis (margins absorb tap offsets)

    def kernel(xe_ref, mask_ref, w1t_ref, b1_ref, w2t_ref, b2_ref,
               out_ref, patches, mid_ext):
        # xe_ref   : (1, C, E)  zero-padded, flat-extended input (channels-first)
        # mask_ref : (1, P)     1.0 on interior positions, 0.0 on the pad ring
        # w*t_ref  : (C, 9*C)   packed conv weights  [c_out, tap*C + c_in]
        # b*_ref   : (C, 1)
        # out_ref  : (1, C, P)  conv result at all padded positions (ring discarded
        #                       by the wrapper slice)
        # patches  : VMEM (9*C, P)  im2col buffer, reused by both convs
        # mid_ext  : VMEM (C, E)    intermediate in the same extended layout

        # ---------------- conv1: im2col + one (C,9C) x (9C,P) matmul ----------------
        for dh in range(3):
            for dw in range(3):
                tap = dh * 3 + dw
                off = (dh - 1) * Wp + (dw - 1)          # in [-M, M]
                patches[tap * C:(tap + 1) * C, :] = \
                    xe_ref[0, :, M + off:M + off + P]
        mid = jnp.dot(w1t_ref[...], patches[...],
                      preferred_element_type=jnp.float32)            # (C, P)
        # bias + ReLU, then zero the pad ring (this IS conv2's zero padding)
        mid = jnp.maximum(mid + b1_ref[...], 0.0) * mask_ref[...]

        # Stage the intermediate in the extended layout; only the small margins need
        # explicit zeroing (the ring inside P is already zero thanks to the mask).
        mid_ext[:, 0:M] = jnp.zeros((C, M), jnp.float32)
        mid_ext[:, M + P:E] = jnp.zeros((C, M), jnp.float32)
        mid_ext[:, M:M + P] = mid

        # ---------------- conv2 ----------------
        for dh in range(3):
            for dw in range(3):
                tap = dh * 3 + dw
                off = (dh - 1) * Wp + (dw - 1)
                patches[tap * C:(tap + 1) * C, :] = \
                    mid_ext[:, M + off:M + off + P]
        acc2 = jnp.dot(w2t_ref[...], patches[...],
                       preferred_element_type=jnp.float32) + b2_ref[...]   # (C, P)

        # ---------------- scale 0.1 + residual (lane-dense store) ----------------
        residual = xe_ref[0, :, M:M + P]        # padded x; zero on the ring
        out_ref[0] = (acc2 * 0.1 + residual).astype(out_ref.dtype)

    return kernel


@jax.jit
def conv_relu_res_block_scale01(x_nchw, w1_hwio, b1, w2_hwio, b2):
    """x: (N, C, H, W) f32;  w1/w2: (3, 3, C, C) HWIO;  b1/b2: (C,)."""
    N, C, H, W = x_nchw.shape
    Hp, Wp = H + 2, W + 2
    P = Hp * Wp
    M = Wp + 1
    E = P + 2 * M

    # Channels-first, spatially zero-padded, flattened + margin-extended input.
    xpad = jnp.pad(x_nchw, ((0, 0), (0, 0), (1, 1), (1, 1)))            # (N,C,Hp,Wp)
    xext = jnp.pad(xpad.reshape(N, C, P), ((0, 0), (0, 0), (M, M)))     # (N,C,E)

    # Interior mask over the padded, flattened positions.
    ii = jnp.arange(Hp)
    jj = jnp.arange(Wp)
    interior = (((ii >= 1) & (ii <= H))[:, None]
                & ((jj >= 1) & (jj <= W))[None, :])
    mask = interior.astype(jnp.float32).reshape(1, P)

    # Pack conv weights for a single K = 9*C matmul:  (C_out, 9*C_in).
    w1t = w1_hwio.reshape(9 * C, C).T.astype(jnp.float32)
    w2t = w2_hwio.reshape(9 * C, C).T.astype(jnp.float32)
    b1c = b1.reshape(C, 1).astype(jnp.float32)
    b2c = b2.reshape(C, 1).astype(jnp.float32)

    kernel = _make_resblock_kernel(H, W, C)
    out_pad = pl.pallas_call(
        kernel,
        out_shape=jax.ShapeDtypeStruct((N, C, P), x_nchw.dtype),
        grid_spec=pltpu.PrefetchScalarGridSpec(
            num_scalar_prefetch=0,
            grid=(N,),
            in_specs=[
                pl.BlockSpec((1, C, E), lambda n: (n, 0, 0)),      # extended input
                pl.BlockSpec((1, P), lambda n: (0, 0)),            # interior mask
                pl.BlockSpec((C, 9 * C), lambda n: (0, 0)),        # packed w1
                pl.BlockSpec((C, 1), lambda n: (0, 0)),            # b1
                pl.BlockSpec((C, 9 * C), lambda n: (0, 0)),        # packed w2
                pl.BlockSpec((C, 1), lambda n: (0, 0)),            # b2
            ],
            out_specs=pl.BlockSpec((1, C, P), lambda n: (n, 0, 0)),
            scratch_shapes=[
                pltpu.VMEM((9 * C, P), jnp.float32),   # im2col patches (~730 KB)
                pltpu.VMEM((C, E), jnp.float32),       # extended intermediate (~90 KB)
            ],
        ),
        compiler_params=pltpu.CompilerParams(
            dimension_semantics=("parallel",)),
    )(xext, mask, w1t, b1c, w2t, b2c)

    # Drop the padding ring; everything stayed NCHW, so no transposes are needed.
    return out_pad.reshape(N, C, Hp, Wp)[:, :, 1:H + 1, 1:W + 1]


def _reference_forward(x_nchw, w1, b1, w2, b2):
    """Pure-JAX reference (matches the PyTorch forward)."""
    dn = ('NCHW', 'HWIO', 'NCHW')
    out = jax.lax.conv_general_dilated(x_nchw, w1, (1, 1), 'SAME',
                                       dimension_numbers=dn)
    out = jnp.maximum(out + b1.reshape(1, -1, 1, 1), 0.0)
    out = jax.lax.conv_general_dilated(out, w2, (1, 1), 'SAME',
                                       dimension_numbers=dn)
    out = out + b2.reshape(1, -1, 1, 1)
    return out * 0.1 + x_nchw


if __name__ == "__main__":
    N, C, H, W = 2, 64, 16, 16   # the module hard-codes 64 channels
    key = jax.random.PRNGKey(0)
    kx, k1, kb1, k2, kb2 = jax.random.split(key, 5)

    # Deterministic synthetic parameters (PyTorch-like uniform(-1/sqrt(fan_in), ...)).
    fan_in = C * 3 * 3
    bound = 1.0 / jnp.sqrt(fan_in)
    x = jax.random.normal(kx, (N, C, H, W), dtype=jnp.float32)
    w1 = jax.random.uniform(k1, (3, 3, C, C), jnp.float32, -bound, bound)   # HWIO
    b1 = jax.random.uniform(kb1, (C,), jnp.float32, -bound, bound)
    w2 = jax.random.uniform(k2, (3, 3, C, C), jnp.float32, -bound, bound)   # HWIO
    b2 = jax.random.uniform(kb2, (C,), jnp.float32, -bound, bound)

    out = jax.block_until_ready(conv_relu_res_block_scale01(x, w1, b1, w2, b2))

    ref = jax.block_until_ready(_reference_forward(x, w1, b1, w2, b2))
    assert out.shape == (N, C, H, W)
    assert jnp.allclose(out, ref, atol=1e-3, rtol=1e-3), "mismatch vs reference"

    print("KERNEL_OK")
</pallas_src>

<mosaic_0001>
module attributes {stable_mosaic.version = 11 : i64} {
  func.func @kernel(%arg0: i32, %arg1: memref<1x64x362xf32, #tpu.memory_space<vmem>>, %arg2: memref<1x324xf32, #tpu.memory_space<vmem>>, %arg3: memref<64x576xf32, #tpu.memory_space<vmem>>, %arg4: memref<64x1xf32, #tpu.memory_space<vmem>>, %arg5: memref<64x576xf32, #tpu.memory_space<vmem>>, %arg6: memref<64x1xf32, #tpu.memory_space<vmem>>, %arg7: memref<1x64x324xf32, #tpu.memory_space<vmem>>, %arg8: memref<576x324xf32, #tpu.memory_space<vmem>>, %arg9: memref<64x362xf32, #tpu.memory_space<vmem>>) attributes {dimension_semantics = [#tpu.dimension_semantics<parallel>], iteration_bounds = array<i64: 2>, scalar_prefetch = 0 : i64, scratch_operands = 2 : i64, tpu.core_type = #tpu.core_type<tc>, window_params = [{transform_indices = @transform_0, window_bounds = array<i64: 1, 64, 362>}, {pipeline_mode = #tpu.pipeline_mode<synchronous>, transform_indices = @transform_1, window_bounds = array<i64: 1, 324>}, {pipeline_mode = #tpu.pipeline_mode<synchronous>, transform_indices = @transform_2, window_bounds = array<i64: 64, 576>}, {pipeline_mode = #tpu.pipeline_mode<synchronous>, transform_indices = @transform_3, window_bounds = array<i64: 64, 1>}, {pipeline_mode = #tpu.pipeline_mode<synchronous>, transform_indices = @transform_4, window_bounds = array<i64: 64, 576>}, {pipeline_mode = #tpu.pipeline_mode<synchronous>, transform_indices = @transform_5, window_bounds = array<i64: 64, 1>}, {transform_indices = @transform_6, window_bounds = array<i64: 1, 64, 324>}]} {
    %c0 = arith.constant 0 : index
    %c0_0 = arith.constant 0 : index
    %c0_1 = arith.constant 0 : index
    %0 = vector.load %arg1[%c0, %c0_0, %c0_1] : memref<1x64x362xf32, #tpu.memory_space<vmem>>, vector<1x64x324xf32>
    %1 = vector.shape_cast %0 : vector<1x64x324xf32> to vector<64x324xf32>
    %c0_2 = arith.constant 0 : index
    %c0_3 = arith.constant 0 : index
    %2 = vector.load %arg8[%c0_2, %c0_3] : memref<576x324xf32, #tpu.memory_space<vmem>>, vector<64x324xf32>
    tpu.vector_store %arg8[%c0_2, %c0_3], %1 {strides = array<i32>} : memref<576x324xf32, #tpu.memory_space<vmem>>, vector<64x324xf32>,
    %c0_4 = arith.constant 0 : index
    %c0_5 = arith.constant 0 : index
    %c1 = arith.constant 1 : index
    %3 = vector.load %arg1[%c0_4, %c0_5, %c1] : memref<1x64x362xf32, #tpu.memory_space<vmem>>, vector<1x64x324xf32>
    %4 = vector.shape_cast %3 : vector<1x64x324xf32> to vector<64x324xf32>
    %c64 = arith.constant 64 : index
    %c0_6 = arith.constant 0 : index
    %5 = vector.load %arg8[%c64, %c0_6] : memref<576x324xf32, #tpu.memory_space<vmem>>, vector<64x324xf32>
    tpu.vector_store %arg8[%c64, %c0_6], %4 {strides = array<i32>} : memref<576x324xf32, #tpu.memory_space<vmem>>, vector<64x324xf32>,
    %c0_7 = arith.constant 0 : index
    %c0_8 = arith.constant 0 : index
    %c2 = arith.constant 2 : index
    %6 = vector.load %arg1[%c0_7, %c0_8, %c2] : memref<1x64x362xf32, #tpu.memory_space<vmem>>, vector<1x64x324xf32>
    %7 = vector.shape_cast %6 : vector<1x64x324xf32> to vector<64x324xf32>
    %c128 = arith.constant 128 : index
    %c0_9 = arith.constant 0 : index
    %8 = vector.load %arg8[%c128, %c0_9] : memref<576x324xf32, #tpu.memory_space<vmem>>, vector<64x324xf32>
    tpu.vector_store %arg8[%c128, %c0_9], %7 {strides = array<i32>} : memref<576x324xf32, #tpu.memory_space<vmem>>, vector<64x324xf32>,
    %c0_10 = arith.constant 0 : index
    %c0_11 = arith.constant 0 : index
    %c18 = arith.constant 18 : index
    %9 = vector.load %arg1[%c0_10, %c0_11, %c18] : memref<1x64x362xf32, #tpu.memory_space<vmem>>, vector<1x64x324xf32>
    %10 = vector.shape_cast %9 : vector<1x64x324xf32> to vector<64x324xf32>
    %c192 = arith.constant 192 : index
    %c0_12 = arith.constant 0 : index
    %11 = vector.load %arg8[%c192, %c0_12] : memref<576x324xf32, #tpu.memory_space<vmem>>, vector<64x324xf32>
    tpu.vector_store %arg8[%c192, %c0_12], %10 {strides = array<i32>} : memref<576x324xf32, #tpu.memory_space<vmem>>, vector<64x324xf32>,
    %c0_13 = arith.constant 0 : index
    %c0_14 = arith.constant 0 : index
    %c19 = arith.constant 19 : index
    %12 = vector.load %arg1[%c0_13, %c0_14, %c19] : memref<1x64x362xf32, #tpu.memory_space<vmem>>, vector<1x64x324xf32>
    %13 = vector.shape_cast %12 : vector<1x64x324xf32> to vector<64x324xf32>
    %c256 = arith.constant 256 : index
    %c0_15 = arith.constant 0 : index
    %14 = vector.load %arg8[%c256, %c0_15] : memref<576x324xf32, #tpu.memory_space<vmem>>, vector<64x324xf32>
    tpu.vector_store %arg8[%c256, %c0_15], %13 {strides = array<i32>} : memref<576x324xf32, #tpu.memory_space<vmem>>, vector<64x324xf32>,
    %c0_16 = arith.constant 0 : index
    %c0_17 = arith.constant 0 : index
    %c20 = arith.constant 20 : index
    %15 = vector.load %arg1[%c0_16, %c0_17, %c20] : memref<1x64x362xf32, #tpu.memory_space<vmem>>, vector<1x64x324xf32>
    %16 = vector.shape_cast %15 : vector<1x64x324xf32> to vector<64x324xf32>
    %c320 = arith.constant 320 : index
    %c0_18 = arith.constant 0 : index
    %17 = vector.load %arg8[%c320, %c0_18] : memref<576x324xf32, #tpu.memory_space<vmem>>, vector<64x324xf32>
    tpu.vector_store %arg8[%c320, %c0_18], %16 {strides = array<i32>} : memref<576x324xf32, #tpu.memory_space<vmem>>, vector<64x324xf32>,
    %c0_19 = arith.constant 0 : index
    %c0_20 = arith.constant 0 : index
    %c36 = arith.constant 36 : index
    %18 = vector.load %arg1[%c0_19, %c0_20, %c36] : memref<1x64x362xf32, #tpu.memory_space<vmem>>, vector<1x64x324xf32>
    %19 = vector.shape_cast %18 : vector<1x64x324xf32> to vector<64x324xf32>
    %c384 = arith.constant 384 : index
    %c0_21 = arith.constant 0 : index
    %20 = vector.load %arg8[%c384, %c0_21] : memref<576x324xf32, #tpu.memory_space<vmem>>, vector<64x324xf32>
    tpu.vector_store %arg8[%c384, %c0_21], %19 {strides = array<i32>} : memref<576x324xf32, #tpu.memory_space<vmem>>, vector<64x324xf32>,
    %c0_22 = arith.constant 0 : index
    %c0_23 = arith.constant 0 : index
    %c37 = arith.constant 37 : index
    %21 = vector.load %arg1[%c0_22, %c0_23, %c37] : memref<1x64x362xf32, #tpu.memory_space<vmem>>, vector<1x64x324xf32>
    %22 = vector.shape_cast %21 : vector<1x64x324xf32> to vector<64x324xf32>
    %c448 = arith.constant 448 : index
    %c0_24 = arith.constant 0 : index
    %23 = vector.load %arg8[%c448, %c0_24] : memref<576x324xf32, #tpu.memory_space<vmem>>, vector<64x324xf32>
    tpu.vector_store %arg8[%c448, %c0_24], %22 {strides = array<i32>} : memref<576x324xf32, #tpu.memory_space<vmem>>, vector<64x324xf32>,
    %c0_25 = arith.constant 0 : index
    %c0_26 = arith.constant 0 : index
    %c38 = arith.constant 38 : index
    %24 = vector.load %arg1[%c0_25, %c0_26, %c38] : memref<1x64x362xf32, #tpu.memory_space<vmem>>, vector<1x64x324xf32>
    %25 = vector.shape_cast %24 : vector<1x64x324xf32> to vector<64x324xf32>
    %c512 = arith.constant 512 : index
    %c0_27 = arith.constant 0 : index
    %26 = vector.load %arg8[%c512, %c0_27] : memref<576x324xf32, #tpu.memory_space<vmem>>, vector<64x324xf32>
    tpu.vector_store %arg8[%c512, %c0_27], %25 {strides = array<i32>} : memref<576x324xf32, #tpu.memory_space<vmem>>, vector<64x324xf32>,
    %c0_28 = arith.constant 0 : index
    %c0_29 = arith.constant 0 : index
    %27 = vector.load %arg3[%c0_28, %c0_29] : memref<64x576xf32, #tpu.memory_space<vmem>>, vector<64x576xf32>
    %c0_30 = arith.constant 0 : index
    %c0_31 = arith.constant 0 : index
    %28 = vector.load %arg8[%c0_30, %c0_31] : memref<576x324xf32, #tpu.memory_space<vmem>>, vector<576x324xf32>
    %cst = arith.constant dense<0.000000e+00> : vector<64x324xf32>
    %29 = tpu.matmul %27, %28, %cst {dimension_numbers = #tpu.dot_dimension_numbers<[1], [0], [0], [1], [0, 0, 1, 1], [], []>} : vector<64x576xf32>, vector<576x324xf32>, vector<64x324xf32> -> vector<64x324xf32>
    %c0_32 = arith.constant 0 : index
    %c0_33 = arith.constant 0 : index
    %30 = vector.load %arg4[%c0_32, %c0_33] : memref<64x1xf32, #tpu.memory_space<vmem>>, vector<64x1xf32>
    %31 = vector.broadcast %30 : vector<64x1xf32> to vector<64x324xf32>
    %32 = arith.addf %29, %31 : vector<64x324xf32>
    %cst_34 = arith.constant 0.000000e+00 : f32
    %33 = vector.broadcast %cst_34 : f32 to vector<64x324xf32>
    %34 = arith.maximumf %32, %33 : vector<64x324xf32>
    %c0_35 = arith.constant 0 : index
    %c0_36 = arith.constant 0 : index
    %35 = vector.load %arg2[%c0_35, %c0_36] : memref<1x324xf32, #tpu.memory_space<vmem>>, vector<1x324xf32>
    %36 = vector.broadcast %35 : vector<1x324xf32> to vector<64x324xf32>
    %37 = arith.mulf %34, %36 : vector<64x324xf32>
    %cst_37 = arith.constant 0.000000e+00 : f32
    %38 = vector.broadcast %cst_37 : f32 to vector<64x19xf32>
    %c0_38 = arith.constant 0 : index
    %c0_39 = arith.constant 0 : index
    %39 = vector.load %arg9[%c0_38, %c0_39] : memref<64x362xf32, #tpu.memory_space<vmem>>, vector<64x19xf32>
    tpu.vector_store %arg9[%c0_38, %c0_39], %38 {strides = array<i32>} : memref<64x362xf32, #tpu.memory_space<vmem>>, vector<64x19xf32>,
    %cst_40 = arith.constant 0.000000e+00 : f32
    %40 = vector.broadcast %cst_40 : f32 to vector<64x19xf32>
    %c0_41 = arith.constant 0 : index
    %c343 = arith.constant 343 : index
    %41 = vector.load %arg9[%c0_41, %c343] : memref<64x362xf32, #tpu.memory_space<vmem>>, vector<64x19xf32>
    tpu.vector_store %arg9[%c0_41, %c343], %40 {strides = array<i32>} : memref<64x362xf32, #tpu.memory_space<vmem>>, vector<64x19xf32>,
    %c0_42 = arith.constant 0 : index
    %c19_43 = arith.constant 19 : index
    %42 = vector.load %arg9[%c0_42, %c19_43] : memref<64x362xf32, #tpu.memory_space<vmem>>, vector<64x324xf32>
    tpu.vector_store %arg9[%c0_42, %c19_43], %37 {strides = array<i32>} : memref<64x362xf32, #tpu.memory_space<vmem>>, vector<64x324xf32>,
    %c0_44 = arith.constant 0 : index
    %c0_45 = arith.constant 0 : index
    %43 = vector.load %arg9[%c0_44, %c0_45] : memref<64x362xf32, #tpu.memory_space<vmem>>, vector<64x324xf32>
    %c0_46 = arith.constant 0 : index
    %c0_47 = arith.constant 0 : index
    %44 = vector.load %arg8[%c0_46, %c0_47] : memref<576x324xf32, #tpu.memory_space<vmem>>, vector<64x324xf32>
    tpu.vector_store %arg8[%c0_46, %c0_47], %43 {strides = array<i32>} : memref<576x324xf32, #tpu.memory_space<vmem>>, vector<64x324xf32>,
    %c0_48 = arith.constant 0 : index
    %c1_49 = arith.constant 1 : index
    %45 = vector.load %arg9[%c0_48, %c1_49] : memref<64x362xf32, #tpu.memory_space<vmem>>, vector<64x324xf32>
    %c64_50 = arith.constant 64 : index
    %c0_51 = arith.constant 0 : index
    %46 = vector.load %arg8[%c64_50, %c0_51] : memref<576x324xf32, #tpu.memory_space<vmem>>, vector<64x324xf32>
    tpu.vector_store %arg8[%c64_50, %c0_51], %45 {strides = array<i32>} : memref<576x324xf32, #tpu.memory_space<vmem>>, vector<64x324xf32>,
    %c0_52 = arith.constant 0 : index
    %c2_53 = arith.constant 2 : index
    %47 = vector.load %arg9[%c0_52, %c2_53] : memref<64x362xf32, #tpu.memory_space<vmem>>, vector<64x324xf32>
    %c128_54 = arith.constant 128 : index
    %c0_55 = arith.constant 0 : index
    %48 = vector.load %arg8[%c128_54, %c0_55] : memref<576x324xf32, #tpu.memory_space<vmem>>, vector<64x324xf32>
    tpu.vector_store %arg8[%c128_54, %c0_55], %47 {strides = array<i32>} : memref<576x324xf32, #tpu.memory_space<vmem>>, vector<64x324xf32>,
    %c0_56 = arith.constant 0 : index
    %c18_57 = arith.constant 18 : index
    %49 = vector.load %arg9[%c0_56, %c18_57] : memref<64x362xf32, #tpu.memory_space<vmem>>, vector<64x324xf32>
    %c192_58 = arith.constant 192 : index
    %c0_59 = arith.constant 0 : index
    %50 = vector.load %arg8[%c192_58, %c0_59] : memref<576x324xf32, #tpu.memory_space<vmem>>, vector<64x324xf32>
    tpu.vector_store %arg8[%c192_58, %c0_59], %49 {strides = array<i32>} : memref<576x324xf32, #tpu.memory_space<vmem>>, vector<64x324xf32>,
    %c0_60 = arith.constant 0 : index
    %c19_61 = arith.constant 19 : index
    %51 = vector.load %arg9[%c0_60, %c19_61] : memref<64x362xf32, #tpu.memory_space<vmem>>, vector<64x324xf32>
    %c256_62 = arith.constant 256 : index
    %c0_63 = arith.constant 0 : index
    %52 = vector.load %arg8[%c256_62, %c0_63] : memref<576x324xf32, #tpu.memory_space<vmem>>, vector<64x324xf32>
    tpu.vector_store %arg8[%c256_62, %c0_63], %51 {strides = array<i32>} : memref<576x324xf32, #tpu.memory_space<vmem>>, vector<64x324xf32>,
    %c0_64 = arith.constant 0 : index
    %c20_65 = arith.constant 20 : index
    %53 = vector.load %arg9[%c0_64, %c20_65] : memref<64x362xf32, #tpu.memory_space<vmem>>, vector<64x324xf32>
    %c320_66 = arith.constant 320 : index
    %c0_67 = arith.constant 0 : index
    %54 = vector.load %arg8[%c320_66, %c0_67] : memref<576x324xf32, #tpu.memory_space<vmem>>, vector<64x324xf32>
    tpu.vector_store %arg8[%c320_66, %c0_67], %53 {strides = array<i32>} : memref<576x324xf32, #tpu.memory_space<vmem>>, vector<64x324xf32>,
    %c0_68 = arith.constant 0 : index
    %c36_69 = arith.constant 36 : index
    %55 = vector.load %arg9[%c0_68, %c36_69] : memref<64x362xf32, #tpu.memory_space<vmem>>, vector<64x324xf32>
    %c384_70 = arith.constant 384 : index
    %c0_71 = arith.constant 0 : index
    %56 = vector.load %arg8[%c384_70, %c0_71] : memref<576x324xf32, #tpu.memory_space<vmem>>, vector<64x324xf32>
    tpu.vector_store %arg8[%c384_70, %c0_71], %55 {strides = array<i32>} : memref<576x324xf32, #tpu.memory_space<vmem>>, vector<64x324xf32>,
    %c0_72 = arith.constant 0 : index
    %c37_73 = arith.constant 37 : index
    %57 = vector.load %arg9[%c0_72, %c37_73] : memref<64x362xf32, #tpu.memory_space<vmem>>, vector<64x324xf32>
    %c448_74 = arith.constant 448 : index
    %c0_75 = arith.constant 0 : index
    %58 = vector.load %arg8[%c448_74, %c0_75] : memref<576x324xf32, #tpu.memory_space<vmem>>, vector<64x324xf32>
    tpu.vector_store %arg8[%c448_74, %c0_75], %57 {strides = array<i32>} : memref<576x324xf32, #tpu.memory_space<vmem>>, vector<64x324xf32>,
    %c0_76 = arith.constant 0 : index
    %c38_77 = arith.constant 38 : index
    %59 = vector.load %arg9[%c0_76, %c38_77] : memref<64x362xf32, #tpu.memory_space<vmem>>, vector<64x324xf32>
    %c512_78 = arith.constant 512 : index
    %c0_79 = arith.constant 0 : index
    %60 = vector.load %arg8[%c512_78, %c0_79] : memref<576x324xf32, #tpu.memory_space<vmem>>, vector<64x324xf32>
    tpu.vector_store %arg8[%c512_78, %c0_79], %59 {strides = array<i32>} : memref<576x324xf32, #tpu.memory_space<vmem>>, vector<64x324xf32>,
    %c0_80 = arith.constant 0 : index
    %c0_81 = arith.constant 0 : index
    %61 = vector.load %arg5[%c0_80, %c0_81] : memref<64x576xf32, #tpu.memory_space<vmem>>, vector<64x576xf32>
    %c0_82 = arith.constant 0 : index
    %c0_83 = arith.constant 0 : index
    %62 = vector.load %arg8[%c0_82, %c0_83] : memref<576x324xf32, #tpu.memory_space<vmem>>, vector<576x324xf32>
    %cst_84 = arith.constant dense<0.000000e+00> : vector<64x324xf32>
    %63 = tpu.matmul %61, %62, %cst_84 {dimension_numbers = #tpu.dot_dimension_numbers<[1], [0], [0], [1], [0, 0, 1, 1], [], []>} : vector<64x576xf32>, vector<576x324xf32>, vector<64x324xf32> -> vector<64x324xf32>
    %c0_85 = arith.constant 0 : index
    %c0_86 = arith.constant 0 : index
    %64 = vector.load %arg6[%c0_85, %c0_86] : memref<64x1xf32, #tpu.memory_space<vmem>>, vector<64x1xf32>
    %65 = vector.broadcast %64 : vector<64x1xf32> to vector<64x324xf32>
    %66 = arith.addf %63, %65 : vector<64x324xf32>
    %c0_87 = arith.constant 0 : index
    %c0_88 = arith.constant 0 : index
    %c19_89 = arith.constant 19 : index
    %67 = vector.load %arg1[%c0_87, %c0_88, %c19_89] : memref<1x64x362xf32, #tpu.memory_space<vmem>>, vector<1x64x324xf32>
    %68 = vector.shape_cast %67 : vector<1x64x324xf32> to vector<64x324xf32>
    %cst_90 = arith.constant 1.000000e-01 : f32
    %69 = vector.broadcast %cst_90 : f32 to vector<64x324xf32>
    %70 = arith.mulf %66, %69 : vector<64x324xf32>
    %71 = arith.addf %70, %68 : vector<64x324xf32>
    %c0_91 = arith.constant 0 : index
    %c0_92 = arith.constant 0 : index
    %c0_93 = arith.constant 0 : index
    %72 = vector.load %arg7[%c0_91, %c0_92, %c0_93] : memref<1x64x324xf32, #tpu.memory_space<vmem>>, vector<1x64x324xf32>
    %73 = vector.shape_cast %72 : vector<1x64x324xf32> to vector<64x324xf32>
    %74 = vector.shape_cast %71 : vector<64x324xf32> to vector<1x64x324xf32>
    tpu.vector_store %arg7[%c0_91, %c0_92, %c0_93], %74 {strides = array<i32>} : memref<1x64x324xf32, #tpu.memory_space<vmem>>, vector<1x64x324xf32>,
    return
  }
  func.func @transform_0(%arg0: i32) -> (i32, i32, i32) {
    %c0_i32 = arith.constant 0 : i32
    %c0_i32_0 = arith.constant 0 : i32
    %c0_i32_1 = arith.constant 0 : i32
    return %arg0, %c0_i32, %c0_i32_0 : i32, i32, i32
  }
  func.func @transform_1(%arg0: i32) -> (i32, i32) {
    %c0_i32 = arith.constant 0 : i32
    %c0_i32_0 = arith.constant 0 : i32
    %c0_i32_1 = arith.constant 0 : i32
    return %c0_i32, %c0_i32_0 : i32, i32
  }
  func.func @transform_2(%arg0: i32) -> (i32, i32) {
    %c0_i32 = arith.constant 0 : i32
    %c0_i32_0 = arith.constant 0 : i32
    %c0_i32_1 = arith.constant 0 : i32
    return %c0_i32, %c0_i32_0 : i32, i32
  }
  func.func @transform_3(%arg0: i32) -> (i32, i32) {
    %c0_i32 = arith.constant 0 : i32
    %c0_i32_0 = arith.constant 0 : i32
    %c0_i32_1 = arith.constant 0 : i32
    return %c0_i32, %c0_i32_0 : i32, i32
  }
  func.func @transform_4(%arg0: i32) -> (i32, i32) {
    %c0_i32 = arith.constant 0 : i32
    %c0_i32_0 = arith.constant 0 : i32
    %c0_i32_1 = arith.constant 0 : i32
    return %c0_i32, %c0_i32_0 : i32, i32
  }
  func.func @transform_5(%arg0: i32) -> (i32, i32) {
    %c0_i32 = arith.constant 0 : i32
    %c0_i32_0 = arith.constant 0 : i32
    %c0_i32_1 = arith.constant 0 : i32
    return %c0_i32, %c0_i32_0 : i32, i32
  }
  func.func @transform_6(%arg0: i32) -> (i32, i32, i32) {
    %c0_i32 = arith.constant 0 : i32
    %c0_i32_0 = arith.constant 0 : i32
    %c0_i32_1 = arith.constant 0 : i32
    return %arg0, %c0_i32, %c0_i32_0 : i32, i32, i32
  }
}

</mosaic_0001>

<llo_original>
// kernel: conv_relu_res_block_scale01.1
$region0: #{conv_relu_res_block_scale01.1}
  #allocation0 [shape = 'u32[]', space=smem, size = 0x4, offset = 0x4, fixed_abs, tag = 'smem constant byte address 0x4 - core index']
  #allocation1 [shape = 'u32[144,128]{1,0:T(1,128)}', space=vmem, size = 0x12000, scoped, tag = 'internal scratch']
  #allocation2 [shape = 'f32[576,324]{1,0:T(8,128)}', space=vmem, size = 0xd8000, scoped, tag = 'scratch operand']
  #allocation3 [shape = 'f32[64,362]{1,0:T(8,128)}', space=vmem, size = 0x18000, scoped, tag = 'scratch operand']
  %s0 = inlined_call_operand.vmem [shape: f32[2,64,362], index: 0, kind: input, shape index: {}]
  %s1 = inlined_call_operand.vmem [shape: f32[1,324], index: 1, kind: input, shape index: {}]
  %s2 = inlined_call_operand.vmem [shape: f32[64,576], index: 2, kind: input, shape index: {}]
  %s3 = inlined_call_operand.vmem [shape: f32[64,1], index: 3, kind: input, shape index: {}]
  %s4 = inlined_call_operand.vmem [shape: f32[64,576], index: 4, kind: input, shape index: {}]
  %s5 = inlined_call_operand.vmem [shape: f32[64,1], index: 5, kind: input, shape index: {}]
  %s6 = inlined_call_operand.vmem [shape: f32[2,64,324], index: 6, kind: output, shape index: {}]
  %s7 = sld [smem:[#allocation0]]
  $region57: #{conv_relu_res_block_scale01.1} parent=0
    _
  %s9 = ssub.s32 1, %s7
  %s10 = scalar_select 0, %s9, %s7
  loop: start=0, step=1, limit=4
  $region2: #{conv_relu_res_block_scale01.1} parent=0 // loop_pre_header
    _
  $region3: #{conv_relu_res_block_scale01.1} parent=0 // loop_header
    %s12 = sphi 0, %s16
    %p13 = scmp.ge.s32.totalorder %s12, 4
    %s22 = sphi 0, %s24
    %s25 = sphi 0, %s22
    %s26 = sphi 0, %s25
    %s42 = sphi 0, %s26
    %s46 = sphi 0, %s46
    %s48 = sphi 0, %s46
    %s49 = sphi 0, %s48
    %s63 = sphi 0, %s49
    %s67 = sphi 0, %s67
    %s69 = sphi 0, %s67
    %s70 = sphi 0, %s69
    %s84 = sphi 0, %s70
    %s88 = sphi 0, %s88
    %s90 = sphi 0, %s88
    %s91 = sphi 0, %s90
    %s105 = sphi 0, %s91
    %s109 = sphi 0, %s109
    %s111 = sphi 0, %s109
    %s112 = sphi 0, %s111
    %s126 = sphi 0, %s112
    %s130 = sphi 0, %s130
    %s132 = sphi 0, %s130
    %s133 = sphi 0, %s132
    %s147 = sphi 0, %s133
    %s153 = sphi 0, %s155
    %s156 = sphi 0, %s153
    %s157 = sphi 0, %s156
    %s173 = sphi 0, %s157
  $region4: #{conv_relu_res_block_scale01.1} parent=0 // loop_header_branch
    %15 = sbr.rel (%p13) target = $region8
  $region5: #{conv_relu_res_block_scale01.1} parent=0 // loop_body
    %s17 = ssub.s32 %s12, 1
    %s18 = ssub.s32 %s12, 2
    %s19 = sadd.s32 %s12, 1
    %s20 = ssub.s32 %s12, %s19
    %p21 = scmp.eq.s32.totalorder %s20, 0
    %s23 = sadd.s32 %s22, 1
    %s24 = scalar_select %p21, %s22, %s23
    %p27 = pneg %p21
    %p28 = scmp.eq.s32.totalorder %s12, 1
    %p29 = por %p27, %p28
    %p30 = scmp.ne.s32.totalorder %s22, %s25
    %p31 = scmp.eq.s32.totalorder %s12, 0
    %p32 = por %p30, %p31
    %p33 = scmp.ne.s32.totalorder %s22, %s25
    %p34 = scmp.eq.s32.totalorder %s17, 1
    %p35 = por %p33, %p34
    %p36 = scmp.ne.s32.totalorder %s25, %s26
    %p37 = scmp.eq.s32.totalorder %s17, 0
    %p38 = por %p36, %p37
    %p39 = scmp.ne.s32.totalorder %s25, %s26
    %p40 = scmp.eq.s32.totalorder %s18, 1
    %p41 = por %p39, %p40
    %p43 = scmp.ne.s32.totalorder %s26, %s42
    %p44 = scmp.eq.s32.totalorder %s18, 0
    %p45 = por %p43, %p44
    %s47 = sadd.s32 %s46, 1
    %p50 = scmp.eq.s32.totalorder %s12, 1
    %p51 = scmp.ne.s32.totalorder %s46, %s48
    %p52 = scmp.eq.s32.totalorder %s12, 0
    %p53 = por %p51, %p52
    %p54 = scmp.ne.s32.totalorder %s46, %s48
    %p55 = scmp.eq.s32.totalorder %s17, 1
    %p56 = por %p54, %p55
    %p57 = scmp.ne.s32.totalorder %s48, %s49
    %p58 = scmp.eq.s32.totalorder %s17, 0
    %p59 = por %p57, %p58
    %p60 = scmp.ne.s32.totalorder %s48, %s49
    %p61 = scmp.eq.s32.totalorder %s18, 1
    %p62 = por %p60, %p61
    %p64 = scmp.ne.s32.totalorder %s49, %s63
    %p65 = scmp.eq.s32.totalorder %s18, 0
    %p66 = por %p64, %p65
    %s68 = sadd.s32 %s67, 1
    %p71 = scmp.eq.s32.totalorder %s12, 1
    %p72 = scmp.ne.s32.totalorder %s67, %s69
    %p73 = scmp.eq.s32.totalorder %s12, 0
    %p74 = por %p72, %p73
    %p75 = scmp.ne.s32.totalorder %s67, %s69
    %p76 = scmp.eq.s32.totalorder %s17, 1
    %p77 = por %p75, %p76
    %p78 = scmp.ne.s32.totalorder %s69, %s70
    %p79 = scmp.eq.s32.totalorder %s17, 0
    %p80 = por %p78, %p79
    %p81 = scmp.ne.s32.totalorder %s69, %s70
    %p82 = scmp.eq.s32.totalorder %s18, 1
    %p83 = por %p81, %p82
    %p85 = scmp.ne.s32.totalorder %s70, %s84
    %p86 = scmp.eq.s32.totalorder %s18, 0
    %p87 = por %p85, %p86
    %s89 = sadd.s32 %s88, 1
    %p92 = scmp.eq.s32.totalorder %s12, 1
    %p93 = scmp.ne.s32.totalorder %s88, %s90
    %p94 = scmp.eq.s32.totalorder %s12, 0
    %p95 = por %p93, %p94
    %p96 = scmp.ne.s32.totalorder %s88, %s90
    %p97 = scmp.eq.s32.totalorder %s17, 1
    %p98 = por %p96, %p97
    %p99 = scmp.ne.s32.totalorder %s90, %s91
    %p100 = scmp.eq.s32.totalorder %s17, 0
    %p101 = por %p99, %p100
    %p102 = scmp.ne.s32.totalorder %s90, %s91
    %p103 = scmp.eq.s32.totalorder %s18, 1
    %p104 = por %p102, %p103
    %p106 = scmp.ne.s32.totalorder %s91, %s105
    %p107 = scmp.eq.s32.totalorder %s18, 0
    %p108 = por %p106, %p107
    %s110 = sadd.s32 %s109, 1
    %p113 = scmp.eq.s32.totalorder %s12, 1
    %p114 = scmp.ne.s32.totalorder %s109, %s111
    %p115 = scmp.eq.s32.totalorder %s12, 0
    %p116 = por %p114, %p115
    %p117 = scmp.ne.s32.totalorder %s109, %s111
    %p118 = scmp.eq.s32.totalorder %s17, 1
    %p119 = por %p117, %p118
    %p120 = scmp.ne.s32.totalorder %s111, %s112
    %p121 = scmp.eq.s32.totalorder %s17, 0
    %p122 = por %p120, %p121
    %p123 = scmp.ne.s32.totalorder %s111, %s112
    %p124 = scmp.eq.s32.totalorder %s18, 1
    %p125 = por %p123, %p124
    %p127 = scmp.ne.s32.totalorder %s112, %s126
    %p128 = scmp.eq.s32.totalorder %s18, 0
    %p129 = por %p127, %p128
    %s131 = sadd.s32 %s130, 1
    %p134 = scmp.eq.s32.totalorder %s12, 1
    %p135 = scmp.ne.s32.totalorder %s130, %s132
    %p136 = scmp.eq.s32.totalorder %s12, 0
    %p137 = por %p135, %p136
    %p138 = scmp.ne.s32.totalorder %s130, %s132
    %p139 = scmp.eq.s32.totalorder %s17, 1
    %p140 = por %p138, %p139
    %p141 = scmp.ne.s32.totalorder %s132, %s133
    %p142 = scmp.eq.s32.totalorder %s17, 0
    %p143 = por %p141, %p142
    %p144 = scmp.ne.s32.totalorder %s132, %s133
    %p145 = scmp.eq.s32.totalorder %s18, 1
    %p146 = por %p144, %p145
    %p148 = scmp.ne.s32.totalorder %s133, %s147
    %p149 = scmp.eq.s32.totalorder %s18, 0
    %p150 = por %p148, %p149
    %s151 = ssub.s32 %s12, %s19
    %p152 = scmp.eq.s32.totalorder %s151, 0
    %s154 = sadd.s32 %s153, 1
    %s155 = scalar_select %p152, %s153, %s154
    %p158 = pneg %p152
    %p159 = scmp.eq.s32.totalorder %s12, 1
    %p160 = por %p158, %p159
    %p161 = scmp.ne.s32.totalorder %s153, %s156
    %p162 = scmp.eq.s32.totalorder %s12, 0
    %p163 = por %p161, %p162
    %p164 = scmp.ne.s32.totalorder %s153, %s156
    %p165 = scmp.eq.s32.totalorder %s17, 1
    %p166 = por %p164, %p165
    %p167 = scmp.ne.s32.totalorder %s156, %s157
    %p168 = scmp.eq.s32.totalorder %s17, 0
    %p169 = por %p167, %p168
    %p170 = scmp.ne.s32.totalorder %s156, %s157
    %p171 = scmp.eq.s32.totalorder %s18, 1
    %p172 = por %p170, %p171
    %p174 = scmp.ne.s32.totalorder %s157, %s173
    %p175 = scmp.eq.s32.totalorder %s18, 0
    %p176 = por %p174, %p175
    %p177 = scmp.le.s32.totalorder 1, %s12
    %p178 = scmp.lt.s32.totalorder %s12, 3
    %p179 = pnand %p177, %p178
    %p180 = pneg %p179
    // Predicated region
    $region9: #{conv_relu_res_block_scale01.1} parent=5 // pred_check
      _
    $region10: #{conv_relu_res_block_scale01.1} parent=5 // pred_check_branch
      %182 = sbr.rel (%p179) target = $region12
    $region11: #{conv_relu_res_block_scale01.1} parent=5 // pred_region
      %s183 = ssub.s32 %s12, 1
      // Predicated region
      $region13: #{conv_relu_res_block_scale01.1} parent=11 // pred_check
        %p184 = pneg %p59
      $region14: #{conv_relu_res_block_scale01.1} parent=11 // pred_check_branch
        %186 = sbr.rel (%p184) target = $region16
      $region15: #{conv_relu_res_block_scale01.1} parent=11 // pred_region
        _
      $region16: #{conv_relu_res_block_scale01.1} parent=11 // pred_fallthru
        _
      // Predicated region
      $region17: #{conv_relu_res_block_scale01.1} parent=11 // pred_check
        %p187 = pneg %p80
      $region18: #{conv_relu_res_block_scale01.1} parent=11 // pred_check_branch
        %189 = sbr.rel (%p187) target = $region20
      $region19: #{conv_relu_res_block_scale01.1} parent=11 // pred_region
        _
      $region20: #{conv_relu_res_block_scale01.1} parent=11 // pred_fallthru
        _
      // Predicated region
      $region21: #{conv_relu_res_block_scale01.1} parent=11 // pred_check
        %p190 = pneg %p101
      $region22: #{conv_relu_res_block_scale01.1} parent=11 // pred_check_branch
        %192 = sbr.rel (%p190) target = $region24
      $region23: #{conv_relu_res_block_scale01.1} parent=11 // pred_region
        _
      $region24: #{conv_relu_res_block_scale01.1} parent=11 // pred_fallthru
        _
      // Predicated region
      $region25: #{conv_relu_res_block_scale01.1} parent=11 // pred_check
        %p193 = pneg %p122
      $region26: #{conv_relu_res_block_scale01.1} parent=11 // pred_check_branch
        %195 = sbr.rel (%p193) target = $region28
      $region27: #{conv_relu_res_block_scale01.1} parent=11 // pred_region
        _
      $region28: #{conv_relu_res_block_scale01.1} parent=11 // pred_fallthru
        _
      // Predicated region
      $region29: #{conv_relu_res_block_scale01.1} parent=11 // pred_check
        %p196 = pneg %p143
      $region30: #{conv_relu_res_block_scale01.1} parent=11 // pred_check_branch
        %198 = sbr.rel (%p196) target = $region32
      $region31: #{conv_relu_res_block_scale01.1} parent=11 // pred_region
        _
      $region32: #{conv_relu_res_block_scale01.1} parent=11 // pred_fallthru
        _
    $region12: #{conv_relu_res_block_scale01.1} parent=5 // pred_fallthru
      _
    %p199 = scmp.lt.s32.totalorder %s12, 2
    // Predicated region
    $region33: #{conv_relu_res_block_scale01.1} parent=5 // pred_check
      %p200 = pneg %p199
    $region34: #{conv_relu_res_block_scale01.1} parent=5 // pred_check_branch
      %202 = sbr.rel (%p200) target = $region36
    $region35: #{conv_relu_res_block_scale01.1} parent=5 // pred_region
      // Predicated region
      $region37: #{conv_relu_res_block_scale01.1} parent=35 // pred_check
        %p203 = pneg %p32
      $region38: #{conv_relu_res_block_scale01.1} parent=35 // pred_check_branch
        %205 = sbr.rel (%p203) target = $region40
      $region39: #{conv_relu_res_block_scale01.1} parent=35 // pred_region
        %p206 = scmp.lt.s32.totalorder %s12, 1
        %s207 = scalar_select %p206, %s12, 1
        %s208 = smul.addr %s207, 24
        %s209 = smul.addr %s208, 8
        %s210 = scalar_lea.vmem %s0, %s209
      $region40: #{conv_relu_res_block_scale01.1} parent=35 // pred_fallthru
        _
    $region36: #{conv_relu_res_block_scale01.1} parent=5 // pred_fallthru
      _
    %p211 = scmp.le.s32.totalorder 1, %s12
    %p212 = scmp.lt.s32.totalorder %s12, 3
    %p213 = pnand %p211, %p212
    %p214 = pneg %p213
    // Predicated region
    $region41: #{conv_relu_res_block_scale01.1} parent=5 // pred_check
      _
    $region42: #{conv_relu_res_block_scale01.1} parent=5 // pred_check_branch
      %216 = sbr.rel (%p213) target = $region44
    $region43: #{conv_relu_res_block_scale01.1} parent=5 // pred_region
      %s217 = ssub.s32 %s12, 1
      %p218 = scmp.lt.s32.totalorder %s17, 1
      %s219 = scalar_select %p218, %s17, 1
      %s220 = smul.addr %s219, 24
      %s221 = smul.addr %s220, 8
      %s222 = scalar_lea.vmem %s0, %s221
      %p223 = pneg %p38
      %p224 = pneg %p35
      %p225 = pneg %p59
      %p226 = pneg %p56
      %p227 = pneg %p80
      %p228 = pneg %p77
      %p229 = pneg %p101
      %p230 = pneg %p98
      %p231 = pneg %p122
      %p232 = pneg %p119
      %p233 = pneg %p143
      %p234 = pneg %p140
      %p235 = pneg %p169
      %p236 = pneg %p166
      %p237 = scmp.lt.s32.totalorder %s17, 1
      %s238 = scalar_select %p237, %s17, 1
      %s239 = smul.addr %s238, 24
      %s240 = smul.addr %s239, 8
      %s241 = scalar_lea.vmem %s6, %s240
      %p242 = scmp.lt.s32.totalorder %s17, 1
      %s243 = scalar_select %p242, %s17, 1
      %s244 = smul.addr %s243, 24
      %s245 = smul.addr %s244, 8
      %s246 = scalar_lea.vmem %s0, %s245
      %p247 = scmp.lt.s32.totalorder %s17, 1
      %s248 = scalar_select %p247, %s17, 1
      %s249 = smul.addr %s248, 24
      %s250 = smul.addr %s249, 8
      %s251 = scalar_lea.vmem %s6, %s250
      %v252 = vld [vmem:[%s246] sm:$0xff]
      %v253 = vld [vmem:[%s246 + $0x8] sm:$0xff]
      %v254 = vld [vmem:[%s246 + $0x10] sm:$0xff]
      %v255 = vld [vmem:[%s246 + $0x18] sm:$0xff]
      %v256 = vld [vmem:[%s246 + $0x20] sm:$0xff]
      %v257 = vld [vmem:[%s246 + $0x28] sm:$0xff]
      %v258 = vld [vmem:[%s246 + $0x30] sm:$0xff]
      %v259 = vld [vmem:[%s246 + $0x38] sm:$0xff]
      %v260 = vld [vmem:[%s246 + $0x40] sm:$0xff]
      %v261 = vld [vmem:[%s246 + $0x48] sm:$0xff]
      %v262 = vld [vmem:[%s246 + $0x50] sm:$0xff]
      %v263 = vld [vmem:[%s246 + $0x58] sm:$0xff]
      %v264 = vld [vmem:[%s246 + $0x60] sm:$0xff]
      %v265 = vld [vmem:[%s246 + $0x68] sm:$0xff]
      %v266 = vld [vmem:[%s246 + $0x70] sm:$0xff]
      %v267 = vld [vmem:[%s246 + $0x78] sm:$0xff]
      %v268 = vld [vmem:[%s246 + $0x80] sm:$0xff]
      %v269 = vld [vmem:[%s246 + $0x88] sm:$0xff]
      %v270 = vld [vmem:[%s246 + $0x90] sm:$0xff]
      %v271 = vld [vmem:[%s246 + $0x98] sm:$0xff]
      %v272 = vld [vmem:[%s246 + $0xa0] sm:$0xff]
      %v273 = vld [vmem:[%s246 + $0xa8] sm:$0xff]
      %v274 = vld [vmem:[%s246 + $0xb0] sm:$0xff]
      %v275 = vld [vmem:[%s246 + $0xb8] sm:$0xff]
      %276 = vst [vmem:[#allocation2] sm:$0xff] %v252
      %277 = vst [vmem:[#allocation2 + $0x8] sm:$0xff] %v253
      %vm278 = vcmask 556032
      %279 = vst.msk [vmem:[#allocation2 + $0x10] sm:$0xff] %vm278, %v254
      %280 = vst [vmem:[#allocation2 + $0x18] sm:$0xff] %v255
      %281 = vst [vmem:[#allocation2 + $0x20] sm:$0xff] %v256
      %282 = vst.msk [vmem:[#allocation2 + $0x28] sm:$0xff] %vm278, %v257
      %283 = vst [vmem:[#allocation2 + $0x30] sm:$0xff] %v258
      %284 = vst [vmem:[#allocation2 + $0x38] sm:$0xff] %v259
      %285 = vst.msk [vmem:[#allocation2 + $0x40] sm:$0xff] %vm278, %v260
      %286 = vst [vmem:[#allocation2 + $0x48] sm:$0xff] %v261
      %287 = vst [vmem:[#allocation2 + $0x50] sm:$0xff] %v262
      %288 = vst.msk [vmem:[#allocation2 + $0x58] sm:$0xff] %vm278, %v263
      %289 = vst [vmem:[#allocation2 + $0x60] sm:$0xff] %v264
      %290 = vst [vmem:[#allocation2 + $0x68] sm:$0xff] %v265
      %291 = vst.msk [vmem:[#allocation2 + $0x70] sm:$0xff] %vm278, %v266
      %292 = vst [vmem:[#allocation2 + $0x78] sm:$0xff] %v267
      %293 = vst [vmem:[#allocation2 + $0x80] sm:$0xff] %v268
      %294 = vst.msk [vmem:[#allocation2 + $0x88] sm:$0xff] %vm278, %v269
      %295 = vst [vmem:[#allocation2 + $0x90] sm:$0xff] %v270
      %296 = vst [vmem:[#allocation2 + $0x98] sm:$0xff] %v271
      %297 = vst.msk [vmem:[#allocation2 + $0xa0] sm:$0xff] %vm278, %v272
      %298 = vst [vmem:[#allocation2 + $0xa8] sm:$0xff] %v273
      %299 = vst [vmem:[#allocation2 + $0xb0] sm:$0xff] %v274
      %300 = vst.msk [vmem:[#allocation2 + $0xb8] sm:$0xff] %vm278, %v275
      %v301 = vld [vmem:[%s246] sm:$0xff]
      %v302 = vld [vmem:[%s246 + $0x8] sm:$0xff]
      %v303 = vld [vmem:[%s246 + $0x10] sm:$0xff]
      %v304 = vld [vmem:[%s246 + $0x18] sm:$0xff]
      %v305 = vld [vmem:[%s246 + $0x20] sm:$0xff]
      %v306 = vld [vmem:[%s246 + $0x28] sm:$0xff]
      %v307 = vld [vmem:[%s246 + $0x30] sm:$0xff]
      %v308 = vld [vmem:[%s246 + $0x38] sm:$0xff]
      %v309 = vld [vmem:[%s246 + $0x40] sm:$0xff]
      %v310 = vld [vmem:[%s246 + $0x48] sm:$0xff]
      %v311 = vld [vmem:[%s246 + $0x50] sm:$0xff]
      %v312 = vld [vmem:[%s246 + $0x58] sm:$0xff]
      %v313 = vld [vmem:[%s246 + $0x60] sm:$0xff]
      %v314 = vld [vmem:[%s246 + $0x68] sm:$0xff]
      %v315 = vld [vmem:[%s246 + $0x70] sm:$0xff]
      %v316 = vld [vmem:[%s246 + $0x78] sm:$0xff]
      %v317 = vld [vmem:[%s246 + $0x80] sm:$0xff]
      %v318 = vld [vmem:[%s246 + $0x88] sm:$0xff]
      %v319 = vld [vmem:[%s246 + $0x90] sm:$0xff]
      %v320 = vld [vmem:[%s246 + $0x98] sm:$0xff]
      %v321 = vld [vmem:[%s246 + $0xa0] sm:$0xff]
      %v322 = vld [vmem:[%s246 + $0xa8] sm:$0xff]
      %v323 = vld [vmem:[%s246 + $0xb0] sm:$0xff]
      %v324 = vld [vmem:[%s246 + $0xb8] sm:$0xff]
      %349 = vrot.lane.b32.xlu0 %v301, 127
      %v350 = vpop.permute.xlu0 %349
      %351 = vrot.lane.b32.xlu0 %v302, 127
      %v352 = vpop.permute.xlu0 %351
      %353 = vrot.lane.b32.xlu0 %v303, 127
      %v354 = vpop.permute.xlu0 %353
      %355 = vrot.lane.b32.xlu0 %v304, 127
      %v356 = vpop.permute.xlu0 %355
      %357 = vrot.lane.b32.xlu0 %v305, 127
      %v358 = vpop.permute.xlu0 %357
      %359 = vrot.lane.b32.xlu0 %v306, 127
      %v360 = vpop.permute.xlu0 %359
      %361 = vrot.lane.b32.xlu0 %v307, 127
      %v362 = vpop.permute.xlu0 %361
      %363 = vrot.lane.b32.xlu0 %v308, 127
      %v364 = vpop.permute.xlu0 %363
      %365 = vrot.lane.b32.xlu0 %v309, 127
      %v366 = vpop.permute.xlu0 %365
      %367 = vrot.lane.b32.xlu0 %v310, 127
      %v368 = vpop.permute.xlu0 %367
      %369 = vrot.lane.b32.xlu0 %v311, 127
      %v370 = vpop.permute.xlu0 %369
      %371 = vrot.lane.b32.xlu0 %v312, 127
      %v372 = vpop.permute.xlu0 %371
      %373 = vrot.lane.b32.xlu0 %v313, 127
      %v374 = vpop.permute.xlu0 %373
      %375 = vrot.lane.b32.xlu0 %v314, 127
      %v376 = vpop.permute.xlu0 %375
      %377 = vrot.lane.b32.xlu0 %v315, 127
      %v378 = vpop.permute.xlu0 %377
      %379 = vrot.lane.b32.xlu0 %v316, 127
      %v380 = vpop.permute.xlu0 %379
      %381 = vrot.lane.b32.xlu0 %v317, 127
      %v382 = vpop.permute.xlu0 %381
      %383 = vrot.lane.b32.xlu0 %v318, 127
      %v384 = vpop.permute.xlu0 %383
      %385 = vrot.lane.b32.xlu0 %v319, 127
      %v386 = vpop.permute.xlu0 %385
      %387 = vrot.lane.b32.xlu0 %v320, 127
      %v388 = vpop.permute.xlu0 %387
      %389 = vrot.lane.b32.xlu0 %v321, 127
      %v390 = vpop.permute.xlu0 %389
      %391 = vrot.lane.b32.xlu0 %v322, 127
      %v392 = vpop.permute.xlu0 %391
      %393 = vrot.lane.b32.xlu0 %v323, 127
      %v394 = vpop.permute.xlu0 %393
      %395 = vrot.lane.b32.xlu0 %v324, 127
      %v396 = vpop.permute.xlu0 %395
      %vm397 = vcmask 1039360
      %v398 = vsel %vm397, %v350, %v352
      %v399 = vsel %vm397, %v352, %v354
      %v400 = vsel %vm397, %v356, %v358
      %v401 = vsel %vm397, %v358, %v360
      %v402 = vsel %vm397, %v362, %v364
      %v403 = vsel %vm397, %v364, %v366
      %v404 = vsel %vm397, %v368, %v370
      %v405 = vsel %vm397, %v370, %v372
      %v406 = vsel %vm397, %v374, %v376
      %v407 = vsel %vm397, %v376, %v378
      %v408 = vsel %vm397, %v380, %v382
      %v409 = vsel %vm397, %v382, %v384
      %v410 = vsel %vm397, %v386, %v388
      %v411 = vsel %vm397, %v388, %v390
      %v412 = vsel %vm397, %v392, %v394
      %v413 = vsel %vm397, %v394, %v396
      %438 = vst [vmem:[#allocation2 + $0xc0] sm:$0xff] %v398
      %439 = vst [vmem:[#allocation2 + $0xc8] sm:$0xff] %v399
      %440 = vst.msk [vmem:[#allocation2 + $0xd0] sm:$0xff] %vm278, %v354
      %441 = vst [vmem:[#allocation2 + $0xd8] sm:$0xff] %v400
      %442 = vst [vmem:[#allocation2 + $0xe0] sm:$0xff] %v401
      %443 = vst.msk [vmem:[#allocation2 + $0xe8] sm:$0xff] %vm278, %v360
      %444 = vst [vmem:[#allocation2 + $0xf0] sm:$0xff] %v402
      %445 = vst [vmem:[#allocation2 + $0xf8] sm:$0xff] %v403
      %446 = vst.msk [vmem:[#allocation2 + $0x100] sm:$0xff] %vm278, %v366
      %447 = vst [vmem:[#allocation2 + $0x108] sm:$0xff] %v404
      %448 = vst [vmem:[#allocation2 + $0x110] sm:$0xff] %v405
      %449 = vst.msk [vmem:[#allocation2 + $0x118] sm:$0xff] %vm278, %v372
      %450 = vst [vmem:[#allocation2 + $0x120] sm:$0xff] %v406
      %451 = vst [vmem:[#allocation2 + $0x128] sm:$0xff] %v407
      %452 = vst.msk [vmem:[#allocation2 + $0x130] sm:$0xff] %vm278, %v378
      %453 = vst [vmem:[#allocation2 + $0x138] sm:$0xff] %v408
      %454 = vst [vmem:[#allocation2 + $0x140] sm:$0xff] %v409
      %455 = vst.msk [vmem:[#allocation2 + $0x148] sm:$0xff] %vm278, %v384
      %456 = vst [vmem:[#allocation2 + $0x150] sm:$0xff] %v410
      %457 = vst [vmem:[#allocation2 + $0x158] sm:$0xff] %v411
      %458 = vst.msk [vmem:[#allocation2 + $0x160] sm:$0xff] %vm278, %v390
      %459 = vst [vmem:[#allocation2 + $0x168] sm:$0xff] %v412
      %460 = vst [vmem:[#allocation2 + $0x170] sm:$0xff] %v413
      %461 = vst.msk [vmem:[#allocation2 + $0x178] sm:$0xff] %vm278, %v396
      %v462 = vld [vmem:[%s246] sm:$0xff]
      %v463 = vld [vmem:[%s246 + $0x8] sm:$0xff]
      %v464 = vld [vmem:[%s246 + $0x10] sm:$0xff]
      %v465 = vld [vmem:[%s246 + $0x18] sm:$0xff]
      %v466 = vld [vmem:[%s246 + $0x20] sm:$0xff]
      %v467 = vld [vmem:[%s246 + $0x28] sm:$0xff]
      %v468 = vld [vmem:[%s246 + $0x30] sm:$0xff]
      %v469 = vld [vmem:[%s246 + $0x38] sm:$0xff]
      %v470 = vld [vmem:[%s246 + $0x40] sm:$0xff]
      %v471 = vld [vmem:[%s246 + $0x48] sm:$0xff]
      %v472 = vld [vmem:[%s246 + $0x50] sm:$0xff]
      %v473 = vld [vmem:[%s246 + $0x58] sm:$0xff]
      %v474 = vld [vmem:[%s246 + $0x60] sm:$0xff]
      %v475 = vld [vmem:[%s246 + $0x68] sm:$0xff]
      %v476 = vld [vmem:[%s246 + $0x70] sm:$0xff]
      %v477 = vld [vmem:[%s246 + $0x78] sm:$0xff]
      %v478 = vld [vmem:[%s246 + $0x80] sm:$0xff]
      %v479 = vld [vmem:[%s246 + $0x88] sm:$0xff]
      %v480 = vld [vmem:[%s246 + $0x90] sm:$0xff]
      %v481 = vld [vmem:[%s246 + $0x98] sm:$0xff]
      %v482 = vld [vmem:[%s246 + $0xa0] sm:$0xff]
      %v483 = vld [vmem:[%s246 + $0xa8] sm:$0xff]
      %v484 = vld [vmem:[%s246 + $0xb0] sm:$0xff]
      %v485 = vld [vmem:[%s246 + $0xb8] sm:$0xff]
      %510 = vrot.lane.b32.xlu0 %v462, 126
      %v511 = vpop.permute.xlu0 %510
      %512 = vrot.lane.b32.xlu0 %v463, 126
      %v513 = vpop.permute.xlu0 %512
      %514 = vrot.lane.b32.xlu0 %v464, 126
      %v515 = vpop.permute.xlu0 %514
      %516 = vrot.lane.b32.xlu0 %v465, 126
      %v517 = vpop.permute.xlu0 %516
      %518 = vrot.lane.b32.xlu0 %v466, 126
      %v519 = vpop.permute.xlu0 %518
      %520 = vrot.lane.b32.xlu0 %v467, 126
      %v521 = vpop.permute.xlu0 %520
      %522 = vrot.lane.b32.xlu0 %v468, 126
      %v523 = vpop.permute.xlu0 %522
      %524 = vrot.lane.b32.xlu0 %v469, 126
      %v525 = vpop.permute.xlu0 %524
      %526 = vrot.lane.b32.xlu0 %v470, 126
      %v527 = vpop.permute.xlu0 %526
      %528 = vrot.lane.b32.xlu0 %v471, 126
      %v529 = vpop.permute.xlu0 %528
      %530 = vrot.lane.b32.xlu0 %v472, 126
      %v531 = vpop.permute.xlu0 %530
      %532 = vrot.lane.b32.xlu0 %v473, 126
      %v533 = vpop.permute.xlu0 %532
      %534 = vrot.lane.b32.xlu0 %v474, 126
      %v535 = vpop.permute.xlu0 %534
      %536 = vrot.lane.b32.xlu0 %v475, 126
      %v537 = vpop.permute.xlu0 %536
      %538 = vrot.lane.b32.xlu0 %v476, 126
      %v539 = vpop.permute.xlu0 %538
      %540 = vrot.lane.b32.xlu0 %v477, 126
      %v541 = vpop.permute.xlu0 %540
      %542 = vrot.lane.b32.xlu0 %v478, 126
      %v543 = vpop.permute.xlu0 %542
      %544 = vrot.lane.b32.xlu0 %v479, 126
      %v545 = vpop.permute.xlu0 %544
      %546 = vrot.lane.b32.xlu0 %v480, 126
      %v547 = vpop.permute.xlu0 %546
      %548 = vrot.lane.b32.xlu0 %v481, 126
      %v549 = vpop.permute.xlu0 %548
      %550 = vrot.lane.b32.xlu0 %v482, 126
      %v551 = vpop.permute.xlu0 %550
      %552 = vrot.lane.b32.xlu0 %v483, 126
      %v553 = vpop.permute.xlu0 %552
      %554 = vrot.lane.b32.xlu0 %v484, 126
      %v555 = vpop.permute.xlu0 %554
      %556 = vrot.lane.b32.xlu0 %v485, 126
      %v557 = vpop.permute.xlu0 %556
      %vm558 = vcmask 1031168
      %v559 = vsel %vm558, %v511, %v513
      %v560 = vsel %vm558, %v513, %v515
      %v561 = vsel %vm558, %v517, %v519
      %v562 = vsel %vm558, %v519, %v521
      %v563 = vsel %vm558, %v523, %v525
      %v564 = vsel %vm558, %v525, %v527
      %v565 = vsel %vm558, %v529, %v531
      %v566 = vsel %vm558, %v531, %v533
      %v567 = vsel %vm558, %v535, %v537
      %v568 = vsel %vm558, %v537, %v539
      %v569 = vsel %vm558, %v541, %v543
      %v570 = vsel %vm558, %v543, %v545
      %v571 = vsel %vm558, %v547, %v549
      %v572 = vsel %vm558, %v549, %v551
      %v573 = vsel %vm558, %v553, %v555
      %v574 = vsel %vm558, %v555, %v557
      %599 = vst [vmem:[#allocation2 + $0x180] sm:$0xff] %v559
      %600 = vst [vmem:[#allocation2 + $0x188] sm:$0xff] %v560
      %601 = vst.msk [vmem:[#allocation2 + $0x190] sm:$0xff] %vm278, %v515
      %602 = vst [vmem:[#allocation2 + $0x198] sm:$0xff] %v561
      %603 = vst [vmem:[#allocation2 + $0x1a0] sm:$0xff] %v562
      %604 = vst.msk [vmem:[#allocation2 + $0x1a8] sm:$0xff] %vm278, %v521
      %605 = vst [vmem:[#allocation2 + $0x1b0] sm:$0xff] %v563
      %606 = vst [vmem:[#allocation2 + $0x1b8] sm:$0xff] %v564
      %607 = vst.msk [vmem:[#allocation2 + $0x1c0] sm:$0xff] %vm278, %v527
      %608 = vst [vmem:[#allocation2 + $0x1c8] sm:$0xff] %v565
      %609 = vst [vmem:[#allocation2 + $0x1d0] sm:$0xff] %v566
      %610 = vst.msk [vmem:[#allocation2 + $0x1d8] sm:$0xff] %vm278, %v533
      %611 = vst [vmem:[#allocation2 + $0x1e0] sm:$0xff] %v567
      %612 = vst [vmem:[#allocation2 + $0x1e8] sm:$0xff] %v568
      %613 = vst.msk [vmem:[#allocation2 + $0x1f0] sm:$0xff] %vm278, %v539
      %614 = vst [vmem:[#allocation2 + $0x1f8] sm:$0xff] %v569
      %615 = vst [vmem:[#allocation2 + $0x200] sm:$0xff] %v570
      %616 = vst.msk [vmem:[#allocation2 + $0x208] sm:$0xff] %vm278, %v545
      %617 = vst [vmem:[#allocation2 + $0x210] sm:$0xff] %v571
      %618 = vst [vmem:[#allocation2 + $0x218] sm:$0xff] %v572
      %619 = vst.msk [vmem:[#allocation2 + $0x220] sm:$0xff] %vm278, %v551
      %620 = vst [vmem:[#allocation2 + $0x228] sm:$0xff] %v573
      %621 = vst [vmem:[#allocation2 + $0x230] sm:$0xff] %v574
      %622 = vst.msk [vmem:[#allocation2 + $0x238] sm:$0xff] %vm278, %v557
      %v623 = vld [vmem:[%s246] sm:$0xff]
      %v624 = vld [vmem:[%s246 + $0x8] sm:$0xff]
      %v625 = vld [vmem:[%s246 + $0x10] sm:$0xff]
      %v626 = vld [vmem:[%s246 + $0x18] sm:$0xff]
      %v627 = vld [vmem:[%s246 + $0x20] sm:$0xff]
      %v628 = vld [vmem:[%s246 + $0x28] sm:$0xff]
      %v629 = vld [vmem:[%s246 + $0x30] sm:$0xff]
      %v630 = vld [vmem:[%s246 + $0x38] sm:$0xff]
      %v631 = vld [vmem:[%s246 + $0x40] sm:$0xff]
      %v632 = vld [vmem:[%s246 + $0x48] sm:$0xff]
      %v633 = vld [vmem:[%s246 + $0x50] sm:$0xff]
      %v634 = vld [vmem:[%s246 + $0x58] sm:$0xff]
      %v635 = vld [vmem:[%s246 + $0x60] sm:$0xff]
      %v636 = vld [vmem:[%s246 + $0x68] sm:$0xff]
      %v637 = vld [vmem:[%s246 + $0x70] sm:$0xff]
      %v638 = vld [vmem:[%s246 + $0x78] sm:$0xff]
      %v639 = vld [vmem:[%s246 + $0x80] sm:$0xff]
      %v640 = vld [vmem:[%s246 + $0x88] sm:$0xff]
      %v641 = vld [vmem:[%s246 + $0x90] sm:$0xff]
      %v642 = vld [vmem:[%s246 + $0x98] sm:$0xff]
      %v643 = vld [vmem:[%s246 + $0xa0] sm:$0xff]
      %v644 = vld [vmem:[%s246 + $0xa8] sm:$0xff]
      %v645 = vld [vmem:[%s246 + $0xb0] sm:$0xff]
      %v646 = vld [vmem:[%s246 + $0xb8] sm:$0xff]
      %671 = vrot.lane.b32.xlu0 %v623, 110
      %v672 = vpop.permute.xlu0 %671
      %673 = vrot.lane.b32.xlu0 %v624, 110
      %v674 = vpop.permute.xlu0 %673
      %675 = vrot.lane.b32.xlu0 %v625, 110
      %v676 = vpop.permute.xlu0 %675
      %677 = vrot.lane.b32.xlu0 %v626, 110
      %v678 = vpop.permute.xlu0 %677
      %679 = vrot.lane.b32.xlu0 %v627, 110
      %v680 = vpop.permute.xlu0 %679
      %681 = vrot.lane.b32.xlu0 %v628, 110
      %v682 = vpop.permute.xlu0 %681
      %683 = vrot.lane.b32.xlu0 %v629, 110
      %v684 = vpop.permute.xlu0 %683
      %685 = vrot.lane.b32.xlu0 %v630, 110
      %v686 = vpop.permute.xlu0 %685
      %687 = vrot.lane.b32.xlu0 %v631, 110
      %v688 = vpop.permute.xlu0 %687
      %689 = vrot.lane.b32.xlu0 %v632, 110
      %v690 = vpop.permute.xlu0 %689
      %691 = vrot.lane.b32.xlu0 %v633, 110
      %v692 = vpop.permute.xlu0 %691
      %693 = vrot.lane.b32.xlu0 %v634, 110
      %v694 = vpop.permute.xlu0 %693
      %695 = vrot.lane.b32.xlu0 %v635, 110
      %v696 = vpop.permute.xlu0 %695
      %697 = vrot.lane.b32.xlu0 %v636, 110
      %v698 = vpop.permute.xlu0 %697
      %699 = vrot.lane.b32.xlu0 %v637, 110
      %v700 = vpop.permute.xlu0 %699
      %701 = vrot.lane.b32.xlu0 %v638, 110
      %v702 = vpop.permute.xlu0 %701
      %703 = vrot.lane.b32.xlu0 %v639, 110
      %v704 = vpop.permute.xlu0 %703
      %705 = vrot.lane.b32.xlu0 %v640, 110
      %v706 = vpop.permute.xlu0 %705
      %707 = vrot.lane.b32.xlu0 %v641, 110
      %v708 = vpop.permute.xlu0 %707
      %709 = vrot.lane.b32.xlu0 %v642, 110
      %v710 = vpop.permute.xlu0 %709
      %711 = vrot.lane.b32.xlu0 %v643, 110
      %v712 = vpop.permute.xlu0 %711
      %713 = vrot.lane.b32.xlu0 %v644, 110
      %v714 = vpop.permute.xlu0 %713
      %715 = vrot.lane.b32.xlu0 %v645, 110
      %v716 = vpop.permute.xlu0 %715
      %717 = vrot.lane.b32.xlu0 %v646, 110
      %v718 = vpop.permute.xlu0 %717
      %vm719 = vcmask 900096
      %v720 = vsel %vm719, %v672, %v674
      %v721 = vsel %vm719, %v674, %v676
      %v722 = vsel %vm719, %v678, %v680
      %v723 = vsel %vm719, %v680, %v682
      %v724 = vsel %vm719, %v684, %v686
      %v725 = vsel %vm719, %v686, %v688
      %v726 = vsel %vm719, %v690, %v692
      %v727 = vsel %vm719, %v692, %v694
      %v728 = vsel %vm719, %v696, %v698
      %v729 = vsel %vm719, %v698, %v700
      %v730 = vsel %vm719, %v702, %v704
      %v731 = vsel %vm719, %v704, %v706
      %v732 = vsel %vm719, %v708, %v710
      %v733 = vsel %vm719, %v710, %v712
      %v734 = vsel %vm719, %v714, %v716
      %v735 = vsel %vm719, %v716, %v718
      %760 = vst [vmem:[#allocation2 + $0x240] sm:$0xff] %v720
      %761 = vst [vmem:[#allocation2 + $0x248] sm:$0xff] %v721
      %762 = vst.msk [vmem:[#allocation2 + $0x250] sm:$0xff] %vm278, %v676
      %763 = vst [vmem:[#allocation2 + $0x258] sm:$0xff] %v722
      %764 = vst [vmem:[#allocation2 + $0x260] sm:$0xff] %v723
      %765 = vst.msk [vmem:[#allocation2 + $0x268] sm:$0xff] %vm278, %v682
      %766 = vst [vmem:[#allocation2 + $0x270] sm:$0xff] %v724
      %767 = vst [vmem:[#allocation2 + $0x278] sm:$0xff] %v725
      %768 = vst.msk [vmem:[#allocation2 + $0x280] sm:$0xff] %vm278, %v688
      %769 = vst [vmem:[#allocation2 + $0x288] sm:$0xff] %v726
      %770 = vst [vmem:[#allocation2 + $0x290] sm:$0xff] %v727
      %771 = vst.msk [vmem:[#allocation2 + $0x298] sm:$0xff] %vm278, %v694
      %772 = vst [vmem:[#allocation2 + $0x2a0] sm:$0xff] %v728
      %773 = vst [vmem:[#allocation2 + $0x2a8] sm:$0xff] %v729
      %774 = vst.msk [vmem:[#allocation2 + $0x2b0] sm:$0xff] %vm278, %v700
      %775 = vst [vmem:[#allocation2 + $0x2b8] sm:$0xff] %v730
      %776 = vst [vmem:[#allocation2 + $0x2c0] sm:$0xff] %v731
      %777 = vst.msk [vmem:[#allocation2 + $0x2c8] sm:$0xff] %vm278, %v706
      %778 = vst [vmem:[#allocation2 + $0x2d0] sm:$0xff] %v732
      %779 = vst [vmem:[#allocation2 + $0x2d8] sm:$0xff] %v733
      %780 = vst.msk [vmem:[#allocation2 + $0x2e0] sm:$0xff] %vm278, %v712
      %781 = vst [vmem:[#allocation2 + $0x2e8] sm:$0xff] %v734
      %782 = vst [vmem:[#allocation2 + $0x2f0] sm:$0xff] %v735
      %783 = vst.msk [vmem:[#allocation2 + $0x2f8] sm:$0xff] %vm278, %v718
      %v784 = vld [vmem:[%s246] sm:$0xff]
      %v785 = vld [vmem:[%s246 + $0x8] sm:$0xff]
      %v786 = vld [vmem:[%s246 + $0x10] sm:$0xff]
      %v787 = vld [vmem:[%s246 + $0x18] sm:$0xff]
      %v788 = vld [vmem:[%s246 + $0x20] sm:$0xff]
      %v789 = vld [vmem:[%s246 + $0x28] sm:$0xff]
      %v790 = vld [vmem:[%s246 + $0x30] sm:$0xff]
      %v791 = vld [vmem:[%s246 + $0x38] sm:$0xff]
      %v792 = vld [vmem:[%s246 + $0x40] sm:$0xff]
      %v793 = vld [vmem:[%s246 + $0x48] sm:$0xff]
      %v794 = vld [vmem:[%s246 + $0x50] sm:$0xff]
      %v795 = vld [vmem:[%s246 + $0x58] sm:$0xff]
      %v796 = vld [vmem:[%s246 + $0x60] sm:$0xff]
      %v797 = vld [vmem:[%s246 + $0x68] sm:$0xff]
      %v798 = vld [vmem:[%s246 + $0x70] sm:$0xff]
      %v799 = vld [vmem:[%s246 + $0x78] sm:$0xff]
      %v800 = vld [vmem:[%s246 + $0x80] sm:$0xff]
      %v801 = vld [vmem:[%s246 + $0x88] sm:$0xff]
      %v802 = vld [vmem:[%s246 + $0x90] sm:$0xff]
      %v803 = vld [vmem:[%s246 + $0x98] sm:$0xff]
      %v804 = vld [vmem:[%s246 + $0xa0] sm:$0xff]
      %v805 = vld [vmem:[%s246 + $0xa8] sm:$0xff]
      %v806 = vld [vmem:[%s246 + $0xb0] sm:$0xff]
      %v807 = vld [vmem:[%s246 + $0xb8] sm:$0xff]
      %832 = vrot.lane.b32.xlu0 %v784, 109
      %v833 = vpop.permute.xlu0 %832
      %834 = vrot.lane.b32.xlu0 %v785, 109
      %v835 = vpop.permute.xlu0 %834
      %836 = vrot.lane.b32.xlu0 %v786, 109
      %v837 = vpop.permute.xlu0 %836
      %838 = vrot.lane.b32.xlu0 %v787, 109
      %v839 = vpop.permute.xlu0 %838
      %840 = vrot.lane.b32.xlu0 %v788, 109
      %v841 = vpop.permute.xlu0 %840
      %842 = vrot.lane.b32.xlu0 %v789, 109
      %v843 = vpop.permute.xlu0 %842
      %844 = vrot.lane.b32.xlu0 %v790, 109
      %v845 = vpop.permute.xlu0 %844
      %846 = vrot.lane.b32.xlu0 %v791, 109
      %v847 = vpop.permute.xlu0 %846
      %848 = vrot.lane.b32.xlu0 %v792, 109
      %v849 = vpop.permute.xlu0 %848
      %850 = vrot.lane.b32.xlu0 %v793, 109
      %v851 = vpop.permute.xlu0 %850
      %852 = vrot.lane.b32.xlu0 %v794, 109
      %v853 = vpop.permute.xlu0 %852
      %854 = vrot.lane.b32.xlu0 %v795, 109
      %v855 = vpop.permute.xlu0 %854
      %856 = vrot.lane.b32.xlu0 %v796, 109
      %v857 = vpop.permute.xlu0 %856
      %858 = vrot.lane.b32.xlu0 %v797, 109
      %v859 = vpop.permute.xlu0 %858
      %860 = vrot.lane.b32.xlu0 %v798, 109
      %v861 = vpop.permute.xlu0 %860
      %862 = vrot.lane.b32.xlu0 %v799, 109
      %v863 = vpop.permute.xlu0 %862
      %864 = vrot.lane.b32.xlu0 %v800, 109
      %v865 = vpop.permute.xlu0 %864
      %866 = vrot.lane.b32.xlu0 %v801, 109
      %v867 = vpop.permute.xlu0 %866
      %868 = vrot.lane.b32.xlu0 %v802, 109
      %v869 = vpop.permute.xlu0 %868
      %870 = vrot.lane.b32.xlu0 %v803, 109
      %v871 = vpop.permute.xlu0 %870
      %872 = vrot.lane.b32.xlu0 %v804, 109
      %v873 = vpop.permute.xlu0 %872
      %874 = vrot.lane.b32.xlu0 %v805, 109
      %v875 = vpop.permute.xlu0 %874
      %876 = vrot.lane.b32.xlu0 %v806, 109
      %v877 = vpop.permute.xlu0 %876
      %878 = vrot.lane.b32.xlu0 %v807, 109
      %v879 = vpop.permute.xlu0 %878
      %vm880 = vcmask 891904
      %v881 = vsel %vm880, %v833, %v835
      %v882 = vsel %vm880, %v835, %v837
      %v883 = vsel %vm880, %v839, %v841
      %v884 = vsel %vm880, %v841, %v843
      %v885 = vsel %vm880, %v845, %v847
      %v886 = vsel %vm880, %v847, %v849
      %v887 = vsel %vm880, %v851, %v853
      %v888 = vsel %vm880, %v853, %v855
      %v889 = vsel %vm880, %v857, %v859
      %v890 = vsel %vm880, %v859, %v861
      %v891 = vsel %vm880, %v863, %v865
      %v892 = vsel %vm880, %v865, %v867
      %v893 = vsel %vm880, %v869, %v871
      %v894 = vsel %vm880, %v871, %v873
      %v895 = vsel %vm880, %v875, %v877
      %v896 = vsel %vm880, %v877, %v879
      %921 = vst [vmem:[#allocation2 + $0x300] sm:$0xff] %v881
      %922 = vst [vmem:[#allocation2 + $0x308] sm:$0xff] %v882
      %923 = vst.msk [vmem:[#allocation2 + $0x310] sm:$0xff] %vm278, %v837
      %924 = vst [vmem:[#allocation2 + $0x318] sm:$0xff] %v883
      %925 = vst [vmem:[#allocation2 + $0x320] sm:$0xff] %v884
      %926 = vst.msk [vmem:[#allocation2 + $0x328] sm:$0xff] %vm278, %v843
      %927 = vst [vmem:[#allocation2 + $0x330] sm:$0xff] %v885
      %928 = vst [vmem:[#allocation2 + $0x338] sm:$0xff] %v886
      %929 = vst.msk [vmem:[#allocation2 + $0x340] sm:$0xff] %vm278, %v849
      %930 = vst [vmem:[#allocation2 + $0x348] sm:$0xff] %v887
      %931 = vst [vmem:[#allocation2 + $0x350] sm:$0xff] %v888
      %932 = vst.msk [vmem:[#allocation2 + $0x358] sm:$0xff] %vm278, %v855
      %933 = vst [vmem:[#allocation2 + $0x360] sm:$0xff] %v889
      %934 = vst [vmem:[#allocation2 + $0x368] sm:$0xff] %v890
      %935 = vst.msk [vmem:[#allocation2 + $0x370] sm:$0xff] %vm278, %v861
      %936 = vst [vmem:[#allocation2 + $0x378] sm:$0xff] %v891
      %937 = vst [vmem:[#allocation2 + $0x380] sm:$0xff] %v892
      %938 = vst.msk [vmem:[#allocation2 + $0x388] sm:$0xff] %vm278, %v867
      %939 = vst [vmem:[#allocation2 + $0x390] sm:$0xff] %v893
      %940 = vst [vmem:[#allocation2 + $0x398] sm:$0xff] %v894
      %941 = vst.msk [vmem:[#allocation2 + $0x3a0] sm:$0xff] %vm278, %v873
      %942 = vst [vmem:[#allocation2 + $0x3a8] sm:$0xff] %v895
      %943 = vst [vmem:[#allocation2 + $0x3b0] sm:$0xff] %v896
      %944 = vst.msk [vmem:[#allocation2 + $0x3b8] sm:$0xff] %vm278, %v879
      %v945 = vld [vmem:[%s246] sm:$0xff]
      %v946 = vld [vmem:[%s246 + $0x8] sm:$0xff]
      %v947 = vld [vmem:[%s246 + $0x10] sm:$0xff]
      %v948 = vld [vmem:[%s246 + $0x18] sm:$0xff]
      %v949 = vld [vmem:[%s246 + $0x20] sm:$0xff]
      %v950 = vld [vmem:[%s246 + $0x28] sm:$0xff]
      %v951 = vld [vmem:[%s246 + $0x30] sm:$0xff]
      %v952 = vld [vmem:[%s246 + $0x38] sm:$0xff]
      %v953 = vld [vmem:[%s246 + $0x40] sm:$0xff]
      %v954 = vld [vmem:[%s246 + $0x48] sm:$0xff]
      %v955 = vld [vmem:[%s246 + $0x50] sm:$0xff]
      %v956 = vld [vmem:[%s246 + $0x58] sm:$0xff]
      %v957 = vld [vmem:[%s246 + $0x60] sm:$0xff]
      %v958 = vld [vmem:[%s246 + $0x68] sm:$0xff]
      %v959 = vld [vmem:[%s246 + $0x70] sm:$0xff]
      %v960 = vld [vmem:[%s246 + $0x78] sm:$0xff]
      %v961 = vld [vmem:[%s246 + $0x80] sm:$0xff]
      %v962 = vld [vmem:[%s246 + $0x88] sm:$0xff]
      %v963 = vld [vmem:[%s246 + $0x90] sm:$0xff]
      %v964 = vld [vmem:[%s246 + $0x98] sm:$0xff]
      %v965 = vld [vmem:[%s246 + $0xa0] sm:$0xff]
      %v966 = vld [vmem:[%s246 + $0xa8] sm:$0xff]
      %v967 = vld [vmem:[%s246 + $0xb0] sm:$0xff]
      %v968 = vld [vmem:[%s246 + $0xb8] sm:$0xff]
      %993 = vrot.lane.b32.xlu0 %v945, 108
      %v994 = vpop.permute.xlu0 %993
      %995 = vrot.lane.b32.xlu0 %v946, 108
      %v996 = vpop.permute.xlu0 %995
      %997 = vrot.lane.b32.xlu0 %v947, 108
      %v998 = vpop.permute.xlu0 %997
      %999 = vrot.lane.b32.xlu0 %v948, 108
      %v1000 = vpop.permute.xlu0 %999
      %1001 = vrot.lane.b32.xlu0 %v949, 108
      %v1002 = vpop.permute.xlu0 %1001
      %1003 = vrot.lane.b32.xlu0 %v950, 108
      %v1004 = vpop.permute.xlu0 %1003
      %1005 = vrot.lane.b32.xlu0 %v951, 108
      %v1006 = vpop.permute.xlu0 %1005
      %1007 = vrot.lane.b32.xlu0 %v952, 108
      %v1008 = vpop.permute.xlu0 %1007
      %1009 = vrot.lane.b32.xlu0 %v953, 108
      %v1010 = vpop.permute.xlu0 %1009
      %1011 = vrot.lane.b32.xlu0 %v954, 108
      %v1012 = vpop.permute.xlu0 %1011
      %1013 = vrot.lane.b32.xlu0 %v955, 108
      %v1014 = vpop.permute.xlu0 %1013
      %1015 = vrot.lane.b32.xlu0 %v956, 108
      %v1016 = vpop.permute.xlu0 %1015
      %1017 = vrot.lane.b32.xlu0 %v957, 108
      %v1018 = vpop.permute.xlu0 %1017
      %1019 = vrot.lane.b32.xlu0 %v958, 108
      %v1020 = vpop.permute.xlu0 %1019
      %1021 = vrot.lane.b32.xlu0 %v959, 108
      %v1022 = vpop.permute.xlu0 %1021
      %1023 = vrot.lane.b32.xlu0 %v960, 108
      %v1024 = vpop.permute.xlu0 %1023
      %1025 = vrot.lane.b32.xlu0 %v961, 108
      %v1026 = vpop.permute.xlu0 %1025
      %1027 = vrot.lane.b32.xlu0 %v962, 108
      %v1028 = vpop.permute.xlu0 %1027
      %1029 = vrot.lane.b32.xlu0 %v963, 108
      %v1030 = vpop.permute.xlu0 %1029
      %1031 = vrot.lane.b32.xlu0 %v964, 108
      %v1032 = vpop.permute.xlu0 %1031
      %1033 = vrot.lane.b32.xlu0 %v965, 108
      %v1034 = vpop.permute.xlu0 %1033
      %1035 = vrot.lane.b32.xlu0 %v966, 108
      %v1036 = vpop.permute.xlu0 %1035
      %1037 = vrot.lane.b32.xlu0 %v967, 108
      %v1038 = vpop.permute.xlu0 %1037
      %1039 = vrot.lane.b32.xlu0 %v968, 108
      %v1040 = vpop.permute.xlu0 %1039
      %vm1041 = vcmask 883712
      %v1042 = vsel %vm1041, %v994, %v996
      %v1043 = vsel %vm1041, %v996, %v998
      %v1044 = vsel %vm1041, %v1000, %v1002
      %v1045 = vsel %vm1041, %v1002, %v1004
      %v1046 = vsel %vm1041, %v1006, %v1008
      %v1047 = vsel %vm1041, %v1008, %v1010
      %v1048 = vsel %vm1041, %v1012, %v1014
      %v1049 = vsel %vm1041, %v1014, %v1016
      %v1050 = vsel %vm1041, %v1018, %v1020
      %v1051 = vsel %vm1041, %v1020, %v1022
      %v1052 = vsel %vm1041, %v1024, %v1026
      %v1053 = vsel %vm1041, %v1026, %v1028
      %v1054 = vsel %vm1041, %v1030, %v1032
      %v1055 = vsel %vm1041, %v1032, %v1034
      %v1056 = vsel %vm1041, %v1036, %v1038
      %v1057 = vsel %vm1041, %v1038, %v1040
      %1082 = vst [vmem:[#allocation2 + $0x3c0] sm:$0xff] %v1042
      %1083 = vst [vmem:[#allocation2 + $0x3c8] sm:$0xff] %v1043
      %1084 = vst.msk [vmem:[#allocation2 + $0x3d0] sm:$0xff] %vm278, %v998
      %1085 = vst [vmem:[#allocation2 + $0x3d8] sm:$0xff] %v1044
      %1086 = vst [vmem:[#allocation2 + $0x3e0] sm:$0xff] %v1045
      %1087 = vst.msk [vmem:[#allocation2 + $0x3e8] sm:$0xff] %vm278, %v1004
      %1088 = vst [vmem:[#allocation2 + $0x3f0] sm:$0xff] %v1046
      %1089 = vst [vmem:[#allocation2 + $0x3f8] sm:$0xff] %v1047
      %1090 = vst.msk [vmem:[#allocation2 + $0x400] sm:$0xff] %vm278, %v1010
      %1091 = vst [vmem:[#allocation2 + $0x408] sm:$0xff] %v1048
      %1092 = vst [vmem:[#allocation2 + $0x410] sm:$0xff] %v1049
      %1093 = vst.msk [vmem:[#allocation2 + $0x418] sm:$0xff] %vm278, %v1016
      %1094 = vst [vmem:[#allocation2 + $0x420] sm:$0xff] %v1050
      %1095 = vst [vmem:[#allocation2 + $0x428] sm:$0xff] %v1051
      %1096 = vst.msk [vmem:[#allocation2 + $0x430] sm:$0xff] %vm278, %v1022
      %1097 = vst [vmem:[#allocation2 + $0x438] sm:$0xff] %v1052
      %1098 = vst [vmem:[#allocation2 + $0x440] sm:$0xff] %v1053
      %1099 = vst.msk [vmem:[#allocation2 + $0x448] sm:$0xff] %vm278, %v1028
      %1100 = vst [vmem:[#allocation2 + $0x450] sm:$0xff] %v1054
      %1101 = vst [vmem:[#allocation2 + $0x458] sm:$0xff] %v1055
      %1102 = vst.msk [vmem:[#allocation2 + $0x460] sm:$0xff] %vm278, %v1034
      %1103 = vst [vmem:[#allocation2 + $0x468] sm:$0xff] %v1056
      %1104 = vst [vmem:[#allocation2 + $0x470] sm:$0xff] %v1057
      %1105 = vst.msk [vmem:[#allocation2 + $0x478] sm:$0xff] %vm278, %v1040
      %v1106 = vld [vmem:[%s246] sm:$0xff]
      %v1107 = vld [vmem:[%s246 + $0x8] sm:$0xff]
      %v1108 = vld [vmem:[%s246 + $0x10] sm:$0xff]
      %v1109 = vld [vmem:[%s246 + $0x18] sm:$0xff]
      %v1110 = vld [vmem:[%s246 + $0x20] sm:$0xff]
      %v1111 = vld [vmem:[%s246 + $0x28] sm:$0xff]
      %v1112 = vld [vmem:[%s246 + $0x30] sm:$0xff]
      %v1113 = vld [vmem:[%s246 + $0x38] sm:$0xff]
      %v1114 = vld [vmem:[%s246 + $0x40] sm:$0xff]
      %v1115 = vld [vmem:[%s246 + $0x48] sm:$0xff]
      %v1116 = vld [vmem:[%s246 + $0x50] sm:$0xff]
      %v1117 = vld [vmem:[%s246 + $0x58] sm:$0xff]
      %v1118 = vld [vmem:[%s246 + $0x60] sm:$0xff]
      %v1119 = vld [vmem:[%s246 + $0x68] sm:$0xff]
      %v1120 = vld [vmem:[%s246 + $0x70] sm:$0xff]
      %v1121 = vld [vmem:[%s246 + $0x78] sm:$0xff]
      %v1122 = vld [vmem:[%s246 + $0x80] sm:$0xff]
      %v1123 = vld [vmem:[%s246 + $0x88] sm:$0xff]
      %v1124 = vld [vmem:[%s246 + $0x90] sm:$0xff]
      %v1125 = vld [vmem:[%s246 + $0x98] sm:$0xff]
      %v1126 = vld [vmem:[%s246 + $0xa0] sm:$0xff]
      %v1127 = vld [vmem:[%s246 + $0xa8] sm:$0xff]
      %v1128 = vld [vmem:[%s246 + $0xb0] sm:$0xff]
      %v1129 = vld [vmem:[%s246 + $0xb8] sm:$0xff]
      %1154 = vrot.lane.b32.xlu0 %v1106, 92
      %v1155 = vpop.permute.xlu0 %1154
      %1156 = vrot.lane.b32.xlu0 %v1107, 92
      %v1157 = vpop.permute.xlu0 %1156
      %1158 = vrot.lane.b32.xlu0 %v1108, 92
      %v1159 = vpop.permute.xlu0 %1158
      %1160 = vrot.lane.b32.xlu0 %v1109, 92
      %v1161 = vpop.permute.xlu0 %1160
      %1162 = vrot.lane.b32.xlu0 %v1110, 92
      %v1163 = vpop.permute.xlu0 %1162
      %1164 = vrot.lane.b32.xlu0 %v1111, 92
      %v1165 = vpop.permute.xlu0 %1164
      %1166 = vrot.lane.b32.xlu0 %v1112, 92
      %v1167 = vpop.permute.xlu0 %1166
      %1168 = vrot.lane.b32.xlu0 %v1113, 92
      %v1169 = vpop.permute.xlu0 %1168
      %1170 = vrot.lane.b32.xlu0 %v1114, 92
      %v1171 = vpop.permute.xlu0 %1170
      %1172 = vrot.lane.b32.xlu0 %v1115, 92
      %v1173 = vpop.permute.xlu0 %1172
      %1174 = vrot.lane.b32.xlu0 %v1116, 92
      %v1175 = vpop.permute.xlu0 %1174
      %1176 = vrot.lane.b32.xlu0 %v1117, 92
      %v1177 = vpop.permute.xlu0 %1176
      %1178 = vrot.lane.b32.xlu0 %v1118, 92
      %v1179 = vpop.permute.xlu0 %1178
      %1180 = vrot.lane.b32.xlu0 %v1119, 92
      %v1181 = vpop.permute.xlu0 %1180
      %1182 = vrot.lane.b32.xlu0 %v1120, 92
      %v1183 = vpop.permute.xlu0 %1182
      %1184 = vrot.lane.b32.xlu0 %v1121, 92
      %v1185 = vpop.permute.xlu0 %1184
      %1186 = vrot.lane.b32.xlu0 %v1122, 92
      %v1187 = vpop.permute.xlu0 %1186
      %1188 = vrot.lane.b32.xlu0 %v1123, 92
      %v1189 = vpop.permute.xlu0 %1188
      %1190 = vrot.lane.b32.xlu0 %v1124, 92
      %v1191 = vpop.permute.xlu0 %1190
      %1192 = vrot.lane.b32.xlu0 %v1125, 92
      %v1193 = vpop.permute.xlu0 %1192
      %1194 = vrot.lane.b32.xlu0 %v1126, 92
      %v1195 = vpop.permute.xlu0 %1194
      %1196 = vrot.lane.b32.xlu0 %v1127, 92
      %v1197 = vpop.permute.xlu0 %1196
      %1198 = vrot.lane.b32.xlu0 %v1128, 92
      %v1199 = vpop.permute.xlu0 %1198
      %1200 = vrot.lane.b32.xlu0 %v1129, 92
      %v1201 = vpop.permute.xlu0 %1200
      %vm1202 = vcmask 752640
      %v1203 = vsel %vm1202, %v1155, %v1157
      %v1204 = vsel %vm1202, %v1157, %v1159
      %v1205 = vsel %vm1202, %v1161, %v1163
      %v1206 = vsel %vm1202, %v1163, %v1165
      %v1207 = vsel %vm1202, %v1167, %v1169
      %v1208 = vsel %vm1202, %v1169, %v1171
      %v1209 = vsel %vm1202, %v1173, %v1175
      %v1210 = vsel %vm1202, %v1175, %v1177
      %v1211 = vsel %vm1202, %v1179, %v1181
      %v1212 = vsel %vm1202, %v1181, %v1183
      %v1213 = vsel %vm1202, %v1185, %v1187
      %v1214 = vsel %vm1202, %v1187, %v1189
      %v1215 = vsel %vm1202, %v1191, %v1193
      %v1216 = vsel %vm1202, %v1193, %v1195
      %v1217 = vsel %vm1202, %v1197, %v1199
      %v1218 = vsel %vm1202, %v1199, %v1201
      %1243 = vst [vmem:[#allocation2 + $0x480] sm:$0xff] %v1203
      %1244 = vst [vmem:[#allocation2 + $0x488] sm:$0xff] %v1204
      %1245 = vst.msk [vmem:[#allocation2 + $0x490] sm:$0xff] %vm278, %v1159
      %1246 = vst [vmem:[#allocation2 + $0x498] sm:$0xff] %v1205
      %1247 = vst [vmem:[#allocation2 + $0x4a0] sm:$0xff] %v1206
      %1248 = vst.msk [vmem:[#allocation2 + $0x4a8] sm:$0xff] %vm278, %v1165
      %1249 = vst [vmem:[#allocation2 + $0x4b0] sm:$0xff] %v1207
      %1250 = vst [vmem:[#allocation2 + $0x4b8] sm:$0xff] %v1208
      %1251 = vst.msk [vmem:[#allocation2 + $0x4c0] sm:$0xff] %vm278, %v1171
      %1252 = vst [vmem:[#allocation2 + $0x4c8] sm:$0xff] %v1209
      %1253 = vst [vmem:[#allocation2 + $0x4d0] sm:$0xff] %v1210
      %1254 = vst.msk [vmem:[#allocation2 + $0x4d8] sm:$0xff] %vm278, %v1177
      %1255 = vst [vmem:[#allocation2 + $0x4e0] sm:$0xff] %v1211
      %1256 = vst [vmem:[#allocation2 + $0x4e8] sm:$0xff] %v1212
      %1257 = vst.msk [vmem:[#allocation2 + $0x4f0] sm:$0xff] %vm278, %v1183
      %1258 = vst [vmem:[#allocation2 + $0x4f8] sm:$0xff] %v1213
      %1259 = vst [vmem:[#allocation2 + $0x500] sm:$0xff] %v1214
      %1260 = vst.msk [vmem:[#allocation2 + $0x508] sm:$0xff] %vm278, %v1189
      %1261 = vst [vmem:[#allocation2 + $0x510] sm:$0xff] %v1215
      %1262 = vst [vmem:[#allocation2 + $0x518] sm:$0xff] %v1216
      %1263 = vst.msk [vmem:[#allocation2 + $0x520] sm:$0xff] %vm278, %v1195
      %1264 = vst [vmem:[#allocation2 + $0x528] sm:$0xff] %v1217
      %1265 = vst [vmem:[#allocation2 + $0x530] sm:$0xff] %v1218
      %1266 = vst.msk [vmem:[#allocation2 + $0x538] sm:$0xff] %vm278, %v1201
      %v1267 = vld [vmem:[%s246] sm:$0xff]
      %v1268 = vld [vmem:[%s246 + $0x8] sm:$0xff]
      %v1269 = vld [vmem:[%s246 + $0x10] sm:$0xff]
      %v1270 = vld [vmem:[%s246 + $0x18] sm:$0xff]
      %v1271 = vld [vmem:[%s246 + $0x20] sm:$0xff]
      %v1272 = vld [vmem:[%s246 + $0x28] sm:$0xff]
      %v1273 = vld [vmem:[%s246 + $0x30] sm:$0xff]
      %v1274 = vld [vmem:[%s246 + $0x38] sm:$0xff]
      %v1275 = vld [vmem:[%s246 + $0x40] sm:$0xff]
      %v1276 = vld [vmem:[%s246 + $0x48] sm:$0xff]
      %v1277 = vld [vmem:[%s246 + $0x50] sm:$0xff]
      %v1278 = vld [vmem:[%s246 + $0x58] sm:$0xff]
      %v1279 = vld [vmem:[%s246 + $0x60] sm:$0xff]
      %v1280 = vld [vmem:[%s246 + $0x68] sm:$0xff]
      %v1281 = vld [vmem:[%s246 + $0x70] sm:$0xff]
      %v1282 = vld [vmem:[%s246 + $0x78] sm:$0xff]
      %v1283 = vld [vmem:[%s246 + $0x80] sm:$0xff]
      %v1284 = vld [vmem:[%s246 + $0x88] sm:$0xff]
      %v1285 = vld [vmem:[%s246 + $0x90] sm:$0xff]
      %v1286 = vld [vmem:[%s246 + $0x98] sm:$0xff]
      %v1287 = vld [vmem:[%s246 + $0xa0] sm:$0xff]
      %v1288 = vld [vmem:[%s246 + $0xa8] sm:$0xff]
      %v1289 = vld [vmem:[%s246 + $0xb0] sm:$0xff]
      %v1290 = vld [vmem:[%s246 + $0xb8] sm:$0xff]
      %1315 = vrot.lane.b32.xlu0 %v1267, 91
      %v1316 = vpop.permute.xlu0 %1315
      %1317 = vrot.lane.b32.xlu0 %v1268, 91
      %v1318 = vpop.permute.xlu0 %1317
      %1319 = vrot.lane.b32.xlu0 %v1269, 91
      %v1320 = vpop.permute.xlu0 %1319
      %1321 = vrot.lane.b32.xlu0 %v1270, 91
      %v1322 = vpop.permute.xlu0 %1321
      %1323 = vrot.lane.b32.xlu0 %v1271, 91
      %v1324 = vpop.permute.xlu0 %1323
      %1325 = vrot.lane.b32.xlu0 %v1272, 91
      %v1326 = vpop.permute.xlu0 %1325
      %1327 = vrot.lane.b32.xlu0 %v1273, 91
      %v1328 = vpop.permute.xlu0 %1327
      %1329 = vrot.lane.b32.xlu0 %v1274, 91
      %v1330 = vpop.permute.xlu0 %1329
      %1331 = vrot.lane.b32.xlu0 %v1275, 91
      %v1332 = vpop.permute.xlu0 %1331
      %1333 = vrot.lane.b32.xlu0 %v1276, 91
      %v1334 = vpop.permute.xlu0 %1333
      %1335 = vrot.lane.b32.xlu0 %v1277, 91
      %v1336 = vpop.permute.xlu0 %1335
      %1337 = vrot.lane.b32.xlu0 %v1278, 91
      %v1338 = vpop.permute.xlu0 %1337
      %1339 = vrot.lane.b32.xlu0 %v1279, 91
      %v1340 = vpop.permute.xlu0 %1339
      %1341 = vrot.lane.b32.xlu0 %v1280, 91
      %v1342 = vpop.permute.xlu0 %1341
      %1343 = vrot.lane.b32.xlu0 %v1281, 91
      %v1344 = vpop.permute.xlu0 %1343
      %1345 = vrot.lane.b32.xlu0 %v1282, 91
      %v1346 = vpop.permute.xlu0 %1345
      %1347 = vrot.lane.b32.xlu0 %v1283, 91
      %v1348 = vpop.permute.xlu0 %1347
      %1349 = vrot.lane.b32.xlu0 %v1284, 91
      %v1350 = vpop.permute.xlu0 %1349
      %1351 = vrot.lane.b32.xlu0 %v1285, 91
      %v1352 = vpop.permute.xlu0 %1351
      %1353 = vrot.lane.b32.xlu0 %v1286, 91
      %v1354 = vpop.permute.xlu0 %1353
      %1355 = vrot.lane.b32.xlu0 %v1287, 91
      %v1356 = vpop.permute.xlu0 %1355
      %1357 = vrot.lane.b32.xlu0 %v1288, 91
      %v1358 = vpop.permute.xlu0 %1357
      %1359 = vrot.lane.b32.xlu0 %v1289, 91
      %v1360 = vpop.permute.xlu0 %1359
      %1361 = vrot.lane.b32.xlu0 %v1290, 91
      %v1362 = vpop.permute.xlu0 %1361
      %vm1363 = vcmask 744448
      %v1364 = vsel %vm1363, %v1316, %v1318
      %v1365 = vsel %vm1363, %v1318, %v1320
      %v1366 = vsel %vm1363, %v1322, %v1324
      %v1367 = vsel %vm1363, %v1324, %v1326
      %v1368 = vsel %vm1363, %v1328, %v1330
      %v1369 = vsel %vm1363, %v1330, %v1332
      %v1370 = vsel %vm1363, %v1334, %v1336
      %v1371 = vsel %vm1363, %v1336, %v1338
      %v1372 = vsel %vm1363, %v1340, %v1342
      %v1373 = vsel %vm1363, %v1342, %v1344
      %v1374 = vsel %vm1363, %v1346, %v1348
      %v1375 = vsel %vm1363, %v1348, %v1350
      %v1376 = vsel %vm1363, %v1352, %v1354
      %v1377 = vsel %vm1363, %v1354, %v1356
      %v1378 = vsel %vm1363, %v1358, %v1360
      %v1379 = vsel %vm1363, %v1360, %v1362
      %1404 = vst [vmem:[#allocation2 + $0x540] sm:$0xff] %v1364
      %1405 = vst [vmem:[#allocation2 + $0x548] sm:$0xff] %v1365
      %1406 = vst.msk [vmem:[#allocation2 + $0x550] sm:$0xff] %vm278, %v1320
      %1407 = vst [vmem:[#allocation2 + $0x558] sm:$0xff] %v1366
      %1408 = vst [vmem:[#allocation2 + $0x560] sm:$0xff] %v1367
      %1409 = vst.msk [vmem:[#allocation2 + $0x568] sm:$0xff] %vm278, %v1326
      %1410 = vst [vmem:[#allocation2 + $0x570] sm:$0xff] %v1368
      %1411 = vst [vmem:[#allocation2 + $0x578] sm:$0xff] %v1369
      %1412 = vst.msk [vmem:[#allocation2 + $0x580] sm:$0xff] %vm278, %v1332
      %1413 = vst [vmem:[#allocation2 + $0x588] sm:$0xff] %v1370
      %1414 = vst [vmem:[#allocation2 + $0x590] sm:$0xff] %v1371
      %1415 = vst.msk [vmem:[#allocation2 + $0x598] sm:$0xff] %vm278, %v1338
      %1416 = vst [vmem:[#allocation2 + $0x5a0] sm:$0xff] %v1372
      %1417 = vst [vmem:[#allocation2 + $0x5a8] sm:$0xff] %v1373
      %1418 = vst.msk [vmem:[#allocation2 + $0x5b0] sm:$0xff] %vm278, %v1344
      %1419 = vst [vmem:[#allocation2 + $0x5b8] sm:$0xff] %v1374
      %1420 = vst [vmem:[#allocation2 + $0x5c0] sm:$0xff] %v1375
      %1421 = vst.msk [vmem:[#allocation2 + $0x5c8] sm:$0xff] %vm278, %v1350
      %1422 = vst [vmem:[#allocation2 + $0x5d0] sm:$0xff] %v1376
      %1423 = vst [vmem:[#allocation2 + $0x5d8] sm:$0xff] %v1377
      %1424 = vst.msk [vmem:[#allocation2 + $0x5e0] sm:$0xff] %vm278, %v1356
      %1425 = vst [vmem:[#allocation2 + $0x5e8] sm:$0xff] %v1378
      %1426 = vst [vmem:[#allocation2 + $0x5f0] sm:$0xff] %v1379
      %1427 = vst.msk [vmem:[#allocation2 + $0x5f8] sm:$0xff] %vm278, %v1362
      %v1428 = vld [vmem:[%s246] sm:$0xff]
      %v1429 = vld [vmem:[%s246 + $0x8] sm:$0xff]
      %v1430 = vld [vmem:[%s246 + $0x10] sm:$0xff]
      %v1431 = vld [vmem:[%s246 + $0x18] sm:$0xff]
      %v1432 = vld [vmem:[%s246 + $0x20] sm:$0xff]
      %v1433 = vld [vmem:[%s246 + $0x28] sm:$0xff]
      %v1434 = vld [vmem:[%s246 + $0x30] sm:$0xff]
      %v1435 = vld [vmem:[%s246 + $0x38] sm:$0xff]
      %v1436 = vld [vmem:[%s246 + $0x40] sm:$0xff]
      %v1437 = vld [vmem:[%s246 + $0x48] sm:$0xff]
      %v1438 = vld [vmem:[%s246 + $0x50] sm:$0xff]
      %v1439 = vld [vmem:[%s246 + $0x58] sm:$0xff]
      %v1440 = vld [vmem:[%s246 + $0x60] sm:$0xff]
      %v1441 = vld [vmem:[%s246 + $0x68] sm:$0xff]
      %v1442 = vld [vmem:[%s246 + $0x70] sm:$0xff]
      %v1443 = vld [vmem:[%s246 + $0x78] sm:$0xff]
      %v1444 = vld [vmem:[%s246 + $0x80] sm:$0xff]
      %v1445 = vld [vmem:[%s246 + $0x88] sm:$0xff]
      %v1446 = vld [vmem:[%s246 + $0x90] sm:$0xff]
      %v1447 = vld [vmem:[%s246 + $0x98] sm:$0xff]
      %v1448 = vld [vmem:[%s246 + $0xa0] sm:$0xff]
      %v1449 = vld [vmem:[%s246 + $0xa8] sm:$0xff]
      %v1450 = vld [vmem:[%s246 + $0xb0] sm:$0xff]
      %v1451 = vld [vmem:[%s246 + $0xb8] sm:$0xff]
      %1476 = vrot.lane.b32.xlu0 %v1428, 90
      %v1477 = vpop.permute.xlu0 %1476
      %1478 = vrot.lane.b32.xlu0 %v1429, 90
      %v1479 = vpop.permute.xlu0 %1478
      %1480 = vrot.lane.b32.xlu0 %v1430, 90
      %v1481 = vpop.permute.xlu0 %1480
      %1482 = vrot.lane.b32.xlu0 %v1431, 90
      %v1483 = vpop.permute.xlu0 %1482
      %1484 = vrot.lane.b32.xlu0 %v1432, 90
      %v1485 = vpop.permute.xlu0 %1484
      %1486 = vrot.lane.b32.xlu0 %v1433, 90
      %v1487 = vpop.permute.xlu0 %1486
      %1488 = vrot.lane.b32.xlu0 %v1434, 90
      %v1489 = vpop.permute.xlu0 %1488
      %1490 = vrot.lane.b32.xlu0 %v1435, 90
      %v1491 = vpop.permute.xlu0 %1490
      %1492 = vrot.lane.b32.xlu0 %v1436, 90
      %v1493 = vpop.permute.xlu0 %1492
      %1494 = vrot.lane.b32.xlu0 %v1437, 90
      %v1495 = vpop.permute.xlu0 %1494
      %1496 = vrot.lane.b32.xlu0 %v1438, 90
      %v1497 = vpop.permute.xlu0 %1496
      %1498 = vrot.lane.b32.xlu0 %v1439, 90
      %v1499 = vpop.permute.xlu0 %1498
      %1500 = vrot.lane.b32.xlu0 %v1440, 90
      %v1501 = vpop.permute.xlu0 %1500
      %1502 = vrot.lane.b32.xlu0 %v1441, 90
      %v1503 = vpop.permute.xlu0 %1502
      %1504 = vrot.lane.b32.xlu0 %v1442, 90
      %v1505 = vpop.permute.xlu0 %1504
      %1506 = vrot.lane.b32.xlu0 %v1443, 90
      %v1507 = vpop.permute.xlu0 %1506
      %1508 = vrot.lane.b32.xlu0 %v1444, 90
      %v1509 = vpop.permute.xlu0 %1508
      %1510 = vrot.lane.b32.xlu0 %v1445, 90
      %v1511 = vpop.permute.xlu0 %1510
      %1512 = vrot.lane.b32.xlu0 %v1446, 90
      %v1513 = vpop.permute.xlu0 %1512
      %1514 = vrot.lane.b32.xlu0 %v1447, 90
      %v1515 = vpop.permute.xlu0 %1514
      %1516 = vrot.lane.b32.xlu0 %v1448, 90
      %v1517 = vpop.permute.xlu0 %1516
      %1518 = vrot.lane.b32.xlu0 %v1449, 90
      %v1519 = vpop.permute.xlu0 %1518
      %1520 = vrot.lane.b32.xlu0 %v1450, 90
      %v1521 = vpop.permute.xlu0 %1520
      %1522 = vrot.lane.b32.xlu0 %v1451, 90
      %v1523 = vpop.permute.xlu0 %1522
      %vm1524 = vcmask 736256
      %v1525 = vsel %vm1524, %v1477, %v1479
      %v1526 = vsel %vm1524, %v1479, %v1481
      %v1527 = vsel %vm1524, %v1483, %v1485
      %v1528 = vsel %vm1524, %v1485, %v1487
      %v1529 = vsel %vm1524, %v1489, %v1491
      %v1530 = vsel %vm1524, %v1491, %v1493
      %v1531 = vsel %vm1524, %v1495, %v1497
      %v1532 = vsel %vm1524, %v1497, %v1499
      %v1533 = vsel %vm1524, %v1501, %v1503
      %v1534 = vsel %vm1524, %v1503, %v1505
      %v1535 = vsel %vm1524, %v1507, %v1509
      %v1536 = vsel %vm1524, %v1509, %v1511
      %v1537 = vsel %vm1524, %v1513, %v1515
      %v1538 = vsel %vm1524, %v1515, %v1517
      %v1539 = vsel %vm1524, %v1519, %v1521
      %v1540 = vsel %vm1524, %v1521, %v1523
      %1565 = vst [vmem:[#allocation2 + $0x600] sm:$0xff] %v1525
      %1566 = vst [vmem:[#allocation2 + $0x608] sm:$0xff] %v1526
      %1567 = vst.msk [vmem:[#allocation2 + $0x610] sm:$0xff] %vm278, %v1481
      %1568 = vst [vmem:[#allocation2 + $0x618] sm:$0xff] %v1527
      %1569 = vst [vmem:[#allocation2 + $0x620] sm:$0xff] %v1528
      %1570 = vst.msk [vmem:[#allocation2 + $0x628] sm:$0xff] %vm278, %v1487
      %1571 = vst [vmem:[#allocation2 + $0x630] sm:$0xff] %v1529
      %1572 = vst [vmem:[#allocation2 + $0x638] sm:$0xff] %v1530
      %1573 = vst.msk [vmem:[#allocation2 + $0x640] sm:$0xff] %vm278, %v1493
      %1574 = vst [vmem:[#allocation2 + $0x648] sm:$0xff] %v1531
      %1575 = vst [vmem:[#allocation2 + $0x650] sm:$0xff] %v1532
      %1576 = vst.msk [vmem:[#allocation2 + $0x658] sm:$0xff] %vm278, %v1499
      %1577 = vst [vmem:[#allocation2 + $0x660] sm:$0xff] %v1533
      %1578 = vst [vmem:[#allocation2 + $0x668] sm:$0xff] %v1534
      %1579 = vst.msk [vmem:[#allocation2 + $0x670] sm:$0xff] %vm278, %v1505
      %1580 = vst [vmem:[#allocation2 + $0x678] sm:$0xff] %v1535
      %1581 = vst [vmem:[#allocation2 + $0x680] sm:$0xff] %v1536
      %1582 = vst.msk [vmem:[#allocation2 + $0x688] sm:$0xff] %vm278, %v1511
      %1583 = vst [vmem:[#allocation2 + $0x690] sm:$0xff] %v1537
      %1584 = vst [vmem:[#allocation2 + $0x698] sm:$0xff] %v1538
      %1585 = vst.msk [vmem:[#allocation2 + $0x6a0] sm:$0xff] %vm278, %v1517
      %1586 = vst [vmem:[#allocation2 + $0x6a8] sm:$0xff] %v1539
      %1587 = vst [vmem:[#allocation2 + $0x6b0] sm:$0xff] %v1540
      %1588 = vst.msk [vmem:[#allocation2 + $0x6b8] sm:$0xff] %vm278, %v1523
      %v1589 = vld [vmem:[%s2] sm:$0xff]
      %v1590 = vld [vmem:[%s2 + $0x8] sm:$0xff]
      %v1591 = vld [vmem:[%s2 + $0x10] sm:$0xff]
      %v1592 = vld [vmem:[%s2 + $0x18] sm:$0xff]
      %v1593 = vld [vmem:[%s2 + $0x20] sm:$0xff]
      %v1594 = vld [vmem:[%s2 + $0x28] sm:$0xff]
      %v1595 = vld [vmem:[%s2 + $0x30] sm:$0xff]
      %v1596 = vld [vmem:[%s2 + $0x38] sm:$0xff]
      %v1597 = vld [vmem:[%s2 + $0x40] sm:$0xff]
      %v1598 = vld [vmem:[%s2 + $0x48] sm:$0xff]
      %v1599 = vld [vmem:[%s2 + $0x50] sm:$0xff]
      %v1600 = vld [vmem:[%s2 + $0x58] sm:$0xff]
      %v1601 = vld [vmem:[%s2 + $0x60] sm:$0xff]
      %v1602 = vld [vmem:[%s2 + $0x68] sm:$0xff]
      %v1603 = vld [vmem:[%s2 + $0x70] sm:$0xff]
      %v1604 = vld [vmem:[%s2 + $0x78] sm:$0xff]
      %v1605 = vld [vmem:[%s2 + $0x80] sm:$0xff]
      %v1606 = vld [vmem:[%s2 + $0x88] sm:$0xff]
      %v1607 = vld [vmem:[%s2 + $0x90] sm:$0xff]
      %v1608 = vld [vmem:[%s2 + $0x98] sm:$0xff]
      %v1609 = vld [vmem:[%s2 + $0xa0] sm:$0xff]
      %v1610 = vld [vmem:[%s2 + $0xa8] sm:$0xff]
      %v1611 = vld [vmem:[%s2 + $0xb0] sm:$0xff]
      %v1612 = vld [vmem:[%s2 + $0xb8] sm:$0xff]
      %v1613 = vld [vmem:[%s2 + $0xc0] sm:$0xff]
      %v1614 = vld [vmem:[%s2 + $0xc8] sm:$0xff]
      %v1615 = vld [vmem:[%s2 + $0xd0] sm:$0xff]
      %v1616 = vld [vmem:[%s2 + $0xd8] sm:$0xff]
      %v1617 = vld [vmem:[%s2 + $0xe0] sm:$0xff]
      %v1618 = vld [vmem:[%s2 + $0xe8] sm:$0xff]
      %v1619 = vld [vmem:[%s2 + $0xf0] sm:$0xff]
      %v1620 = vld [vmem:[%s2 + $0xf8] sm:$0xff]
      %v1621 = vld [vmem:[%s2 + $0x100] sm:$0xff]
      %v1622 = vld [vmem:[%s2 + $0x108] sm:$0xff]
      %v1623 = vld [vmem:[%s2 + $0x110] sm:$0xff]
      %v1624 = vld [vmem:[%s2 + $0x118] sm:$0xff]
      %v1625 = vld [vmem:[%s2 + $0x120] sm:$0xff]
      %v1626 = vld [vmem:[%s2 + $0x128] sm:$0xff]
      %v1627 = vld [vmem:[%s2 + $0x130] sm:$0xff]
      %v1628 = vld [vmem:[%s2 + $0x138] sm:$0xff]
      %v1629 = vld [vmem:[#allocation2] sm:$0xff]
      %v1630 = vld [vmem:[#allocation2 + $0x8] sm:$0xff]
      %v1631 = vld [vmem:[#allocation2 + $0x10] sm:$0xff]
      %v1632 = vld [vmem:[#allocation2 + $0x18] sm:$0xff]
      %v1633 = vld [vmem:[#allocation2 + $0x20] sm:$0xff]
      %v1634 = vld [vmem:[#allocation2 + $0x28] sm:$0xff]
      %v1635 = vld [vmem:[#allocation2 + $0x30] sm:$0xff]
      %v1636 = vld [vmem:[#allocation2 + $0x38] sm:$0xff]
      %v1637 = vld [vmem:[#allocation2 + $0x40] sm:$0xff]
      %v1638 = vld [vmem:[#allocation2 + $0x48] sm:$0xff]
      %v1639 = vld [vmem:[#allocation2 + $0x50] sm:$0xff]
      %v1640 = vld [vmem:[#allocation2 + $0x58] sm:$0xff]
      %v1641 = vld [vmem:[#allocation2 + $0x60] sm:$0xff]
      %v1642 = vld [vmem:[#allocation2 + $0x68] sm:$0xff]
      %v1643 = vld [vmem:[#allocation2 + $0x70] sm:$0xff]
      %v1644 = vld [vmem:[#allocation2 + $0x78] sm:$0xff]
      %v1645 = vld [vmem:[#allocation2 + $0x80] sm:$0xff]
      %v1646 = vld [vmem:[#allocation2 + $0x88] sm:$0xff]
      %v1647 = vld [vmem:[#allocation2 + $0x90] sm:$0xff]
      %v1648 = vld [vmem:[#allocation2 + $0x98] sm:$0xff]
      %v1649 = vld [vmem:[#allocation2 + $0xa0] sm:$0xff]
      %v1650 = vld [vmem:[#allocation2 + $0xa8] sm:$0xff]
      %v1651 = vld [vmem:[#allocation2 + $0xb0] sm:$0xff]
      %v1652 = vld [vmem:[#allocation2 + $0xb8] sm:$0xff]
      %v1653 = vld [vmem:[#allocation2 + $0xc0] sm:$0xff]
      %v1654 = vld [vmem:[#allocation2 + $0xc8] sm:$0xff]
      %v1655 = vld [vmem:[#allocation2 + $0xd0] sm:$0xff]
      %v1656 = vld [vmem:[#allocation2 + $0xd8] sm:$0xff]
      %v1657 = vld [vmem:[#allocation2 + $0xe0] sm:$0xff]
      %v1658 = vld [vmem:[#allocation2 + $0xe8] sm:$0xff]
      %v1659 = vld [vmem:[#allocation2 + $0xf0] sm:$0xff]
      %v1660 = vld [vmem:[#allocation2 + $0xf8] sm:$0xff]
      %v1661 = vld [vmem:[#allocation2 + $0x100] sm:$0xff]
      %v1662 = vld [vmem:[#allocation2 + $0x108] sm:$0xff]
      %v1663 = vld [vmem:[#allocation2 + $0x110] sm:$0xff]
      %v1664 = vld [vmem:[#allocation2 + $0x118] sm:$0xff]
      %v1665 = vld [vmem:[#allocation2 + $0x120] sm:$0xff]
      %v1666 = vld [vmem:[#allocation2 + $0x128] sm:$0xff]
      %v1667 = vld [vmem:[#allocation2 + $0x130] sm:$0xff]
      %v1668 = vld [vmem:[#allocation2 + $0x138] sm:$0xff]
      %v1669 = vld [vmem:[#allocation2 + $0x140] sm:$0xff]
      %v1670 = vld [vmem:[#allocation2 + $0x148] sm:$0xff]
      %v1671 = vld [vmem:[#allocation2 + $0x150] sm:$0xff]
      %v1672 = vld [vmem:[#allocation2 + $0x158] sm:$0xff]
      %v1673 = vld [vmem:[#allocation2 + $0x160] sm:$0xff]
      %v1674 = vld [vmem:[#allocation2 + $0x168] sm:$0xff]
      %v1675 = vld [vmem:[#allocation2 + $0x170] sm:$0xff]
      %v1676 = vld [vmem:[#allocation2 + $0x178] sm:$0xff]
      %v1677 = vld [vmem:[#allocation2 + $0x180] sm:$0xff]
      %v1678 = vld [vmem:[#allocation2 + $0x188] sm:$0xff]
      %v1679 = vld [vmem:[#allocation2 + $0x190] sm:$0xff]
      %v1680 = vld [vmem:[#allocation2 + $0x198] sm:$0xff]
      %v1681 = vld [vmem:[#allocation2 + $0x1a0] sm:$0xff]
      %v1682 = vld [vmem:[#allocation2 + $0x1a8] sm:$0xff]
      %v1683 = vld [vmem:[#allocation2 + $0x1b0] sm:$0xff]
      %v1684 = vld [vmem:[#allocation2 + $0x1b8] sm:$0xff]
      %v1685 = vld [vmem:[#allocation2 + $0x1c0] sm:$0xff]
      %v1686 = vld [vmem:[#allocation2 + $0x1c8] sm:$0xff]
      %v1687 = vld [vmem:[#allocation2 + $0x1d0] sm:$0xff]
      %v1688 = vld [vmem:[#allocation2 + $0x1d8] sm:$0xff]
      %v1689 = vld [vmem:[#allocation2 + $0x1e0] sm:$0xff]
      %v1690 = vld [vmem:[#allocation2 + $0x1e8] sm:$0xff]
      %v1691 = vld [vmem:[#allocation2 + $0x1f0] sm:$0xff]
      %v1692 = vld [vmem:[#allocation2 + $0x1f8] sm:$0xff]
      %v1693 = vld [vmem:[#allocation2 + $0x200] sm:$0xff]
      %v1694 = vld [vmem:[#allocation2 + $0x208] sm:$0xff]
      %v1695 = vld [vmem:[#allocation2 + $0x210] sm:$0xff]
      %v1696 = vld [vmem:[#allocation2 + $0x218] sm:$0xff]
      %v1697 = vld [vmem:[#allocation2 + $0x220] sm:$0xff]
      %v1698 = vld [vmem:[#allocation2 + $0x228] sm:$0xff]
      %v1699 = vld [vmem:[#allocation2 + $0x230] sm:$0xff]
      %v1700 = vld [vmem:[#allocation2 + $0x238] sm:$0xff]
      %v1701 = vld [vmem:[#allocation2 + $0x240] sm:$0xff]
      %v1702 = vld [vmem:[#allocation2 + $0x248] sm:$0xff]
      %v1703 = vld [vmem:[#allocation2 + $0x250] sm:$0xff]
      %v1704 = vld [vmem:[#allocation2 + $0x258] sm:$0xff]
      %v1705 = vld [vmem:[#allocation2 + $0x260] sm:$0xff]
      %v1706 = vld [vmem:[#allocation2 + $0x268] sm:$0xff]
      %v1707 = vld [vmem:[#allocation2 + $0x270] sm:$0xff]
      %v1708 = vld [vmem:[#allocation2 + $0x278] sm:$0xff]
      %v1709 = vld [vmem:[#allocation2 + $0x280] sm:$0xff]
      %v1710 = vld [vmem:[#allocation2 + $0x288] sm:$0xff]
      %v1711 = vld [vmem:[#allocation2 + $0x290] sm:$0xff]
      %v1712 = vld [vmem:[#allocation2 + $0x298] sm:$0xff]
      %v1713 = vld [vmem:[#allocation2 + $0x2a0] sm:$0xff]
      %v1714 = vld [vmem:[#allocation2 + $0x2a8] sm:$0xff]
      %v1715 = vld [vmem:[#allocation2 + $0x2b0] sm:$0xff]
      %v1716 = vld [vmem:[#allocation2 + $0x2b8] sm:$0xff]
      %v1717 = vld [vmem:[#allocation2 + $0x2c0] sm:$0xff]
      %v1718 = vld [vmem:[#allocation2 + $0x2c8] sm:$0xff]
      %v1719 = vld [vmem:[#allocation2 + $0x2d0] sm:$0xff]
      %v1720 = vld [vmem:[#allocation2 + $0x2d8] sm:$0xff]
      %v1721 = vld [vmem:[#allocation2 + $0x2e0] sm:$0xff]
      %v1722 = vld [vmem:[#allocation2 + $0x2e8] sm:$0xff]
      %v1723 = vld [vmem:[#allocation2 + $0x2f0] sm:$0xff]
      %v1724 = vld [vmem:[#allocation2 + $0x2f8] sm:$0xff]
      %v1725 = vld [vmem:[#allocation2 + $0x300] sm:$0xff]
      %v1726 = vld [vmem:[#allocation2 + $0x308] sm:$0xff]
      %v1727 = vld [vmem:[#allocation2 + $0x310] sm:$0xff]
      %v1728 = vld [vmem:[#allocation2 + $0x318] sm:$0xff]
      %v1729 = vld [vmem:[#allocation2 + $0x320] sm:$0xff]
      %v1730 = vld [vmem:[#allocation2 + $0x328] sm:$0xff]
      %v1731 = vld [vmem:[#allocation2 + $0x330] sm:$0xff]
      %v1732 = vld [vmem:[#allocation2 + $0x338] sm:$0xff]
      %v1733 = vld [vmem:[#allocation2 + $0x340] sm:$0xff]
      %v1734 = vld [vmem:[#allocation2 + $0x348] sm:$0xff]
      %v1735 = vld [vmem:[#allocation2 + $0x350] sm:$0xff]
      %v1736 = vld [vmem:[#allocation2 + $0x358] sm:$0xff]
      %v1737 = vld [vmem:[#allocation2 + $0x360] sm:$0xff]
      %v1738 = vld [vmem:[#allocation2 + $0x368] sm:$0xff]
      %v1739 = vld [vmem:[#allocation2 + $0x370] sm:$0xff]
      %v1740 = vld [vmem:[#allocation2 + $0x378] sm:$0xff]
      %v1741 = vld [vmem:[#allocation2 + $0x380] sm:$0xff]
      %v1742 = vld [vmem:[#allocation2 + $0x388] sm:$0xff]
      %v1743 = vld [vmem:[#allocation2 + $0x390] sm:$0xff]
      %v1744 = vld [vmem:[#allocation2 + $0x398] sm:$0xff]
      %v1745 = vld [vmem:[#allocation2 + $0x3a0] sm:$0xff]
      %v1746 = vld [vmem:[#allocation2 + $0x3a8] sm:$0xff]
      %v1747 = vld [vmem:[#allocation2 + $0x3b0] sm:$0xff]
      %v1748 = vld [vmem:[#allocation2 + $0x3b8] sm:$0xff]
      %v1749 = vld [vmem:[#allocation2 + $0x3c0] sm:$0xff]
      %v1750 = vld [vmem:[#allocation2 + $0x3c8] sm:$0xff]
      %v1751 = vld [vmem:[#allocation2 + $0x3d0] sm:$0xff]
      %v1752 = vld [vmem:[#allocation2 + $0x3d8] sm:$0xff]
      %v1753 = vld [vmem:[#allocation2 + $0x3e0] sm:$0xff]
      %v1754 = vld [vmem:[#allocation2 + $0x3e8] sm:$0xff]
      %v1755 = vld [vmem:[#allocation2 + $0x3f0] sm:$0xff]
      %v1756 = vld [vmem:[#allocation2 + $0x3f8] sm:$0xff]
      %v1757 = vld [vmem:[#allocation2 + $0x400] sm:$0xff]
      %v1758 = vld [vmem:[#allocation2 + $0x408] sm:$0xff]
      %v1759 = vld [vmem:[#allocation2 + $0x410] sm:$0xff]
      %v1760 = vld [vmem:[#allocation2 + $0x418] sm:$0xff]
      %v1761 = vld [vmem:[#allocation2 + $0x420] sm:$0xff]
      %v1762 = vld [vmem:[#allocation2 + $0x428] sm:$0xff]
      %v1763 = vld [vmem:[#allocation2 + $0x430] sm:$0xff]
      %v1764 = vld [vmem:[#allocation2 + $0x438] sm:$0xff]
      %v1765 = vld [vmem:[#allocation2 + $0x440] sm:$0xff]
      %v1766 = vld [vmem:[#allocation2 + $0x448] sm:$0xff]
      %v1767 = vld [vmem:[#allocation2 + $0x450] sm:$0xff]
      %v1768 = vld [vmem:[#allocation2 + $0x458] sm:$0xff]
      %v1769 = vld [vmem:[#allocation2 + $0x460] sm:$0xff]
      %v1770 = vld [vmem:[#allocation2 + $0x468] sm:$0xff]
      %v1771 = vld [vmem:[#allocation2 + $0x470] sm:$0xff]
      %v1772 = vld [vmem:[#allocation2 + $0x478] sm:$0xff]
      %v1773 = vld [vmem:[#allocation2 + $0x480] sm:$0xff]
      %v1774 = vld [vmem:[#allocation2 + $0x488] sm:$0xff]
      %v1775 = vld [vmem:[#allocation2 + $0x490] sm:$0xff]
      %v1776 = vld [vmem:[#allocation2 + $0x498] sm:$0xff]
      %v1777 = vld [vmem:[#allocation2 + $0x4a0] sm:$0xff]
      %v1778 = vld [vmem:[#allocation2 + $0x4a8] sm:$0xff]
      %v1779 = vld [vmem:[#allocation2 + $0x4b0] sm:$0xff]
      %v1780 = vld [vmem:[#allocation2 + $0x4b8] sm:$0xff]
      %v1781 = vld [vmem:[#allocation2 + $0x4c0] sm:$0xff]
      %v1782 = vld [vmem:[#allocation2 + $0x4c8] sm:$0xff]
      %v1783 = vld [vmem:[#allocation2 + $0x4d0] sm:$0xff]
      %v1784 = vld [vmem:[#allocation2 + $0x4d8] sm:$0xff]
      %v1785 = vld [vmem:[#allocation2 + $0x4e0] sm:$0xff]
      %v1786 = vld [vmem:[#allocation2 + $0x4e8] sm:$0xff]
      %v1787 = vld [vmem:[#allocation2 + $0x4f0] sm:$0xff]
      %v1788 = vld [vmem:[#allocation2 + $0x4f8] sm:$0xff]
      %v1789 = vld [vmem:[#allocation2 + $0x500] sm:$0xff]
      %v1790 = vld [vmem:[#allocation2 + $0x508] sm:$0xff]
      %v1791 = vld [vmem:[#allocation2 + $0x510] sm:$0xff]
      %v1792 = vld [vmem:[#allocation2 + $0x518] sm:$0xff]
      %v1793 = vld [vmem:[#allocation2 + $0x520] sm:$0xff]
      %v1794 = vld [vmem:[#allocation2 + $0x528] sm:$0xff]
      %v1795 = vld [vmem:[#allocation2 + $0x530] sm:$0xff]
      %v1796 = vld [vmem:[#allocation2 + $0x538] sm:$0xff]
      %v1797 = vld [vmem:[#allocation2 + $0x540] sm:$0xff]
      %v1798 = vld [vmem:[#allocation2 + $0x548] sm:$0xff]
      %v1799 = vld [vmem:[#allocation2 + $0x550] sm:$0xff]
      %v1800 = vld [vmem:[#allocation2 + $0x558] sm:$0xff]
      %v1801 = vld [vmem:[#allocation2 + $0x560] sm:$0xff]
      %v1802 = vld [vmem:[#allocation2 + $0x568] sm:$0xff]
      %v1803 = vld [vmem:[#allocation2 + $0x570] sm:$0xff]
      %v1804 = vld [vmem:[#allocation2 + $0x578] sm:$0xff]
      %v1805 = vld [vmem:[#allocation2 + $0x580] sm:$0xff]
      %v1806 = vld [vmem:[#allocation2 + $0x588] sm:$0xff]
      %v1807 = vld [vmem:[#allocation2 + $0x590] sm:$0xff]
      %v1808 = vld [vmem:[#allocation2 + $0x598] sm:$0xff]
      %v1809 = vld [vmem:[#allocation2 + $0x5a0] sm:$0xff]
      %v1810 = vld [vmem:[#allocation2 + $0x5a8] sm:$0xff]
      %v1811 = vld [vmem:[#allocation2 + $0x5b0] sm:$0xff]
      %v1812 = vld [vmem:[#allocation2 + $0x5b8] sm:$0xff]
      %v1813 = vld [vmem:[#allocation2 + $0x5c0] sm:$0xff]
      %v1814 = vld [vmem:[#allocation2 + $0x5c8] sm:$0xff]
      %v1815 = vld [vmem:[#allocation2 + $0x5d0] sm:$0xff]
      %v1816 = vld [vmem:[#allocation2 + $0x5d8] sm:$0xff]
      %v1817 = vld [vmem:[#allocation2 + $0x5e0] sm:$0xff]
      %v1818 = vld [vmem:[#allocation2 + $0x5e8] sm:$0xff]
      %v1819 = vld [vmem:[#allocation2 + $0x5f0] sm:$0xff]
      %v1820 = vld [vmem:[#allocation2 + $0x5f8] sm:$0xff]
      %v1821 = vld [vmem:[#allocation2 + $0x600] sm:$0xff]
      %v1822 = vld [vmem:[#allocation2 + $0x608] sm:$0xff]
      %v1823 = vld [vmem:[#allocation2 + $0x610] sm:$0xff]
      %v1824 = vld [vmem:[#allocation2 + $0x618] sm:$0xff]
      %v1825 = vld [vmem:[#allocation2 + $0x620] sm:$0xff]
      %v1826 = vld [vmem:[#allocation2 + $0x628] sm:$0xff]
      %v1827 = vld [vmem:[#allocation2 + $0x630] sm:$0xff]
      %v1828 = vld [vmem:[#allocation2 + $0x638] sm:$0xff]
      %v1829 = vld [vmem:[#allocation2 + $0x640] sm:$0xff]
      %v1830 = vld [vmem:[#allocation2 + $0x648] sm:$0xff]
      %v1831 = vld [vmem:[#allocation2 + $0x650] sm:$0xff]
      %v1832 = vld [vmem:[#allocation2 + $0x658] sm:$0xff]
      %v1833 = vld [vmem:[#allocation2 + $0x660] sm:$0xff]
      %v1834 = vld [vmem:[#allocation2 + $0x668] sm:$0xff]
      %v1835 = vld [vmem:[#allocation2 + $0x670] sm:$0xff]
      %v1836 = vld [vmem:[#allocation2 + $0x678] sm:$0xff]
      %v1837 = vld [vmem:[#allocation2 + $0x680] sm:$0xff]
      %v1838 = vld [vmem:[#allocation2 + $0x688] sm:$0xff]
      %v1839 = vld [vmem:[#allocation2 + $0x690] sm:$0xff]
      %v1840 = vld [vmem:[#allocation2 + $0x698] sm:$0xff]
      %v1841 = vld [vmem:[#allocation2 + $0x6a0] sm:$0xff]
      %v1842 = vld [vmem:[#allocation2 + $0x6a8] sm:$0xff]
      %v1843 = vld [vmem:[#allocation2 + $0x6b0] sm:$0xff]
      %v1844 = vld [vmem:[#allocation2 + $0x6b8] sm:$0xff]
      %v1845 = vld [vmem:[%s3] sm:$0xff]
      %v1846 = vld [vmem:[%s3 + $0x8] sm:$0xff]
      %v1847 = vld [vmem:[%s3 + $0x10] sm:$0xff]
      %v1848 = vld [vmem:[%s3 + $0x18] sm:$0xff]
      %v1849 = vld [vmem:[%s3 + $0x20] sm:$0xff]
      %v1850 = vld [vmem:[%s3 + $0x28] sm:$0xff]
      %v1851 = vld [vmem:[%s3 + $0x30] sm:$0xff]
      %v1852 = vld [vmem:[%s3 + $0x38] sm:$0xff]
      %1854 = vset.pattern.permute.xlu0 0
      %1855 = vperm.xlu0 %1854, %v1845
      %v1856 = vpop.permute.xlu0 %1855
      %1859 = vset.pattern.permute.xlu0 0
      %1860 = vperm.xlu0 %1859, %v1846
      %v1861 = vpop.permute.xlu0 %1860
      %1864 = vset.pattern.permute.xlu0 0
      %1865 = vperm.xlu0 %1864, %v1847
      %v1866 = vpop.permute.xlu0 %1865
      %1869 = vset.pattern.permute.xlu0 0
      %1870 = vperm.xlu0 %1869, %v1848
      %v1871 = vpop.permute.xlu0 %1870
      %1874 = vset.pattern.permute.xlu0 0
      %1875 = vperm.xlu0 %1874, %v1849
      %v1876 = vpop.permute.xlu0 %1875
      %1879 = vset.pattern.permute.xlu0 0
      %1880 = vperm.xlu0 %1879, %v1850
      %v1881 = vpop.permute.xlu0 %1880
      %1884 = vset.pattern.permute.xlu0 0
      %1885 = vperm.xlu0 %1884, %v1851
      %v1886 = vpop.permute.xlu0 %1885
      %1889 = vset.pattern.permute.xlu0 0
      %1890 = vperm.xlu0 %1889, %v1852
      %v1891 = vpop.permute.xlu0 %1890
      %vm1893 = vcmask 523264
      %v1895 = vsel %vm1893, %v1593, 0
      %v1898 = vsel %vm1893, %v1598, 0
      %v1901 = vsel %vm1893, %v1603, 0
      %v1904 = vsel %vm1893, %v1608, 0
      %v1907 = vsel %vm1893, %v1613, 0
      %v1910 = vsel %vm1893, %v1618, 0
      %v1913 = vsel %vm1893, %v1623, 0
      %v1916 = vsel %vm1893, %v1628, 0
      %1918 = vmatprep.subr.mxu0 %v1675
      %1919 = vmatpush1.msra.mxu0 %v1674
      %1920 = vmatprep.subr.mxu0 %v1672
      %1921 = vmatpush1.msra.mxu0 %v1671
      %1922 = vmatprep.subr.mxu0 %v1669
      %1923 = vmatpush1.msra.mxu0 %v1668
      %1924 = vmatprep.subr.mxu0 %v1666
      %1925 = vmatpush1.msra.mxu0 %v1665
      %1926 = vmatprep.subr.mxu0 %v1663
      %1927 = vmatpush1.msra.mxu0 %v1662
      %1928 = vmatprep.subr.mxu0 %v1660
      %1929 = vmatpush1.msra.mxu0 %v1659
      %1930 = vmatprep.subr.mxu0 %v1657
      %1931 = vmatpush1.msra.mxu0 %v1656
      %1932 = vmatprep.subr.mxu0 %v1654
      %1933 = vmatpush1.msra.mxu0 %v1653
      %1934 = vmatprep.subr.mxu0 %v1651
      %1935 = vmatpush1.msra.mxu0 %v1650
      %1936 = vmatprep.subr.mxu0 %v1648
      %1937 = vmatpush1.msra.mxu0 %v1647
      %1938 = vmatprep.subr.mxu0 %v1645
      %1939 = vmatpush1.msra.mxu0 %v1644
      %1940 = vmatprep.subr.mxu0 %v1642
      %1941 = vmatpush1.msra.mxu0 %v1641
      %1942 = vmatprep.subr.mxu0 %v1639
      %1943 = vmatpush1.msra.mxu0 %v1638
      %1944 = vmatprep.subr.mxu0 %v1636
      %1945 = vmatpush1.msra.mxu0 %v1635
      %1946 = vmatprep.subr.mxu0 %v1633
      %1947 = vmatpush1.msra.mxu0 %v1632
      %1948 = vmatprep.subr.mxu0 %v1630
      %1949 = vmatpush1.msra.mxu0 %v1629
      %1950 = vmatprep.subr.mxu0 %v1723
      %1951 = vmatpush2.msra.mxu0 %v1722
      %1952 = vmatprep.subr.mxu0 %v1720
      %1953 = vmatpush2.msra.mxu0 %v1719
      %1954 = vmatprep.subr.mxu0 %v1717
      %1955 = vmatpush2.msra.mxu0 %v1716
      %1956 = vmatprep.subr.mxu0 %v1714
      %1957 = vmatpush2.msra.mxu0 %v1713
      %1958 = vmatprep.subr.mxu0 %v1711
      %1959 = vmatpush2.msra.mxu0 %v1710
      %1960 = vmatprep.subr.mxu0 %v1708
      %1961 = vmatpush2.msra.mxu0 %v1707
      %1962 = vmatprep.subr.mxu0 %v1705
      %1963 = vmatpush2.msra.mxu0 %v1704
      %1964 = vmatprep.subr.mxu0 %v1702
      %1965 = vmatpush2.msra.mxu0 %v1701
      %1966 = vmatprep.subr.mxu0 %v1699
      %1967 = vmatpush2.msra.mxu0 %v1698
      %1968 = vmatprep.subr.mxu0 %v1696
      %1969 = vmatpush2.msra.mxu0 %v1695
      %1970 = vmatprep.subr.mxu0 %v1693
      %1971 = vmatpush2.msra.mxu0 %v1692
      %1972 = vmatprep.subr.mxu0 %v1690
      %1973 = vmatpush2.msra.mxu0 %v1689
      %1974 = vmatprep.subr.mxu0 %v1687
      %1975 = vmatpush2.msra.mxu0 %v1686
      %1976 = vmatprep.subr.mxu0 %v1684
      %1977 = vmatpush2.msra.mxu0 %v1683
      %1978 = vmatprep.subr.mxu0 %v1681
      %1979 = vmatpush2.msra.mxu0 %v1680
      %1980 = vmatprep.subr.mxu0 %v1678
      %1981 = vmatpush2.msra.mxu0 %v1677
      %1982 = vmatprep.mubr.f32.mxu0 %v1590
      %1983 = vmatmul.mubr.f32.gmra.mxu0 %v1589
      %v1984 = vpop.f32.mrf.mxu0
      %v1985 = vadd.f32 %v1856, %v1984
      %v1986 = vpop.f32.mrf.mxu0
      %v1987 = vadd.f32 %v1856, %v1986
      %1988 = vmatprep.mubr.f32.mxu0 %v1595
      %1989 = vmatmul.mubr.f32.gmra.mxu0 %v1594
      %v1990 = vpop.f32.mrf.mxu0
      %v1991 = vadd.f32 %v1861, %v1990
      %v1992 = vpop.f32.mrf.mxu0
      %v1993 = vadd.f32 %v1861, %v1992
      %1994 = vmatprep.mubr.f32.mxu0 %v1600
      %1995 = vmatmul.mubr.f32.gmra.mxu0 %v1599
      %v1996 = vpop.f32.mrf.mxu0
      %v1997 = vadd.f32 %v1866, %v1996
      %v1998 = vpop.f32.mrf.mxu0
      %v1999 = vadd.f32 %v1866, %v1998
      %2000 = vmatprep.mubr.f32.mxu0 %v1605
      %2001 = vmatmul.mubr.f32.gmra.mxu0 %v1604
      %v2002 = vpop.f32.mrf.mxu0
      %v2003 = vadd.f32 %v1871, %v2002
      %v2004 = vpop.f32.mrf.mxu0
      %v2005 = vadd.f32 %v1871, %v2004
      %2006 = vmatprep.mubr.f32.mxu0 %v1610
      %2007 = vmatmul.mubr.f32.gmra.mxu0 %v1609
      %v2008 = vpop.f32.mrf.mxu0
      %v2009 = vadd.f32 %v1876, %v2008
      %v2010 = vpop.f32.mrf.mxu0
      %v2011 = vadd.f32 %v1876, %v2010
      %2012 = vmatprep.mubr.f32.mxu0 %v1615
      %2013 = vmatmul.mubr.f32.gmra.mxu0 %v1614
      %v2014 = vpop.f32.mrf.mxu0
      %v2015 = vadd.f32 %v1881, %v2014
      %v2016 = vpop.f32.mrf.mxu0
      %v2017 = vadd.f32 %v1881, %v2016
      %2018 = vmatprep.mubr.f32.mxu0 %v1620
      %2019 = vmatmul.mubr.f32.gmra.mxu0 %v1619
      %v2020 = vpop.f32.mrf.mxu0
      %v2021 = vadd.f32 %v1886, %v2020
      %v2022 = vpop.f32.mrf.mxu0
      %v2023 = vadd.f32 %v1886, %v2022
      %2024 = vmatprep.mubr.f32.mxu0 %v1625
      %2025 = vmatmul.mubr.f32.gmra.mxu0 %v1624
      %v2026 = vpop.f32.mrf.mxu0
      %v2027 = vadd.f32 %v1891, %v2026
      %v2028 = vpop.f32.mrf.mxu0
      %v2029 = vadd.f32 %v1891, %v2028
      %2030 = vdwg.mxu0
      %2031 = vmatprep.subr.mxu0 %v1771
      %2032 = vmatpush1.msra.mxu0 %v1770
      %2033 = vmatprep.subr.mxu0 %v1768
      %2034 = vmatpush1.msra.mxu0 %v1767
      %2035 = vmatprep.subr.mxu0 %v1765
      %2036 = vmatpush1.msra.mxu0 %v1764
      %2037 = vmatprep.subr.mxu0 %v1762
      %2038 = vmatpush1.msra.mxu0 %v1761
      %2039 = vmatprep.subr.mxu0 %v1759
      %2040 = vmatpush1.msra.mxu0 %v1758
      %2041 = vmatprep.subr.mxu0 %v1756
      %2042 = vmatpush1.msra.mxu0 %v1755
      %2043 = vmatprep.subr.mxu0 %v1753
      %2044 = vmatpush1.msra.mxu0 %v1752
      %2045 = vmatprep.subr.mxu0 %v1750
      %2046 = vmatpush1.msra.mxu0 %v1749
      %2047 = vmatprep.subr.mxu0 %v1747
      %2048 = vmatpush1.msra.mxu0 %v1746
      %2049 = vmatprep.subr.mxu0 %v1744
      %2050 = vmatpush1.msra.mxu0 %v1743
      %2051 = vmatprep.subr.mxu0 %v1741
      %2052 = vmatpush1.msra.mxu0 %v1740
      %2053 = vmatprep.subr.mxu0 %v1738
      %2054 = vmatpush1.msra.mxu0 %v1737
      %2055 = vmatprep.subr.mxu0 %v1735
      %2056 = vmatpush1.msra.mxu0 %v1734
      %2057 = vmatprep.subr.mxu0 %v1732
      %2058 = vmatpush1.msra.mxu0 %v1731
      %2059 = vmatprep.subr.mxu0 %v1729
      %2060 = vmatpush1.msra.mxu0 %v1728
      %2061 = vmatprep.subr.mxu0 %v1726
      %2062 = vmatpush1.msra.mxu0 %v1725
      %2063 = vmatprep.subr.mxu0 %v1819
      %2064 = vmatpush2.msra.mxu0 %v1818
      %2065 = vmatprep.subr.mxu0 %v1816
      %2066 = vmatpush2.msra.mxu0 %v1815
      %2067 = vmatprep.subr.mxu0 %v1813
      %2068 = vmatpush2.msra.mxu0 %v1812
      %2069 = vmatprep.subr.mxu0 %v1810
      %2070 = vmatpush2.msra.mxu0 %v1809
      %2071 = vmatprep.subr.mxu0 %v1807
      %2072 = vmatpush2.msra.mxu0 %v1806
      %2073 = vmatprep.subr.mxu0 %v1804
      %2074 = vmatpush2.msra.mxu0 %v1803
      %2075 = vmatprep.subr.mxu0 %v1801
      %2076 = vmatpush2.msra.mxu0 %v1800
      %2077 = vmatprep.subr.mxu0 %v1798
      %2078 = vmatpush2.msra.mxu0 %v1797
      %2079 = vmatprep.subr.mxu0 %v1795
      %2080 = vmatpush2.msra.mxu0 %v1794
      %2081 = vmatprep.subr.mxu0 %v1792
      %2082 = vmatpush2.msra.mxu0 %v1791
      %2083 = vmatprep.subr.mxu0 %v1789
      %2084 = vmatpush2.msra.mxu0 %v1788
      %2085 = vmatprep.subr.mxu0 %v1786
      %2086 = vmatpush2.msra.mxu0 %v1785
      %2087 = vmatprep.subr.mxu0 %v1783
      %2088 = vmatpush2.msra.mxu0 %v1782
      %2089 = vmatprep.subr.mxu0 %v1780
      %2090 = vmatpush2.msra.mxu0 %v1779
      %2091 = vmatprep.subr.mxu0 %v1777
      %2092 = vmatpush2.msra.mxu0 %v1776
      %2093 = vmatprep.subr.mxu0 %v1774
      %2094 = vmatpush2.msra.mxu0 %v1773
      %2095 = vmatprep.mubr.f32.mxu0 %v1592
      %2096 = vmatmul.mubr.f32.gmra.mxu0 %v1591
      %v2097 = vpop.f32.mrf.mxu0
      %v2098 = vadd.f32 %v1985, %v2097
      %v2099 = vpop.f32.mrf.mxu0
      %v2100 = vadd.f32 %v1987, %v2099
      %2101 = vmatprep.mubr.f32.mxu0 %v1597
      %2102 = vmatmul.mubr.f32.gmra.mxu0 %v1596
      %v2103 = vpop.f32.mrf.mxu0
      %v2104 = vadd.f32 %v1991, %v2103
      %v2105 = vpop.f32.mrf.mxu0
      %v2106 = vadd.f32 %v1993, %v2105
      %2107 = vmatprep.mubr.f32.mxu0 %v1602
      %2108 = vmatmul.mubr.f32.gmra.mxu0 %v1601
      %v2109 = vpop.f32.mrf.mxu0
      %v2110 = vadd.f32 %v1997, %v2109
      %v2111 = vpop.f32.mrf.mxu0
      %v2112 = vadd.f32 %v1999, %v2111
      %2113 = vmatprep.mubr.f32.mxu0 %v1607
      %2114 = vmatmul.mubr.f32.gmra.mxu0 %v1606
      %v2115 = vpop.f32.mrf.mxu0
      %v2116 = vadd.f32 %v2003, %v2115
      %v2117 = vpop.f32.mrf.mxu0
      %v2118 = vadd.f32 %v2005, %v2117
      %2119 = vmatprep.mubr.f32.mxu0 %v1612
      %2120 = vmatmul.mubr.f32.gmra.mxu0 %v1611
      %v2121 = vpop.f32.mrf.mxu0
      %v2122 = vadd.f32 %v2009, %v2121
      %v2123 = vpop.f32.mrf.mxu0
      %v2124 = vadd.f32 %v2011, %v2123
      %2125 = vmatprep.mubr.f32.mxu0 %v1617
      %2126 = vmatmul.mubr.f32.gmra.mxu0 %v1616
      %v2127 = vpop.f32.mrf.mxu0
      %v2128 = vadd.f32 %v2015, %v2127
      %v2129 = vpop.f32.mrf.mxu0
      %v2130 = vadd.f32 %v2017, %v2129
      %2131 = vmatprep.mubr.f32.mxu0 %v1622
      %2132 = vmatmul.mubr.f32.gmra.mxu0 %v1621
      %v2133 = vpop.f32.mrf.mxu0
      %v2134 = vadd.f32 %v2021, %v2133
      %v2135 = vpop.f32.mrf.mxu0
      %v2136 = vadd.f32 %v2023, %v2135
      %2137 = vmatprep.mubr.f32.mxu0 %v1627
      %2138 = vmatmul.mubr.f32.gmra.mxu0 %v1626
      %v2139 = vpop.f32.mrf.mxu0
      %v2140 = vadd.f32 %v2027, %v2139
      %v2141 = vpop.f32.mrf.mxu0
      %v2142 = vadd.f32 %v2029, %v2141
      %2143 = vdwg.mxu0
      %2144 = vmatprep.subr.mxu0 0.0
      %2145 = vmatpush1.msra.mxu0 0.0
      %2146 = vmatprep.subr.mxu0 0.0
      %2147 = vmatpush1.msra.mxu0 0.0
      %2148 = vmatprep.subr.mxu0 0.0
      %2149 = vmatpush1.msra.mxu0 0.0
      %2150 = vmatprep.subr.mxu0 0.0
      %2151 = vmatpush1.msra.mxu0 0.0
      %2152 = vmatprep.subr.mxu0 0.0
      %2153 = vmatpush1.msra.mxu0 0.0
      %2154 = vmatprep.subr.mxu0 0.0
      %2155 = vmatpush1.msra.mxu0 0.0
      %2156 = vmatprep.subr.mxu0 0.0
      %2157 = vmatpush1.msra.mxu0 0.0
      %2158 = vmatprep.subr.mxu0 0.0
      %2159 = vmatpush1.msra.mxu0 0.0
      %2160 = vmatprep.subr.mxu0 %v1843
      %2161 = vmatpush1.msra.mxu0 %v1842
      %2162 = vmatprep.subr.mxu0 %v1840
      %2163 = vmatpush1.msra.mxu0 %v1839
      %2164 = vmatprep.subr.mxu0 %v1837
      %2165 = vmatpush1.msra.mxu0 %v1836
      %2166 = vmatprep.subr.mxu0 %v1834
      %2167 = vmatpush1.msra.mxu0 %v1833
      %2168 = vmatprep.subr.mxu0 %v1831
      %2169 = vmatpush1.msra.mxu0 %v1830
      %2170 = vmatprep.subr.mxu0 %v1828
      %2171 = vmatpush1.msra.mxu0 %v1827
      %2172 = vmatprep.subr.mxu0 %v1825
      %2173 = vmatpush1.msra.mxu0 %v1824
      %2174 = vmatprep.subr.mxu0 %v1822
      %2175 = vmatpush1.msra.mxu0 %v1821
      %2176 = vmatprep.subr.mxu0 0.0
      %2177 = vmatpush2.msra.mxu0 0.0
      %2178 = vmatprep.subr.mxu0 0.0
      %2179 = vmatpush2.msra.mxu0 0.0
      %2180 = vmatprep.subr.mxu0 0.0
      %2181 = vmatpush2.msra.mxu0 0.0
      %2182 = vmatprep.subr.mxu0 0.0
      %2183 = vmatpush2.msra.mxu0 0.0
      %2184 = vmatprep.subr.mxu0 0.0
      %2185 = vmatpush2.msra.mxu0 0.0
      %2186 = vmatprep.subr.mxu0 0.0
      %2187 = vmatpush2.msra.mxu0 0.0
      %2188 = vmatprep.subr.mxu0 0.0
      %2189 = vmatpush2.msra.mxu0 0.0
      %2190 = vmatprep.subr.mxu0 0.0
      %2191 = vmatpush2.msra.mxu0 0.0
      %2192 = vmatprep.subr.mxu0 0.0
      %2193 = vmatpush2.msra.mxu0 0.0
      %2194 = vmatprep.subr.mxu0 0.0
      %2195 = vmatpush2.msra.mxu0 0.0
      %2196 = vmatprep.subr.mxu0 0.0
      %2197 = vmatpush2.msra.mxu0 0.0
      %2198 = vmatprep.subr.mxu0 0.0
      %2199 = vmatpush2.msra.mxu0 0.0
      %2200 = vmatprep.subr.mxu0 0.0
      %2201 = vmatpush2.msra.mxu0 0.0
      %2202 = vmatprep.subr.mxu0 0.0
      %2203 = vmatpush2.msra.mxu0 0.0
      %2204 = vmatprep.subr.mxu0 0.0
      %2205 = vmatpush2.msra.mxu0 0.0
      %2206 = vmatprep.subr.mxu0 0.0
      %2207 = vmatpush2.msra.mxu0 0.0
      %2208 = vmatprep.mubr.f32.mxu0 0.0
      %2209 = vmatmul.mubr.f32.gmra.mxu0 %v1895
      %v2210 = vpop.f32.mrf.mxu0
      %v2211 = vadd.f32 %v2098, %v2210
      %v2212 = vpop.f32.mrf.mxu0
      %v2213 = vadd.f32 %v2100, %v2212
      %2214 = vmatprep.mubr.f32.mxu0 0.0
      %2215 = vmatmul.mubr.f32.gmra.mxu0 %v1898
      %v2216 = vpop.f32.mrf.mxu0
      %v2217 = vadd.f32 %v2104, %v2216
      %v2218 = vpop.f32.mrf.mxu0
      %v2219 = vadd.f32 %v2106, %v2218
      %2220 = vmatprep.mubr.f32.mxu0 0.0
      %2221 = vmatmul.mubr.f32.gmra.mxu0 %v1901
      %v2222 = vpop.f32.mrf.mxu0
      %v2223 = vadd.f32 %v2110, %v2222
      %v2224 = vpop.f32.mrf.mxu0
      %v2225 = vadd.f32 %v2112, %v2224
      %2226 = vmatprep.mubr.f32.mxu0 0.0
      %2227 = vmatmul.mubr.f32.gmra.mxu0 %v1904
      %v2228 = vpop.f32.mrf.mxu0
      %v2229 = vadd.f32 %v2116, %v2228
      %v2230 = vpop.f32.mrf.mxu0
      %v2231 = vadd.f32 %v2118, %v2230
      %2232 = vmatprep.mubr.f32.mxu0 0.0
      %2233 = vmatmul.mubr.f32.gmra.mxu0 %v1907
      %v2234 = vpop.f32.mrf.mxu0
      %v2235 = vadd.f32 %v2122, %v2234
      %v2236 = vpop.f32.mrf.mxu0
      %v2237 = vadd.f32 %v2124, %v2236
      %2238 = vmatprep.mubr.f32.mxu0 0.0
      %2239 = vmatmul.mubr.f32.gmra.mxu0 %v1910
      %v2240 = vpop.f32.mrf.mxu0
      %v2241 = vadd.f32 %v2128, %v2240
      %v2242 = vpop.f32.mrf.mxu0
      %v2243 = vadd.f32 %v2130, %v2242
      %2244 = vmatprep.mubr.f32.mxu0 0.0
      %2245 = vmatmul.mubr.f32.gmra.mxu0 %v1913
      %v2246 = vpop.f32.mrf.mxu0
      %v2247 = vadd.f32 %v2134, %v2246
      %v2248 = vpop.f32.mrf.mxu0
      %v2249 = vadd.f32 %v2136, %v2248
      %2250 = vmatprep.mubr.f32.mxu0 0.0
      %2251 = vmatmul.mubr.f32.gmra.mxu0 %v1916
      %v2252 = vpop.f32.mrf.mxu0
      %v2253 = vadd.f32 %v2140, %v2252
      %v2254 = vpop.f32.mrf.mxu0
      %v2255 = vadd.f32 %v2142, %v2254
      %2256 = vdwg.mxu0
      %2257 = vmatprep.subr.mxu0 0.0
      %2258 = vmatpush1.msra.mxu0 %v1676
      %2259 = vmatprep.subr.mxu0 0.0
      %2260 = vmatpush1.msra.mxu0 %v1673
      %2261 = vmatprep.subr.mxu0 0.0
      %2262 = vmatpush1.msra.mxu0 %v1670
      %2263 = vmatprep.subr.mxu0 0.0
      %2264 = vmatpush1.msra.mxu0 %v1667
      %2265 = vmatprep.subr.mxu0 0.0
      %2266 = vmatpush1.msra.mxu0 %v1664
      %2267 = vmatprep.subr.mxu0 0.0
      %2268 = vmatpush1.msra.mxu0 %v1661
      %2269 = vmatprep.subr.mxu0 0.0
      %2270 = vmatpush1.msra.mxu0 %v1658
      %2271 = vmatprep.subr.mxu0 0.0
      %2272 = vmatpush1.msra.mxu0 %v1655
      %2273 = vmatprep.subr.mxu0 0.0
      %2274 = vmatpush1.msra.mxu0 %v1652
      %2275 = vmatprep.subr.mxu0 0.0
      %2276 = vmatpush1.msra.mxu0 %v1649
      %2277 = vmatprep.subr.mxu0 0.0
      %2278 = vmatpush1.msra.mxu0 %v1646
      %2279 = vmatprep.subr.mxu0 0.0
      %2280 = vmatpush1.msra.mxu0 %v1643
      %2281 = vmatprep.subr.mxu0 0.0
      %2282 = vmatpush1.msra.mxu0 %v1640
      %2283 = vmatprep.subr.mxu0 0.0
      %2284 = vmatpush1.msra.mxu0 %v1637
      %2285 = vmatprep.subr.mxu0 0.0
      %2286 = vmatpush1.msra.mxu0 %v1634
      %2287 = vmatprep.subr.mxu0 0.0
      %2288 = vmatpush1.msra.mxu0 %v1631
      %2289 = vmatprep.subr.mxu0 0.0
      %2290 = vmatpush2.msra.mxu0 %v1724
      %2291 = vmatprep.subr.mxu0 0.0
      %2292 = vmatpush2.msra.mxu0 %v1721
      %2293 = vmatprep.subr.mxu0 0.0
      %2294 = vmatpush2.msra.mxu0 %v1718
      %2295 = vmatprep.subr.mxu0 0.0
      %2296 = vmatpush2.msra.mxu0 %v1715
      %2297 = vmatprep.subr.mxu0 0.0
      %2298 = vmatpush2.msra.mxu0 %v1712
      %2299 = vmatprep.subr.mxu0 0.0
      %2300 = vmatpush2.msra.mxu0 %v1709
      %2301 = vmatprep.subr.mxu0 0.0
      %2302 = vmatpush2.msra.mxu0 %v1706
      %2303 = vmatprep.subr.mxu0 0.0
      %2304 = vmatpush2.msra.mxu0 %v1703
      %2305 = vmatprep.subr.mxu0 0.0
      %2306 = vmatpush2.msra.mxu0 %v1700
      %2307 = vmatprep.subr.mxu0 0.0
      %2308 = vmatpush2.msra.mxu0 %v1697
      %2309 = vmatprep.subr.mxu0 0.0
      %2310 = vmatpush2.msra.mxu0 %v1694
      %2311 = vmatprep.subr.mxu0 0.0
      %2312 = vmatpush2.msra.mxu0 %v1691
      %2313 = vmatprep.subr.mxu0 0.0
      %2314 = vmatpush2.msra.mxu0 %v1688
      %2315 = vmatprep.subr.mxu0 0.0
      %2316 = vmatpush2.msra.mxu0 %v1685
      %2317 = vmatprep.subr.mxu0 0.0
      %2318 = vmatpush2.msra.mxu0 %v1682
      %2319 = vmatprep.subr.mxu0 0.0
      %2320 = vmatpush2.msra.mxu0 %v1679
      %2321 = vmatprep.mubr.f32.mxu0 %v1590
      %2322 = vmatmul.mubr.f32.gmra.mxu0 %v1589
      %v2323 = vpop.f32.mrf.mxu0
      %v2324 = vadd.f32 %v1856, %v2323
      %v2325 = vpop.f32.mrf.mxu0
      %2326 = vmatprep.mubr.f32.mxu0 %v1595
      %2327 = vmatmul.mubr.f32.gmra.mxu0 %v1594
      %v2328 = vpop.f32.mrf.mxu0
      %v2329 = vadd.f32 %v1861, %v2328
      %v2330 = vpop.f32.mrf.mxu0
      %2331 = vmatprep.mubr.f32.mxu0 %v1600
      %2332 = vmatmul.mubr.f32.gmra.mxu0 %v1599
      %v2333 = vpop.f32.mrf.mxu0
      %v2334 = vadd.f32 %v1866, %v2333
      %v2335 = vpop.f32.mrf.mxu0
      %2336 = vmatprep.mubr.f32.mxu0 %v1605
      %2337 = vmatmul.mubr.f32.gmra.mxu0 %v1604
      %v2338 = vpop.f32.mrf.mxu0
      %v2339 = vadd.f32 %v1871, %v2338
      %v2340 = vpop.f32.mrf.mxu0
      %2341 = vmatprep.mubr.f32.mxu0 %v1610
      %2342 = vmatmul.mubr.f32.gmra.mxu0 %v1609
      %v2343 = vpop.f32.mrf.mxu0
      %v2344 = vadd.f32 %v1876, %v2343
      %v2345 = vpop.f32.mrf.mxu0
      %2346 = vmatprep.mubr.f32.mxu0 %v1615
      %2347 = vmatmul.mubr.f32.gmra.mxu0 %v1614
      %v2348 = vpop.f32.mrf.mxu0
      %v2349 = vadd.f32 %v1881, %v2348
      %v2350 = vpop.f32.mrf.mxu0
      %2351 = vmatprep.mubr.f32.mxu0 %v1620
      %2352 = vmatmul.mubr.f32.gmra.mxu0 %v1619
      %v2353 = vpop.f32.mrf.mxu0
      %v2354 = vadd.f32 %v1886, %v2353
      %v2355 = vpop.f32.mrf.mxu0
      %2356 = vmatprep.mubr.f32.mxu0 %v1625
      %2357 = vmatmul.mubr.f32.gmra.mxu0 %v1624
      %v2358 = vpop.f32.mrf.mxu0
      %v2359 = vadd.f32 %v1891, %v2358
      %v2360 = vpop.f32.mrf.mxu0
      %2361 = vdwg.mxu0
      %2362 = vmatprep.subr.mxu0 0.0
      %2363 = vmatpush1.msra.mxu0 %v1772
      %2364 = vmatprep.subr.mxu0 0.0
      %2365 = vmatpush1.msra.mxu0 %v1769
      %2366 = vmatprep.subr.mxu0 0.0
      %2367 = vmatpush1.msra.mxu0 %v1766
      %2368 = vmatprep.subr.mxu0 0.0
      %2369 = vmatpush1.msra.mxu0 %v1763
      %2370 = vmatprep.subr.mxu0 0.0
      %2371 = vmatpush1.msra.mxu0 %v1760
      %2372 = vmatprep.subr.mxu0 0.0
      %2373 = vmatpush1.msra.mxu0 %v1757
      %2374 = vmatprep.subr.mxu0 0.0
      %2375 = vmatpush1.msra.mxu0 %v1754
      %2376 = vmatprep.subr.mxu0 0.0
      %2377 = vmatpush1.msra.mxu0 %v1751
      %2378 = vmatprep.subr.mxu0 0.0
      %2379 = vmatpush1.msra.mxu0 %v1748
      %2380 = vmatprep.subr.mxu0 0.0
      %2381 = vmatpush1.msra.mxu0 %v1745
      %2382 = vmatprep.subr.mxu0 0.0
      %2383 = vmatpush1.msra.mxu0 %v1742
      %2384 = vmatprep.subr.mxu0 0.0
      %2385 = vmatpush1.msra.mxu0 %v1739
      %2386 = vmatprep.subr.mxu0 0.0
      %2387 = vmatpush1.msra.mxu0 %v1736
      %2388 = vmatprep.subr.mxu0 0.0
      %2389 = vmatpush1.msra.mxu0 %v1733
      %2390 = vmatprep.subr.mxu0 0.0
      %2391 = vmatpush1.msra.mxu0 %v1730
      %2392 = vmatprep.subr.mxu0 0.0
      %2393 = vmatpush1.msra.mxu0 %v1727
      %2394 = vmatprep.subr.mxu0 0.0
      %2395 = vmatpush2.msra.mxu0 %v1820
      %2396 = vmatprep.subr.mxu0 0.0
      %2397 = vmatpush2.msra.mxu0 %v1817
      %2398 = vmatprep.subr.mxu0 0.0
      %2399 = vmatpush2.msra.mxu0 %v1814
      %2400 = vmatprep.subr.mxu0 0.0
      %2401 = vmatpush2.msra.mxu0 %v1811
      %2402 = vmatprep.subr.mxu0 0.0
      %2403 = vmatpush2.msra.mxu0 %v1808
      %2404 = vmatprep.subr.mxu0 0.0
      %2405 = vmatpush2.msra.mxu0 %v1805
      %2406 = vmatprep.subr.mxu0 0.0
      %2407 = vmatpush2.msra.mxu0 %v1802
      %2408 = vmatprep.subr.mxu0 0.0
      %2409 = vmatpush2.msra.mxu0 %v1799
      %2410 = vmatprep.subr.mxu0 0.0
      %2411 = vmatpush2.msra.mxu0 %v1796
      %2412 = vmatprep.subr.mxu0 0.0
      %2413 = vmatpush2.msra.mxu0 %v1793
      %2414 = vmatprep.subr.mxu0 0.0
      %2415 = vmatpush2.msra.mxu0 %v1790
      %2416 = vmatprep.subr.mxu0 0.0
      %2417 = vmatpush2.msra.mxu0 %v1787
      %2418 = vmatprep.subr.mxu0 0.0
      %2419 = vmatpush2.msra.mxu0 %v1784
      %2420 = vmatprep.subr.mxu0 0.0
      %2421 = vmatpush2.msra.mxu0 %v1781
      %2422 = vmatprep.subr.mxu0 0.0
      %2423 = vmatpush2.msra.mxu0 %v1778
      %2424 = vmatprep.subr.mxu0 0.0
      %2425 = vmatpush2.msra.mxu0 %v1775
      %2426 = vmatprep.mubr.f32.mxu0 %v1592
      %2427 = vmatmul.mubr.f32.gmra.mxu0 %v1591
      %v2428 = vpop.f32.mrf.mxu0
      %v2429 = vadd.f32 %v2324, %v2428
      %v2430 = vpop.f32.mrf.mxu0
      %2431 = vmatprep.mubr.f32.mxu0 %v1597
      %2432 = vmatmul.mubr.f32.gmra.mxu0 %v1596
      %v2433 = vpop.f32.mrf.mxu0
      %v2434 = vadd.f32 %v2329, %v2433
      %v2435 = vpop.f32.mrf.mxu0
      %2436 = vmatprep.mubr.f32.mxu0 %v1602
      %2437 = vmatmul.mubr.f32.gmra.mxu0 %v1601
      %v2438 = vpop.f32.mrf.mxu0
      %v2439 = vadd.f32 %v2334, %v2438
      %v2440 = vpop.f32.mrf.mxu0
      %2441 = vmatprep.mubr.f32.mxu0 %v1607
      %2442 = vmatmul.mubr.f32.gmra.mxu0 %v1606
      %v2443 = vpop.f32.mrf.mxu0
      %v2444 = vadd.f32 %v2339, %v2443
      %v2445 = vpop.f32.mrf.mxu0
      %2446 = vmatprep.mubr.f32.mxu0 %v1612
      %2447 = vmatmul.mubr.f32.gmra.mxu0 %v1611
      %v2448 = vpop.f32.mrf.mxu0
      %v2449 = vadd.f32 %v2344, %v2448
      %v2450 = vpop.f32.mrf.mxu0
      %2451 = vmatprep.mubr.f32.mxu0 %v1617
      %2452 = vmatmul.mubr.f32.gmra.mxu0 %v1616
      %v2453 = vpop.f32.mrf.mxu0
      %v2454 = vadd.f32 %v2349, %v2453
      %v2455 = vpop.f32.mrf.mxu0
      %2456 = vmatprep.mubr.f32.mxu0 %v1622
      %2457 = vmatmul.mubr.f32.gmra.mxu0 %v1621
      %v2458 = vpop.f32.mrf.mxu0
      %v2459 = vadd.f32 %v2354, %v2458
      %v2460 = vpop.f32.mrf.mxu0
      %2461 = vmatprep.mubr.f32.mxu0 %v1627
      %2462 = vmatmul.mubr.f32.gmra.mxu0 %v1626
      %v2463 = vpop.f32.mrf.mxu0
      %v2464 = vadd.f32 %v2359, %v2463
      %v2465 = vpop.f32.mrf.mxu0
      %2466 = vdwg.mxu0
      %2467 = vmatprep.subr.mxu0 0.0
      %2468 = vmatpush1.msra.mxu0 0.0
      %2469 = vmatprep.subr.mxu0 0.0
      %2470 = vmatpush1.msra.mxu0 0.0
      %2471 = vmatprep.subr.mxu0 0.0
      %2472 = vmatpush1.msra.mxu0 0.0
      %2473 = vmatprep.subr.mxu0 0.0
      %2474 = vmatpush1.msra.mxu0 0.0
      %2475 = vmatprep.subr.mxu0 0.0
      %2476 = vmatpush1.msra.mxu0 0.0
      %2477 = vmatprep.subr.mxu0 0.0
      %2478 = vmatpush1.msra.mxu0 0.0
      %2479 = vmatprep.subr.mxu0 0.0
      %2480 = vmatpush1.msra.mxu0 0.0
      %2481 = vmatprep.subr.mxu0 0.0
      %2482 = vmatpush1.msra.mxu0 0.0
      %2483 = vmatprep.subr.mxu0 0.0
      %2484 = vmatpush1.msra.mxu0 %v1844
      %2485 = vmatprep.subr.mxu0 0.0
      %2486 = vmatpush1.msra.mxu0 %v1841
      %2487 = vmatprep.subr.mxu0 0.0
      %2488 = vmatpush1.msra.mxu0 %v1838
      %2489 = vmatprep.subr.mxu0 0.0
      %2490 = vmatpush1.msra.mxu0 %v1835
      %2491 = vmatprep.subr.mxu0 0.0
      %2492 = vmatpush1.msra.mxu0 %v1832
      %2493 = vmatprep.subr.mxu0 0.0
      %2494 = vmatpush1.msra.mxu0 %v1829
      %2495 = vmatprep.subr.mxu0 0.0
      %2496 = vmatpush1.msra.mxu0 %v1826
      %2497 = vmatprep.subr.mxu0 0.0
      %2498 = vmatpush1.msra.mxu0 %v1823
      %2499 = vmatprep.subr.mxu0 0.0
      %2500 = vmatpush2.msra.mxu0 0.0
      %2501 = vmatprep.subr.mxu0 0.0
      %2502 = vmatpush2.msra.mxu0 0.0
      %2503 = vmatprep.subr.mxu0 0.0
      %2504 = vmatpush2.msra.mxu0 0.0
      %2505 = vmatprep.subr.mxu0 0.0
      %2506 = vmatpush2.msra.mxu0 0.0
      %2507 = vmatprep.subr.mxu0 0.0
      %2508 = vmatpush2.msra.mxu0 0.0
      %2509 = vmatprep.subr.mxu0 0.0
      %2510 = vmatpush2.msra.mxu0 0.0
      %2511 = vmatprep.subr.mxu0 0.0
      %2512 = vmatpush2.msra.mxu0 0.0
      %2513 = vmatprep.subr.mxu0 0.0
      %2514 = vmatpush2.msra.mxu0 0.0
      %2515 = vmatprep.subr.mxu0 0.0
      %2516 = vmatpush2.msra.mxu0 0.0
      %2517 = vmatprep.subr.mxu0 0.0
      %2518 = vmatpush2.msra.mxu0 0.0
      %2519 = vmatprep.subr.mxu0 0.0
      %2520 = vmatpush2.msra.mxu0 0.0
      %2521 = vmatprep.subr.mxu0 0.0
      %2522 = vmatpush2.msra.mxu0 0.0
      %2523 = vmatprep.subr.mxu0 0.0
      %2524 = vmatpush2.msra.mxu0 0.0
      %2525 = vmatprep.subr.mxu0 0.0
      %2526 = vmatpush2.msra.mxu0 0.0
      %2527 = vmatprep.subr.mxu0 0.0
      %2528 = vmatpush2.msra.mxu0 0.0
      %2529 = vmatprep.subr.mxu0 0.0
      %2530 = vmatpush2.msra.mxu0 0.0
      %2531 = vmatprep.mubr.f32.mxu0 0.0
      %2532 = vmatmul.mubr.f32.gmra.mxu0 %v1895
      %v2533 = vpop.f32.mrf.mxu0
      %v2534 = vadd.f32 %v2429, %v2533
      %v2535 = vpop.f32.mrf.mxu0
      %2536 = vmatprep.mubr.f32.mxu0 0.0
      %2537 = vmatmul.mubr.f32.gmra.mxu0 %v1898
      %v2538 = vpop.f32.mrf.mxu0
      %v2539 = vadd.f32 %v2434, %v2538
      %v2540 = vpop.f32.mrf.mxu0
      %2541 = vmatprep.mubr.f32.mxu0 0.0
      %2542 = vmatmul.mubr.f32.gmra.mxu0 %v1901
      %v2543 = vpop.f32.mrf.mxu0
      %v2544 = vadd.f32 %v2439, %v2543
      %v2545 = vpop.f32.mrf.mxu0
      %2546 = vmatprep.mubr.f32.mxu0 0.0
      %2547 = vmatmul.mubr.f32.gmra.mxu0 %v1904
      %v2548 = vpop.f32.mrf.mxu0
      %v2549 = vadd.f32 %v2444, %v2548
      %v2550 = vpop.f32.mrf.mxu0
      %2551 = vmatprep.mubr.f32.mxu0 0.0
      %2552 = vmatmul.mubr.f32.gmra.mxu0 %v1907
      %v2553 = vpop.f32.mrf.mxu0
      %v2554 = vadd.f32 %v2449, %v2553
      %v2555 = vpop.f32.mrf.mxu0
      %2556 = vmatprep.mubr.f32.mxu0 0.0
      %2557 = vmatmul.mubr.f32.gmra.mxu0 %v1910
      %v2558 = vpop.f32.mrf.mxu0
      %v2559 = vadd.f32 %v2454, %v2558
      %v2560 = vpop.f32.mrf.mxu0
      %2561 = vmatprep.mubr.f32.mxu0 0.0
      %2562 = vmatmul.mubr.f32.gmra.mxu0 %v1913
      %v2563 = vpop.f32.mrf.mxu0
      %v2564 = vadd.f32 %v2459, %v2563
      %v2565 = vpop.f32.mrf.mxu0
      %2566 = vmatprep.mubr.f32.mxu0 0.0
      %2567 = vmatmul.mubr.f32.gmra.mxu0 %v1916
      %v2568 = vpop.f32.mrf.mxu0
      %v2569 = vadd.f32 %v2464, %v2568
      %v2570 = vpop.f32.mrf.mxu0
      %2571 = vdwg.mxu0
      %v2572 = vmax.f32 %v2211, 0.0
      %v2573 = vmax.f32 %v2213, 0.0
      %v2574 = vmax.f32 %v2534, 0.0
      %v2575 = vmax.f32 %v2217, 0.0
      %v2576 = vmax.f32 %v2219, 0.0
      %v2577 = vmax.f32 %v2539, 0.0
      %v2578 = vmax.f32 %v2223, 0.0
      %v2579 = vmax.f32 %v2225, 0.0
      %v2580 = vmax.f32 %v2544, 0.0
      %v2581 = vmax.f32 %v2229, 0.0
      %v2582 = vmax.f32 %v2231, 0.0
      %v2583 = vmax.f32 %v2549, 0.0
      %v2584 = vmax.f32 %v2235, 0.0
      %v2585 = vmax.f32 %v2237, 0.0
      %v2586 = vmax.f32 %v2554, 0.0
      %v2587 = vmax.f32 %v2241, 0.0
      %v2588 = vmax.f32 %v2243, 0.0
      %v2589 = vmax.f32 %v2559, 0.0
      %v2590 = vmax.f32 %v2247, 0.0
      %v2591 = vmax.f32 %v2249, 0.0
      %v2592 = vmax.f32 %v2564, 0.0
      %v2593 = vmax.f32 %v2253, 0.0
      %v2594 = vmax.f32 %v2255, 0.0
      %v2595 = vmax.f32 %v2569, 0.0
      %v2596 = vld [vmem:[%s1] sm:$0x7]
      %v2598 = vlaneseq
      %v2599 = vshrl.u32 %v2598, 7
      %v2600 = vsub.s32 0, %v2599
      %v2601 = vrot.slane %v2596, %v2600
      %v2602 = vlaneseq
      %v2603 = vshrl.u32 %v2602, 7
      %v2604 = vsub.s32 1, %v2603
      %v2605 = vrot.slane %v2596, %v2604
      %v2606 = vlaneseq
      %v2607 = vshrl.u32 %v2606, 7
      %v2608 = vsub.s32 2, %v2607
      %v2609 = vrot.slane %v2596, %v2608
      %v2613 = vmul.f32 %v2572, %v2601
      %v2614 = vmul.f32 %v2573, %v2605
      %v2615 = vmul.f32 %v2574, %v2609
      %v2616 = vmul.f32 %v2575, %v2601
      %v2617 = vmul.f32 %v2576, %v2605
      %v2618 = vmul.f32 %v2577, %v2609
      %v2619 = vmul.f32 %v2578, %v2601
      %v2620 = vmul.f32 %v2579, %v2605
      %v2621 = vmul.f32 %v2580, %v2609
      %v2622 = vmul.f32 %v2581, %v2601
      %v2623 = vmul.f32 %v2582, %v2605
      %v2624 = vmul.f32 %v2583, %v2609
      %v2625 = vmul.f32 %v2584, %v2601
      %v2626 = vmul.f32 %v2585, %v2605
      %v2627 = vmul.f32 %v2586, %v2609
      %v2628 = vmul.f32 %v2587, %v2601
      %v2629 = vmul.f32 %v2588, %v2605
      %v2630 = vmul.f32 %v2589, %v2609
      %v2631 = vmul.f32 %v2590, %v2601
      %v2632 = vmul.f32 %v2591, %v2605
      %v2633 = vmul.f32 %v2592, %v2609
      %v2634 = vmul.f32 %v2593, %v2601
      %v2635 = vmul.f32 %v2594, %v2605
      %v2636 = vmul.f32 %v2595, %v2609
      %vm2637 = vcmask 154624
      %2638 = vst.msk [vmem:[#allocation3] sm:$0xff] %vm2637, 0.0
      %2639 = vst.msk [vmem:[#allocation3 + $0x18] sm:$0xff] %vm2637, 0.0
      %2640 = vst.msk [vmem:[#allocation3 + $0x30] sm:$0xff] %vm2637, 0.0
      %2641 = vst.msk [vmem:[#allocation3 + $0x48] sm:$0xff] %vm2637, 0.0
      %2642 = vst.msk [vmem:[#allocation3 + $0x60] sm:$0xff] %vm2637, 0.0
      %2643 = vst.msk [vmem:[#allocation3 + $0x78] sm:$0xff] %vm2637, 0.0
      %2644 = vst.msk [vmem:[#allocation3 + $0x90] sm:$0xff] %vm2637, 0.0
      %2645 = vst.msk [vmem:[#allocation3 + $0xa8] sm:$0xff] %vm2637, 0.0
      %vm2646 = vcmask 868024
      %2647 = vst.msk [vmem:[#allocation3 + $0x10] sm:$0xff] %vm2646, 0.0
      %2648 = vst.msk [vmem:[#allocation3 + $0x28] sm:$0xff] %vm2646, 0.0
      %2649 = vst.msk [vmem:[#allocation3 + $0x40] sm:$0xff] %vm2646, 0.0
      %2650 = vst.msk [vmem:[#allocation3 + $0x58] sm:$0xff] %vm2646, 0.0
      %2651 = vst.msk [vmem:[#allocation3 + $0x70] sm:$0xff] %vm2646, 0.0
      %2652 = vst.msk [vmem:[#allocation3 + $0x88] sm:$0xff] %vm2646, 0.0
      %2653 = vst.msk [vmem:[#allocation3 + $0xa0] sm:$0xff] %vm2646, 0.0
      %2654 = vst.msk [vmem:[#allocation3 + $0xb8] sm:$0xff] %vm2646, 0.0
      %2679 = vrot.lane.b32.xlu0 %v2613, 19
      %v2680 = vpop.permute.xlu0 %2679
      %2681 = vrot.lane.b32.xlu0 %v2614, 19
      %v2682 = vpop.permute.xlu0 %2681
      %2683 = vrot.lane.b32.xlu0 %v2615, 19
      %v2684 = vpop.permute.xlu0 %2683
      %2685 = vrot.lane.b32.xlu0 %v2616, 19
      %v2686 = vpop.permute.xlu0 %2685
      %2687 = vrot.lane.b32.xlu0 %v2617, 19
      %v2688 = vpop.permute.xlu0 %2687
      %2689 = vrot.lane.b32.xlu0 %v2618, 19
      %v2690 = vpop.permute.xlu0 %2689
      %2691 = vrot.lane.b32.xlu0 %v2619, 19
      %v2692 = vpop.permute.xlu0 %2691
      %2693 = vrot.lane.b32.xlu0 %v2620, 19
      %v2694 = vpop.permute.xlu0 %2693
      %2695 = vrot.lane.b32.xlu0 %v2621, 19
      %v2696 = vpop.permute.xlu0 %2695
      %2697 = vrot.lane.b32.xlu0 %v2622, 19
      %v2698 = vpop.permute.xlu0 %2697
      %2699 = vrot.lane.b32.xlu0 %v2623, 19
      %v2700 = vpop.permute.xlu0 %2699
      %2701 = vrot.lane.b32.xlu0 %v2624, 19
      %v2702 = vpop.permute.xlu0 %2701
      %2703 = vrot.lane.b32.xlu0 %v2625, 19
      %v2704 = vpop.permute.xlu0 %2703
      %2705 = vrot.lane.b32.xlu0 %v2626, 19
      %v2706 = vpop.permute.xlu0 %2705
      %2707 = vrot.lane.b32.xlu0 %v2627, 19
      %v2708 = vpop.permute.xlu0 %2707
      %2709 = vrot.lane.b32.xlu0 %v2628, 19
      %v2710 = vpop.permute.xlu0 %2709
      %2711 = vrot.lane.b32.xlu0 %v2629, 19
      %v2712 = vpop.permute.xlu0 %2711
      %2713 = vrot.lane.b32.xlu0 %v2630, 19
      %v2714 = vpop.permute.xlu0 %2713
      %2715 = vrot.lane.b32.xlu0 %v2631, 19
      %v2716 = vpop.permute.xlu0 %2715
      %2717 = vrot.lane.b32.xlu0 %v2632, 19
      %v2718 = vpop.permute.xlu0 %2717
      %2719 = vrot.lane.b32.xlu0 %v2633, 19
      %v2720 = vpop.permute.xlu0 %2719
      %2721 = vrot.lane.b32.xlu0 %v2634, 19
      %v2722 = vpop.permute.xlu0 %2721
      %2723 = vrot.lane.b32.xlu0 %v2635, 19
      %v2724 = vpop.permute.xlu0 %2723
      %2725 = vrot.lane.b32.xlu0 %v2636, 19
      %v2726 = vpop.permute.xlu0 %2725
      %v2727 = vsel %vm2637, %v2680, %v2682
      %v2728 = vsel %vm2637, %v2682, %v2684
      %v2729 = vsel %vm2637, %v2686, %v2688
      %v2730 = vsel %vm2637, %v2688, %v2690
      %v2731 = vsel %vm2637, %v2692, %v2694
      %v2732 = vsel %vm2637, %v2694, %v2696
      %v2733 = vsel %vm2637, %v2698, %v2700
      %v2734 = vsel %vm2637, %v2700, %v2702
      %v2735 = vsel %vm2637, %v2704, %v2706
      %v2736 = vsel %vm2637, %v2706, %v2708
      %v2737 = vsel %vm2637, %v2710, %v2712
      %v2738 = vsel %vm2637, %v2712, %v2714
      %v2739 = vsel %vm2637, %v2716, %v2718
      %v2740 = vsel %vm2637, %v2718, %v2720
      %v2741 = vsel %vm2637, %v2722, %v2724
      %v2742 = vsel %vm2637, %v2724, %v2726
      %vm2767 = vcmask 1047704
      %2768 = vst.msk [vmem:[#allocation3] sm:$0xff] %vm2767, %v2680
      %2769 = vst [vmem:[#allocation3 + $0x8] sm:$0xff] %v2727
      %vm2770 = vcmask 711680
      %2771 = vst.msk [vmem:[#allocation3 + $0x10] sm:$0xff] %vm2770, %v2728
      %2772 = vst.msk [vmem:[#allocation3 + $0x18] sm:$0xff] %vm2767, %v2686
      %2773 = vst [vmem:[#allocation3 + $0x20] sm:$0xff] %v2729
      %2774 = vst.msk [vmem:[#allocation3 + $0x28] sm:$0xff] %vm2770, %v2730
      %2775 = vst.msk [vmem:[#allocation3 + $0x30] sm:$0xff] %vm2767, %v2692
      %2776 = vst [vmem:[#allocation3 + $0x38] sm:$0xff] %v2731
      %2777 = vst.msk [vmem:[#allocation3 + $0x40] sm:$0xff] %vm2770, %v2732
      %2778 = vst.msk [vmem:[#allocation3 + $0x48] sm:$0xff] %vm2767, %v2698
      %2779 = vst [vmem:[#allocation3 + $0x50] sm:$0xff] %v2733
      %2780 = vst.msk [vmem:[#allocation3 + $0x58] sm:$0xff] %vm2770, %v2734
      %2781 = vst.msk [vmem:[#allocation3 + $0x60] sm:$0xff] %vm2767, %v2704
      %2782 = vst [vmem:[#allocation3 + $0x68] sm:$0xff] %v2735
      %2783 = vst.msk [vmem:[#allocation3 + $0x70] sm:$0xff] %vm2770, %v2736
      %2784 = vst.msk [vmem:[#allocation3 + $0x78] sm:$0xff] %vm2767, %v2710
      %2785 = vst [vmem:[#allocation3 + $0x80] sm:$0xff] %v2737
      %2786 = vst.msk [vmem:[#allocation3 + $0x88] sm:$0xff] %vm2770, %v2738
      %2787 = vst.msk [vmem:[#allocation3 + $0x90] sm:$0xff] %vm2767, %v2716
      %2788 = vst [vmem:[#allocation3 + $0x98] sm:$0xff] %v2739
      %2789 = vst.msk [vmem:[#allocation3 + $0xa0] sm:$0xff] %vm2770, %v2740
      %2790 = vst.msk [vmem:[#allocation3 + $0xa8] sm:$0xff] %vm2767, %v2722
      %2791 = vst [vmem:[#allocation3 + $0xb0] sm:$0xff] %v2741
      %2792 = vst.msk [vmem:[#allocation3 + $0xb8] sm:$0xff] %vm2770, %v2742
      %v2793 = vld [vmem:[#allocation3] sm:$0xff]
      %v2794 = vld [vmem:[#allocation3 + $0x8] sm:$0xff]
      %v2795 = vld [vmem:[#allocation3 + $0x10] sm:$0xff]
      %v2796 = vld [vmem:[#allocation3 + $0x18] sm:$0xff]
      %v2797 = vld [vmem:[#allocation3 + $0x20] sm:$0xff]
      %v2798 = vld [vmem:[#allocation3 + $0x28] sm:$0xff]
      %v2799 = vld [vmem:[#allocation3 + $0x30] sm:$0xff]
      %v2800 = vld [vmem:[#allocation3 + $0x38] sm:$0xff]
      %v2801 = vld [vmem:[#allocation3 + $0x40] sm:$0xff]
      %v2802 = vld [vmem:[#allocation3 + $0x48] sm:$0xff]
      %v2803 = vld [vmem:[#allocation3 + $0x50] sm:$0xff]
      %v2804 = vld [vmem:[#allocation3 + $0x58] sm:$0xff]
      %v2805 = vld [vmem:[#allocation3 + $0x60] sm:$0xff]
      %v2806 = vld [vmem:[#allocation3 + $0x68] sm:$0xff]
      %v2807 = vld [vmem:[#allocation3 + $0x70] sm:$0xff]
      %v2808 = vld [vmem:[#allocation3 + $0x78] sm:$0xff]
      %v2809 = vld [vmem:[#allocation3 + $0x80] sm:$0xff]
      %v2810 = vld [vmem:[#allocation3 + $0x88] sm:$0xff]
      %v2811 = vld [vmem:[#allocation3 + $0x90] sm:$0xff]
      %v2812 = vld [vmem:[#allocation3 + $0x98] sm:$0xff]
      %v2813 = vld [vmem:[#allocation3 + $0xa0] sm:$0xff]
      %v2814 = vld [vmem:[#allocation3 + $0xa8] sm:$0xff]
      %v2815 = vld [vmem:[#allocation3 + $0xb0] sm:$0xff]
      %v2816 = vld [vmem:[#allocation3 + $0xb8] sm:$0xff]
      %2817 = vst [vmem:[#allocation2] sm:$0xff] %v2793
      %2818 = vst [vmem:[#allocation2 + $0x8] sm:$0xff] %v2794
      %2819 = vst.msk [vmem:[#allocation2 + $0x10] sm:$0xff] %vm278, %v2795
      %2820 = vst [vmem:[#allocation2 + $0x18] sm:$0xff] %v2796
      %2821 = vst [vmem:[#allocation2 + $0x20] sm:$0xff] %v2797
      %2822 = vst.msk [vmem:[#allocation2 + $0x28] sm:$0xff] %vm278, %v2798
      %2823 = vst [vmem:[#allocation2 + $0x30] sm:$0xff] %v2799
      %2824 = vst [vmem:[#allocation2 + $0x38] sm:$0xff] %v2800
      %2825 = vst.msk [vmem:[#allocation2 + $0x40] sm:$0xff] %vm278, %v2801
      %2826 = vst [vmem:[#allocation2 + $0x48] sm:$0xff] %v2802
      %2827 = vst [vmem:[#allocation2 + $0x50] sm:$0xff] %v2803
      %2828 = vst.msk [vmem:[#allocation2 + $0x58] sm:$0xff] %vm278, %v2804
      %2829 = vst [vmem:[#allocation2 + $0x60] sm:$0xff] %v2805
      %2830 = vst [vmem:[#allocation2 + $0x68] sm:$0xff] %v2806
      %2831 = vst.msk [vmem:[#allocation2 + $0x70] sm:$0xff] %vm278, %v2807
      %2832 = vst [vmem:[#allocation2 + $0x78] sm:$0xff] %v2808
      %2833 = vst [vmem:[#allocation2 + $0x80] sm:$0xff] %v2809
      %2834 = vst.msk [vmem:[#allocation2 + $0x88] sm:$0xff] %vm278, %v2810
      %2835 = vst [vmem:[#allocation2 + $0x90] sm:$0xff] %v2811
      %2836 = vst [vmem:[#allocation2 + $0x98] sm:$0xff] %v2812
      %2837 = vst.msk [vmem:[#allocation2 + $0xa0] sm:$0xff] %vm278, %v2813
      %2838 = vst [vmem:[#allocation2 + $0xa8] sm:$0xff] %v2814
      %2839 = vst [vmem:[#allocation2 + $0xb0] sm:$0xff] %v2815
      %2840 = vst.msk [vmem:[#allocation2 + $0xb8] sm:$0xff] %vm278, %v2816
      %v2841 = vld [vmem:[#allocation3] sm:$0xff]
      %v2842 = vld [vmem:[#allocation3 + $0x8] sm:$0xff]
      %v2843 = vld [vmem:[#allocation3 + $0x10] sm:$0xff]
      %v2844 = vld [vmem:[#allocation3 + $0x18] sm:$0xff]
      %v2845 = vld [vmem:[#allocation3 + $0x20] sm:$0xff]
      %v2846 = vld [vmem:[#allocation3 + $0x28] sm:$0xff]
      %v2847 = vld [vmem:[#allocation3 + $0x30] sm:$0xff]
      %v2848 = vld [vmem:[#allocation3 + $0x38] sm:$0xff]
      %v2849 = vld [vmem:[#allocation3 + $0x40] sm:$0xff]
      %v2850 = vld [vmem:[#allocation3 + $0x48] sm:$0xff]
      %v2851 = vld [vmem:[#allocation3 + $0x50] sm:$0xff]
      %v2852 = vld [vmem:[#allocation3 + $0x58] sm:$0xff]
      %v2853 = vld [vmem:[#allocation3 + $0x60] sm:$0xff]
      %v2854 = vld [vmem:[#allocation3 + $0x68] sm:$0xff]
      %v2855 = vld [vmem:[#allocation3 + $0x70] sm:$0xff]
      %v2856 = vld [vmem:[#allocation3 + $0x78] sm:$0xff]
      %v2857 = vld [vmem:[#allocation3 + $0x80] sm:$0xff]
      %v2858 = vld [vmem:[#allocation3 + $0x88] sm:$0xff]
      %v2859 = vld [vmem:[#allocation3 + $0x90] sm:$0xff]
      %v2860 = vld [vmem:[#allocation3 + $0x98] sm:$0xff]
      %v2861 = vld [vmem:[#allocation3 + $0xa0] sm:$0xff]
      %v2862 = vld [vmem:[#allocation3 + $0xa8] sm:$0xff]
      %v2863 = vld [vmem:[#allocation3 + $0xb0] sm:$0xff]
      %v2864 = vld [vmem:[#allocation3 + $0xb8] sm:$0xff]
      %2889 = vrot.lane.b32.xlu0 %v2841, 127
      %v2890 = vpop.permute.xlu0 %2889
      %2891 = vrot.lane.b32.xlu0 %v2842, 127
      %v2892 = vpop.permute.xlu0 %2891
      %2893 = vrot.lane.b32.xlu0 %v2843, 127
      %v2894 = vpop.permute.xlu0 %2893
      %2895 = vrot.lane.b32.xlu0 %v2844, 127
      %v2896 = vpop.permute.xlu0 %2895
      %2897 = vrot.lane.b32.xlu0 %v2845, 127
      %v2898 = vpop.permute.xlu0 %2897
      %2899 = vrot.lane.b32.xlu0 %v2846, 127
      %v2900 = vpop.permute.xlu0 %2899
      %2901 = vrot.lane.b32.xlu0 %v2847, 127
      %v2902 = vpop.permute.xlu0 %2901
      %2903 = vrot.lane.b32.xlu0 %v2848, 127
      %v2904 = vpop.permute.xlu0 %2903
      %2905 = vrot.lane.b32.xlu0 %v2849, 127
      %v2906 = vpop.permute.xlu0 %2905
      %2907 = vrot.lane.b32.xlu0 %v2850, 127
      %v2908 = vpop.permute.xlu0 %2907
      %2909 = vrot.lane.b32.xlu0 %v2851, 127
      %v2910 = vpop.permute.xlu0 %2909
      %2911 = vrot.lane.b32.xlu0 %v2852, 127
      %v2912 = vpop.permute.xlu0 %2911
      %2913 = vrot.lane.b32.xlu0 %v2853, 127
      %v2914 = vpop.permute.xlu0 %2913
      %2915 = vrot.lane.b32.xlu0 %v2854, 127
      %v2916 = vpop.permute.xlu0 %2915
      %2917 = vrot.lane.b32.xlu0 %v2855, 127
      %v2918 = vpop.permute.xlu0 %2917
      %2919 = vrot.lane.b32.xlu0 %v2856, 127
      %v2920 = vpop.permute.xlu0 %2919
      %2921 = vrot.lane.b32.xlu0 %v2857, 127
      %v2922 = vpop.permute.xlu0 %2921
      %2923 = vrot.lane.b32.xlu0 %v2858, 127
      %v2924 = vpop.permute.xlu0 %2923
      %2925 = vrot.lane.b32.xlu0 %v2859, 127
      %v2926 = vpop.permute.xlu0 %2925
      %2927 = vrot.lane.b32.xlu0 %v2860, 127
      %v2928 = vpop.permute.xlu0 %2927
      %2929 = vrot.lane.b32.xlu0 %v2861, 127
      %v2930 = vpop.permute.xlu0 %2929
      %2931 = vrot.lane.b32.xlu0 %v2862, 127
      %v2932 = vpop.permute.xlu0 %2931
      %2933 = vrot.lane.b32.xlu0 %v2863, 127
      %v2934 = vpop.permute.xlu0 %2933
      %2935 = vrot.lane.b32.xlu0 %v2864, 127
      %v2936 = vpop.permute.xlu0 %2935
      %v2937 = vsel %vm397, %v2890, %v2892
      %v2938 = vsel %vm397, %v2892, %v2894
      %v2939 = vsel %vm397, %v2896, %v2898
      %v2940 = vsel %vm397, %v2898, %v2900
      %v2941 = vsel %vm397, %v2902, %v2904
      %v2942 = vsel %vm397, %v2904, %v2906
      %v2943 = vsel %vm397, %v2908, %v2910
      %v2944 = vsel %vm397, %v2910, %v2912
      %v2945 = vsel %vm397, %v2914, %v2916
      %v2946 = vsel %vm397, %v2916, %v2918
      %v2947 = vsel %vm397, %v2920, %v2922
      %v2948 = vsel %vm397, %v2922, %v2924
      %v2949 = vsel %vm397, %v2926, %v2928
      %v2950 = vsel %vm397, %v2928, %v2930
      %v2951 = vsel %vm397, %v2932, %v2934
      %v2952 = vsel %vm397, %v2934, %v2936
      %2977 = vst [vmem:[#allocation2 + $0xc0] sm:$0xff] %v2937
      %2978 = vst [vmem:[#allocation2 + $0xc8] sm:$0xff] %v2938
      %2979 = vst.msk [vmem:[#allocation2 + $0xd0] sm:$0xff] %vm278, %v2894
      %2980 = vst [vmem:[#allocation2 + $0xd8] sm:$0xff] %v2939
      %2981 = vst [vmem:[#allocation2 + $0xe0] sm:$0xff] %v2940
      %2982 = vst.msk [vmem:[#allocation2 + $0xe8] sm:$0xff] %vm278, %v2900
      %2983 = vst [vmem:[#allocation2 + $0xf0] sm:$0xff] %v2941
      %2984 = vst [vmem:[#allocation2 + $0xf8] sm:$0xff] %v2942
      %2985 = vst.msk [vmem:[#allocation2 + $0x100] sm:$0xff] %vm278, %v2906
      %2986 = vst [vmem:[#allocation2 + $0x108] sm:$0xff] %v2943
      %2987 = vst [vmem:[#allocation2 + $0x110] sm:$0xff] %v2944
      %2988 = vst.msk [vmem:[#allocation2 + $0x118] sm:$0xff] %vm278, %v2912
      %2989 = vst [vmem:[#allocation2 + $0x120] sm:$0xff] %v2945
      %2990 = vst [vmem:[#allocation2 + $0x128] sm:$0xff] %v2946
      %2991 = vst.msk [vmem:[#allocation2 + $0x130] sm:$0xff] %vm278, %v2918
      %2992 = vst [vmem:[#allocation2 + $0x138] sm:$0xff] %v2947
      %2993 = vst [vmem:[#allocation2 + $0x140] sm:$0xff] %v2948
      %2994 = vst.msk [vmem:[#allocation2 + $0x148] sm:$0xff] %vm278, %v2924
      %2995 = vst [vmem:[#allocation2 + $0x150] sm:$0xff] %v2949
      %2996 = vst [vmem:[#allocation2 + $0x158] sm:$0xff] %v2950
      %2997 = vst.msk [vmem:[#allocation2 + $0x160] sm:$0xff] %vm278, %v2930
      %2998 = vst [vmem:[#allocation2 + $0x168] sm:$0xff] %v2951
      %2999 = vst [vmem:[#allocation2 + $0x170] sm:$0xff] %v2952
      %3000 = vst.msk [vmem:[#allocation2 + $0x178] sm:$0xff] %vm278, %v2936
      %v3001 = vld [vmem:[#allocation3] sm:$0xff]
      %v3002 = vld [vmem:[#allocation3 + $0x8] sm:$0xff]
      %v3003 = vld [vmem:[#allocation3 + $0x10] sm:$0xff]
      %v3004 = vld [vmem:[#allocation3 + $0x18] sm:$0xff]
      %v3005 = vld [vmem:[#allocation3 + $0x20] sm:$0xff]
      %v3006 = vld [vmem:[#allocation3 + $0x28] sm:$0xff]
      %v3007 = vld [vmem:[#allocation3 + $0x30] sm:$0xff]
      %v3008 = vld [vmem:[#allocation3 + $0x38] sm:$0xff]
      %v3009 = vld [vmem:[#allocation3 + $0x40] sm:$0xff]
      %v3010 = vld [vmem:[#allocation3 + $0x48] sm:$0xff]
      %v3011 = vld [vmem:[#allocation3 + $0x50] sm:$0xff]
      %v3012 = vld [vmem:[#allocation3 + $0x58] sm:$0xff]
      %v3013 = vld [vmem:[#allocation3 + $0x60] sm:$0xff]
      %v3014 = vld [vmem:[#allocation3 + $0x68] sm:$0xff]
      %v3015 = vld [vmem:[#allocation3 + $0x70] sm:$0xff]
      %v3016 = vld [vmem:[#allocation3 + $0x78] sm:$0xff]
      %v3017 = vld [vmem:[#allocation3 + $0x80] sm:$0xff]
      %v3018 = vld [vmem:[#allocation3 + $0x88] sm:$0xff]
      %v3019 = vld [vmem:[#allocation3 + $0x90] sm:$0xff]
      %v3020 = vld [vmem:[#allocation3 + $0x98] sm:$0xff]
      %v3021 = vld [vmem:[#allocation3 + $0xa0] sm:$0xff]
      %v3022 = vld [vmem:[#allocation3 + $0xa8] sm:$0xff]
      %v3023 = vld [vmem:[#allocation3 + $0xb0] sm:$0xff]
      %v3024 = vld [vmem:[#allocation3 + $0xb8] sm:$0xff]
      %3049 = vrot.lane.b32.xlu0 %v3001, 126
      %v3050 = vpop.permute.xlu0 %3049
      %3051 = vrot.lane.b32.xlu0 %v3002, 126
      %v3052 = vpop.permute.xlu0 %3051
      %3053 = vrot.lane.b32.xlu0 %v3003, 126
      %v3054 = vpop.permute.xlu0 %3053
      %3055 = vrot.lane.b32.xlu0 %v3004, 126
      %v3056 = vpop.permute.xlu0 %3055
      %3057 = vrot.lane.b32.xlu0 %v3005, 126
      %v3058 = vpop.permute.xlu0 %3057
      %3059 = vrot.lane.b32.xlu0 %v3006, 126
      %v3060 = vpop.permute.xlu0 %3059
      %3061 = vrot.lane.b32.xlu0 %v3007, 126
      %v3062 = vpop.permute.xlu0 %3061
      %3063 = vrot.lane.b32.xlu0 %v3008, 126
      %v3064 = vpop.permute.xlu0 %3063
      %3065 = vrot.lane.b32.xlu0 %v3009, 126
      %v3066 = vpop.permute.xlu0 %3065
      %3067 = vrot.lane.b32.xlu0 %v3010, 126
      %v3068 = vpop.permute.xlu0 %3067
      %3069 = vrot.lane.b32.xlu0 %v3011, 126
      %v3070 = vpop.permute.xlu0 %3069
      %3071 = vrot.lane.b32.xlu0 %v3012, 126
      %v3072 = vpop.permute.xlu0 %3071
      %3073 = vrot.lane.b32.xlu0 %v3013, 126
      %v3074 = vpop.permute.xlu0 %3073
      %3075 = vrot.lane.b32.xlu0 %v3014, 126
      %v3076 = vpop.permute.xlu0 %3075
      %3077 = vrot.lane.b32.xlu0 %v3015, 126
      %v3078 = vpop.permute.xlu0 %3077
      %3079 = vrot.lane.b32.xlu0 %v3016, 126
      %v3080 = vpop.permute.xlu0 %3079
      %3081 = vrot.lane.b32.xlu0 %v3017, 126
      %v3082 = vpop.permute.xlu0 %3081
      %3083 = vrot.lane.b32.xlu0 %v3018, 126
      %v3084 = vpop.permute.xlu0 %3083
      %3085 = vrot.lane.b32.xlu0 %v3019, 126
      %v3086 = vpop.permute.xlu0 %3085
      %3087 = vrot.lane.b32.xlu0 %v3020, 126
      %v3088 = vpop.permute.xlu0 %3087
      %3089 = vrot.lane.b32.xlu0 %v3021, 126
      %v3090 = vpop.permute.xlu0 %3089
      %3091 = vrot.lane.b32.xlu0 %v3022, 126
      %v3092 = vpop.permute.xlu0 %3091
      %3093 = vrot.lane.b32.xlu0 %v3023, 126
      %v3094 = vpop.permute.xlu0 %3093
      %3095 = vrot.lane.b32.xlu0 %v3024, 126
      %v3096 = vpop.permute.xlu0 %3095
      %v3097 = vsel %vm558, %v3050, %v3052
      %v3098 = vsel %vm558, %v3052, %v3054
      %v3099 = vsel %vm558, %v3056, %v3058
      %v3100 = vsel %vm558, %v3058, %v3060
      %v3101 = vsel %vm558, %v3062, %v3064
      %v3102 = vsel %vm558, %v3064, %v3066
      %v3103 = vsel %vm558, %v3068, %v3070
      %v3104 = vsel %vm558, %v3070, %v3072
      %v3105 = vsel %vm558, %v3074, %v3076
      %v3106 = vsel %vm558, %v3076, %v3078
      %v3107 = vsel %vm558, %v3080, %v3082
      %v3108 = vsel %vm558, %v3082, %v3084
      %v3109 = vsel %vm558, %v3086, %v3088
      %v3110 = vsel %vm558, %v3088, %v3090
      %v3111 = vsel %vm558, %v3092, %v3094
      %v3112 = vsel %vm558, %v3094, %v3096
      %3137 = vst [vmem:[#allocation2 + $0x180] sm:$0xff] %v3097
      %3138 = vst [vmem:[#allocation2 + $0x188] sm:$0xff] %v3098
      %3139 = vst.msk [vmem:[#allocation2 + $0x190] sm:$0xff] %vm278, %v3054
      %3140 = vst [vmem:[#allocation2 + $0x198] sm:$0xff] %v3099
      %3141 = vst [vmem:[#allocation2 + $0x1a0] sm:$0xff] %v3100
      %3142 = vst.msk [vmem:[#allocation2 + $0x1a8] sm:$0xff] %vm278, %v3060
      %3143 = vst [vmem:[#allocation2 + $0x1b0] sm:$0xff] %v3101
      %3144 = vst [vmem:[#allocation2 + $0x1b8] sm:$0xff] %v3102
      %3145 = vst.msk [vmem:[#allocation2 + $0x1c0] sm:$0xff] %vm278, %v3066
      %3146 = vst [vmem:[#allocation2 + $0x1c8] sm:$0xff] %v3103
      %3147 = vst [vmem:[#allocation2 + $0x1d0] sm:$0xff] %v3104
      %3148 = vst.msk [vmem:[#allocation2 + $0x1d8] sm:$0xff] %vm278, %v3072
      %3149 = vst [vmem:[#allocation2 + $0x1e0] sm:$0xff] %v3105
      %3150 = vst [vmem:[#allocation2 + $0x1e8] sm:$0xff] %v3106
      %3151 = vst.msk [vmem:[#allocation2 + $0x1f0] sm:$0xff] %vm278, %v3078
      %3152 = vst [vmem:[#allocation2 + $0x1f8] sm:$0xff] %v3107
      %3153 = vst [vmem:[#allocation2 + $0x200] sm:$0xff] %v3108
      %3154 = vst.msk [vmem:[#allocation2 + $0x208] sm:$0xff] %vm278, %v3084
      %3155 = vst [vmem:[#allocation2 + $0x210] sm:$0xff] %v3109
      %3156 = vst [vmem:[#allocation2 + $0x218] sm:$0xff] %v3110
      %3157 = vst.msk [vmem:[#allocation2 + $0x220] sm:$0xff] %vm278, %v3090
      %3158 = vst [vmem:[#allocation2 + $0x228] sm:$0xff] %v3111
      %3159 = vst [vmem:[#allocation2 + $0x230] sm:$0xff] %v3112
      %3160 = vst.msk [vmem:[#allocation2 + $0x238] sm:$0xff] %vm278, %v3096
      %v3161 = vld [vmem:[#allocation3] sm:$0xff]
      %v3162 = vld [vmem:[#allocation3 + $0x8] sm:$0xff]
      %v3163 = vld [vmem:[#allocation3 + $0x10] sm:$0xff]
      %v3164 = vld [vmem:[#allocation3 + $0x18] sm:$0xff]
      %v3165 = vld [vmem:[#allocation3 + $0x20] sm:$0xff]
      %v3166 = vld [vmem:[#allocation3 + $0x28] sm:$0xff]
      %v3167 = vld [vmem:[#allocation3 + $0x30] sm:$0xff]
      %v3168 = vld [vmem:[#allocation3 + $0x38] sm:$0xff]
      %v3169 = vld [vmem:[#allocation3 + $0x40] sm:$0xff]
      %v3170 = vld [vmem:[#allocation3 + $0x48] sm:$0xff]
      %v3171 = vld [vmem:[#allocation3 + $0x50] sm:$0xff]
      %v3172 = vld [vmem:[#allocation3 + $0x58] sm:$0xff]
      %v3173 = vld [vmem:[#allocation3 + $0x60] sm:$0xff]
      %v3174 = vld [vmem:[#allocation3 + $0x68] sm:$0xff]
      %v3175 = vld [vmem:[#allocation3 + $0x70] sm:$0xff]
      %v3176 = vld [vmem:[#allocation3 + $0x78] sm:$0xff]
      %v3177 = vld [vmem:[#allocation3 + $0x80] sm:$0xff]
      %v3178 = vld [vmem:[#allocation3 + $0x88] sm:$0xff]
      %v3179 = vld [vmem:[#allocation3 + $0x90] sm:$0xff]
      %v3180 = vld [vmem:[#allocation3 + $0x98] sm:$0xff]
      %v3181 = vld [vmem:[#allocation3 + $0xa0] sm:$0xff]
      %v3182 = vld [vmem:[#allocation3 + $0xa8] sm:$0xff]
      %v3183 = vld [vmem:[#allocation3 + $0xb0] sm:$0xff]
      %v3184 = vld [vmem:[#allocation3 + $0xb8] sm:$0xff]
      %3209 = vrot.lane.b32.xlu0 %v3161, 110
      %v3210 = vpop.permute.xlu0 %3209
      %3211 = vrot.lane.b32.xlu0 %v3162, 110
      %v3212 = vpop.permute.xlu0 %3211
      %3213 = vrot.lane.b32.xlu0 %v3163, 110
      %v3214 = vpop.permute.xlu0 %3213
      %3215 = vrot.lane.b32.xlu0 %v3164, 110
      %v3216 = vpop.permute.xlu0 %3215
      %3217 = vrot.lane.b32.xlu0 %v3165, 110
      %v3218 = vpop.permute.xlu0 %3217
      %3219 = vrot.lane.b32.xlu0 %v3166, 110
      %v3220 = vpop.permute.xlu0 %3219
      %3221 = vrot.lane.b32.xlu0 %v3167, 110
      %v3222 = vpop.permute.xlu0 %3221
      %3223 = vrot.lane.b32.xlu0 %v3168, 110
      %v3224 = vpop.permute.xlu0 %3223
      %3225 = vrot.lane.b32.xlu0 %v3169, 110
      %v3226 = vpop.permute.xlu0 %3225
      %3227 = vrot.lane.b32.xlu0 %v3170, 110
      %v3228 = vpop.permute.xlu0 %3227
      %3229 = vrot.lane.b32.xlu0 %v3171, 110
      %v3230 = vpop.permute.xlu0 %3229
      %3231 = vrot.lane.b32.xlu0 %v3172, 110
      %v3232 = vpop.permute.xlu0 %3231
      %3233 = vrot.lane.b32.xlu0 %v3173, 110
      %v3234 = vpop.permute.xlu0 %3233
      %3235 = vrot.lane.b32.xlu0 %v3174, 110
      %v3236 = vpop.permute.xlu0 %3235
      %3237 = vrot.lane.b32.xlu0 %v3175, 110
      %v3238 = vpop.permute.xlu0 %3237
      %3239 = vrot.lane.b32.xlu0 %v3176, 110
      %v3240 = vpop.permute.xlu0 %3239
      %3241 = vrot.lane.b32.xlu0 %v3177, 110
      %v3242 = vpop.permute.xlu0 %3241
      %3243 = vrot.lane.b32.xlu0 %v3178, 110
      %v3244 = vpop.permute.xlu0 %3243
      %3245 = vrot.lane.b32.xlu0 %v3179, 110
      %v3246 = vpop.permute.xlu0 %3245
      %3247 = vrot.lane.b32.xlu0 %v3180, 110
      %v3248 = vpop.permute.xlu0 %3247
      %3249 = vrot.lane.b32.xlu0 %v3181, 110
      %v3250 = vpop.permute.xlu0 %3249
      %3251 = vrot.lane.b32.xlu0 %v3182, 110
      %v3252 = vpop.permute.xlu0 %3251
      %3253 = vrot.lane.b32.xlu0 %v3183, 110
      %v3254 = vpop.permute.xlu0 %3253
      %3255 = vrot.lane.b32.xlu0 %v3184, 110
      %v3256 = vpop.permute.xlu0 %3255
      %v3257 = vsel %vm719, %v3210, %v3212
      %v3258 = vsel %vm719, %v3212, %v3214
      %v3259 = vsel %vm719, %v3216, %v3218
      %v3260 = vsel %vm719, %v3218, %v3220
      %v3261 = vsel %vm719, %v3222, %v3224
      %v3262 = vsel %vm719, %v3224, %v3226
      %v3263 = vsel %vm719, %v3228, %v3230
      %v3264 = vsel %vm719, %v3230, %v3232
      %v3265 = vsel %vm719, %v3234, %v3236
      %v3266 = vsel %vm719, %v3236, %v3238
      %v3267 = vsel %vm719, %v3240, %v3242
      %v3268 = vsel %vm719, %v3242, %v3244
      %v3269 = vsel %vm719, %v3246, %v3248
      %v3270 = vsel %vm719, %v3248, %v3250
      %v3271 = vsel %vm719, %v3252, %v3254
      %v3272 = vsel %vm719, %v3254, %v3256
      %3297 = vst [vmem:[#allocation2 + $0x240] sm:$0xff] %v3257
      %3298 = vst [vmem:[#allocation2 + $0x248] sm:$0xff] %v3258
      %3299 = vst.msk [vmem:[#allocation2 + $0x250] sm:$0xff] %vm278, %v3214
      %3300 = vst [vmem:[#allocation2 + $0x258] sm:$0xff] %v3259
      %3301 = vst [vmem:[#allocation2 + $0x260] sm:$0xff] %v3260
      %3302 = vst.msk [vmem:[#allocation2 + $0x268] sm:$0xff] %vm278, %v3220
      %3303 = vst [vmem:[#allocation2 + $0x270] sm:$0xff] %v3261
      %3304 = vst [vmem:[#allocation2 + $0x278] sm:$0xff] %v3262
      %3305 = vst.msk [vmem:[#allocation2 + $0x280] sm:$0xff] %vm278, %v3226
      %3306 = vst [vmem:[#allocation2 + $0x288] sm:$0xff] %v3263
      %3307 = vst [vmem:[#allocation2 + $0x290] sm:$0xff] %v3264
      %3308 = vst.msk [vmem:[#allocation2 + $0x298] sm:$0xff] %vm278, %v3232
      %3309 = vst [vmem:[#allocation2 + $0x2a0] sm:$0xff] %v3265
      %3310 = vst [vmem:[#allocation2 + $0x2a8] sm:$0xff] %v3266
      %3311 = vst.msk [vmem:[#allocation2 + $0x2b0] sm:$0xff] %vm278, %v3238
      %3312 = vst [vmem:[#allocation2 + $0x2b8] sm:$0xff] %v3267
      %3313 = vst [vmem:[#allocation2 + $0x2c0] sm:$0xff] %v3268
      %3314 = vst.msk [vmem:[#allocation2 + $0x2c8] sm:$0xff] %vm278, %v3244
      %3315 = vst [vmem:[#allocation2 + $0x2d0] sm:$0xff] %v3269
      %3316 = vst [vmem:[#allocation2 + $0x2d8] sm:$0xff] %v3270
      %3317 = vst.msk [vmem:[#allocation2 + $0x2e0] sm:$0xff] %vm278, %v3250
      %3318 = vst [vmem:[#allocation2 + $0x2e8] sm:$0xff] %v3271
      %3319 = vst [vmem:[#allocation2 + $0x2f0] sm:$0xff] %v3272
      %3320 = vst.msk [vmem:[#allocation2 + $0x2f8] sm:$0xff] %vm278, %v3256
      %v3321 = vld [vmem:[#allocation3] sm:$0xff]
      %v3322 = vld [vmem:[#allocation3 + $0x8] sm:$0xff]
      %v3323 = vld [vmem:[#allocation3 + $0x10] sm:$0xff]
      %v3324 = vld [vmem:[#allocation3 + $0x18] sm:$0xff]
      %v3325 = vld [vmem:[#allocation3 + $0x20] sm:$0xff]
      %v3326 = vld [vmem:[#allocation3 + $0x28] sm:$0xff]
      %v3327 = vld [vmem:[#allocation3 + $0x30] sm:$0xff]
      %v3328 = vld [vmem:[#allocation3 + $0x38] sm:$0xff]
      %v3329 = vld [vmem:[#allocation3 + $0x40] sm:$0xff]
      %v3330 = vld [vmem:[#allocation3 + $0x48] sm:$0xff]
      %v3331 = vld [vmem:[#allocation3 + $0x50] sm:$0xff]
      %v3332 = vld [vmem:[#allocation3 + $0x58] sm:$0xff]
      %v3333 = vld [vmem:[#allocation3 + $0x60] sm:$0xff]
      %v3334 = vld [vmem:[#allocation3 + $0x68] sm:$0xff]
      %v3335 = vld [vmem:[#allocation3 + $0x70] sm:$0xff]
      %v3336 = vld [vmem:[#allocation3 + $0x78] sm:$0xff]
      %v3337 = vld [vmem:[#allocation3 + $0x80] sm:$0xff]
      %v3338 = vld [vmem:[#allocation3 + $0x88] sm:$0xff]
      %v3339 = vld [vmem:[#allocation3 + $0x90] sm:$0xff]
      %v3340 = vld [vmem:[#allocation3 + $0x98] sm:$0xff]
      %v3341 = vld [vmem:[#allocation3 + $0xa0] sm:$0xff]
      %v3342 = vld [vmem:[#allocation3 + $0xa8] sm:$0xff]
      %v3343 = vld [vmem:[#allocation3 + $0xb0] sm:$0xff]
      %v3344 = vld [vmem:[#allocation3 + $0xb8] sm:$0xff]
      %3369 = vrot.lane.b32.xlu0 %v3321, 109
      %v3370 = vpop.permute.xlu0 %3369
      %3371 = vrot.lane.b32.xlu0 %v3322, 109
      %v3372 = vpop.permute.xlu0 %3371
      %3373 = vrot.lane.b32.xlu0 %v3323, 109
      %v3374 = vpop.permute.xlu0 %3373
      %3375 = vrot.lane.b32.xlu0 %v3324, 109
      %v3376 = vpop.permute.xlu0 %3375
      %3377 = vrot.lane.b32.xlu0 %v3325, 109
      %v3378 = vpop.permute.xlu0 %3377
      %3379 = vrot.lane.b32.xlu0 %v3326, 109
      %v3380 = vpop.permute.xlu0 %3379
      %3381 = vrot.lane.b32.xlu0 %v3327, 109
      %v3382 = vpop.permute.xlu0 %3381
      %3383 = vrot.lane.b32.xlu0 %v3328, 109
      %v3384 = vpop.permute.xlu0 %3383
      %3385 = vrot.lane.b32.xlu0 %v3329, 109
      %v3386 = vpop.permute.xlu0 %3385
      %3387 = vrot.lane.b32.xlu0 %v3330, 109
      %v3388 = vpop.permute.xlu0 %3387
      %3389 = vrot.lane.b32.xlu0 %v3331, 109
      %v3390 = vpop.permute.xlu0 %3389
      %3391 = vrot.lane.b32.xlu0 %v3332, 109
      %v3392 = vpop.permute.xlu0 %3391
      %3393 = vrot.lane.b32.xlu0 %v3333, 109
      %v3394 = vpop.permute.xlu0 %3393
      %3395 = vrot.lane.b32.xlu0 %v3334, 109
      %v3396 = vpop.permute.xlu0 %3395
      %3397 = vrot.lane.b32.xlu0 %v3335, 109
      %v3398 = vpop.permute.xlu0 %3397
      %3399 = vrot.lane.b32.xlu0 %v3336, 109
      %v3400 = vpop.permute.xlu0 %3399
      %3401 = vrot.lane.b32.xlu0 %v3337, 109
      %v3402 = vpop.permute.xlu0 %3401
      %3403 = vrot.lane.b32.xlu0 %v3338, 109
      %v3404 = vpop.permute.xlu0 %3403
      %3405 = vrot.lane.b32.xlu0 %v3339, 109
      %v3406 = vpop.permute.xlu0 %3405
      %3407 = vrot.lane.b32.xlu0 %v3340, 109
      %v3408 = vpop.permute.xlu0 %3407
      %3409 = vrot.lane.b32.xlu0 %v3341, 109
      %v3410 = vpop.permute.xlu0 %3409
      %3411 = vrot.lane.b32.xlu0 %v3342, 109
      %v3412 = vpop.permute.xlu0 %3411
      %3413 = vrot.lane.b32.xlu0 %v3343, 109
      %v3414 = vpop.permute.xlu0 %3413
      %3415 = vrot.lane.b32.xlu0 %v3344, 109
      %v3416 = vpop.permute.xlu0 %3415
      %v3417 = vsel %vm880, %v3370, %v3372
      %v3418 = vsel %vm880, %v3372, %v3374
      %v3419 = vsel %vm880, %v3376, %v3378
      %v3420 = vsel %vm880, %v3378, %v3380
      %v3421 = vsel %vm880, %v3382, %v3384
      %v3422 = vsel %vm880, %v3384, %v3386
      %v3423 = vsel %vm880, %v3388, %v3390
      %v3424 = vsel %vm880, %v3390, %v3392
      %v3425 = vsel %vm880, %v3394, %v3396
      %v3426 = vsel %vm880, %v3396, %v3398
      %v3427 = vsel %vm880, %v3400, %v3402
      %v3428 = vsel %vm880, %v3402, %v3404
      %v3429 = vsel %vm880, %v3406, %v3408
      %v3430 = vsel %vm880, %v3408, %v3410
      %v3431 = vsel %vm880, %v3412, %v3414
      %v3432 = vsel %vm880, %v3414, %v3416
      %3457 = vst [vmem:[#allocation2 + $0x300] sm:$0xff] %v3417
      %3458 = vst [vmem:[#allocation2 + $0x308] sm:$0xff] %v3418
      %3459 = vst.msk [vmem:[#allocation2 + $0x310] sm:$0xff] %vm278, %v3374
      %3460 = vst [vmem:[#allocation2 + $0x318] sm:$0xff] %v3419
      %3461 = vst [vmem:[#allocation2 + $0x320] sm:$0xff] %v3420
      %3462 = vst.msk [vmem:[#allocation2 + $0x328] sm:$0xff] %vm278, %v3380
      %3463 = vst [vmem:[#allocation2 + $0x330] sm:$0xff] %v3421
      %3464 = vst [vmem:[#allocation2 + $0x338] sm:$0xff] %v3422
      %3465 = vst.msk [vmem:[#allocation2 + $0x340] sm:$0xff] %vm278, %v3386
      %3466 = vst [vmem:[#allocation2 + $0x348] sm:$0xff] %v3423
      %3467 = vst [vmem:[#allocation2 + $0x350] sm:$0xff] %v3424
      %3468 = vst.msk [vmem:[#allocation2 + $0x358] sm:$0xff] %vm278, %v3392
      %3469 = vst [vmem:[#allocation2 + $0x360] sm:$0xff] %v3425
      %3470 = vst [vmem:[#allocation2 + $0x368] sm:$0xff] %v3426
      %3471 = vst.msk [vmem:[#allocation2 + $0x370] sm:$0xff] %vm278, %v3398
      %3472 = vst [vmem:[#allocation2 + $0x378] sm:$0xff] %v3427
      %3473 = vst [vmem:[#allocation2 + $0x380] sm:$0xff] %v3428
      %3474 = vst.msk [vmem:[#allocation2 + $0x388] sm:$0xff] %vm278, %v3404
      %3475 = vst [vmem:[#allocation2 + $0x390] sm:$0xff] %v3429
      %3476 = vst [vmem:[#allocation2 + $0x398] sm:$0xff] %v3430
      %3477 = vst.msk [vmem:[#allocation2 + $0x3a0] sm:$0xff] %vm278, %v3410
      %3478 = vst [vmem:[#allocation2 + $0x3a8] sm:$0xff] %v3431
      %3479 = vst [vmem:[#allocation2 + $0x3b0] sm:$0xff] %v3432
      %3480 = vst.msk [vmem:[#allocation2 + $0x3b8] sm:$0xff] %vm278, %v3416
      %v3481 = vld [vmem:[#allocation3] sm:$0xff]
      %v3482 = vld [vmem:[#allocation3 + $0x8] sm:$0xff]
      %v3483 = vld [vmem:[#allocation3 + $0x10] sm:$0xff]
      %v3484 = vld [vmem:[#allocation3 + $0x18] sm:$0xff]
      %v3485 = vld [vmem:[#allocation3 + $0x20] sm:$0xff]
      %v3486 = vld [vmem:[#allocation3 + $0x28] sm:$0xff]
      %v3487 = vld [vmem:[#allocation3 + $0x30] sm:$0xff]
      %v3488 = vld [vmem:[#allocation3 + $0x38] sm:$0xff]
      %v3489 = vld [vmem:[#allocation3 + $0x40] sm:$0xff]
      %v3490 = vld [vmem:[#allocation3 + $0x48] sm:$0xff]
      %v3491 = vld [vmem:[#allocation3 + $0x50] sm:$0xff]
      %v3492 = vld [vmem:[#allocation3 + $0x58] sm:$0xff]
      %v3493 = vld [vmem:[#allocation3 + $0x60] sm:$0xff]
      %v3494 = vld [vmem:[#allocation3 + $0x68] sm:$0xff]
      %v3495 = vld [vmem:[#allocation3 + $0x70] sm:$0xff]
      %v3496 = vld [vmem:[#allocation3 + $0x78] sm:$0xff]
      %v3497 = vld [vmem:[#allocation3 + $0x80] sm:$0xff]
      %v3498 = vld [vmem:[#allocation3 + $0x88] sm:$0xff]
      %v3499 = vld [vmem:[#allocation3 + $0x90] sm:$0xff]
      %v3500 = vld [vmem:[#allocation3 + $0x98] sm:$0xff]
      %v3501 = vld [vmem:[#allocation3 + $0xa0] sm:$0xff]
      %v3502 = vld [vmem:[#allocation3 + $0xa8] sm:$0xff]
      %v3503 = vld [vmem:[#allocation3 + $0xb0] sm:$0xff]
      %v3504 = vld [vmem:[#allocation3 + $0xb8] sm:$0xff]
      %3529 = vrot.lane.b32.xlu0 %v3481, 108
      %v3530 = vpop.permute.xlu0 %3529
      %3531 = vrot.lane.b32.xlu0 %v3482, 108
      %v3532 = vpop.permute.xlu0 %3531
      %3533 = vrot.lane.b32.xlu0 %v3483, 108
      %v3534 = vpop.permute.xlu0 %3533
      %3535 = vrot.lane.b32.xlu0 %v3484, 108
      %v3536 = vpop.permute.xlu0 %3535
      %3537 = vrot.lane.b32.xlu0 %v3485, 108
      %v3538 = vpop.permute.xlu0 %3537
      %3539 = vrot.lane.b32.xlu0 %v3486, 108
      %v3540 = vpop.permute.xlu0 %3539
      %3541 = vrot.lane.b32.xlu0 %v3487, 108
      %v3542 = vpop.permute.xlu0 %3541
      %3543 = vrot.lane.b32.xlu0 %v3488, 108
      %v3544 = vpop.permute.xlu0 %3543
      %3545 = vrot.lane.b32.xlu0 %v3489, 108
      %v3546 = vpop.permute.xlu0 %3545
      %3547 = vrot.lane.b32.xlu0 %v3490, 108
      %v3548 = vpop.permute.xlu0 %3547
      %3549 = vrot.lane.b32.xlu0 %v3491, 108
      %v3550 = vpop.permute.xlu0 %3549
      %3551 = vrot.lane.b32.xlu0 %v3492, 108
      %v3552 = vpop.permute.xlu0 %3551
      %3553 = vrot.lane.b32.xlu0 %v3493, 108
      %v3554 = vpop.permute.xlu0 %3553
      %3555 = vrot.lane.b32.xlu0 %v3494, 108
      %v3556 = vpop.permute.xlu0 %3555
      %3557 = vrot.lane.b32.xlu0 %v3495, 108
      %v3558 = vpop.permute.xlu0 %3557
      %3559 = vrot.lane.b32.xlu0 %v3496, 108
      %v3560 = vpop.permute.xlu0 %3559
      %3561 = vrot.lane.b32.xlu0 %v3497, 108
      %v3562 = vpop.permute.xlu0 %3561
      %3563 = vrot.lane.b32.xlu0 %v3498, 108
      %v3564 = vpop.permute.xlu0 %3563
      %3565 = vrot.lane.b32.xlu0 %v3499, 108
      %v3566 = vpop.permute.xlu0 %3565
      %3567 = vrot.lane.b32.xlu0 %v3500, 108
      %v3568 = vpop.permute.xlu0 %3567
      %3569 = vrot.lane.b32.xlu0 %v3501, 108
      %v3570 = vpop.permute.xlu0 %3569
      %3571 = vrot.lane.b32.xlu0 %v3502, 108
      %v3572 = vpop.permute.xlu0 %3571
      %3573 = vrot.lane.b32.xlu0 %v3503, 108
      %v3574 = vpop.permute.xlu0 %3573
      %3575 = vrot.lane.b32.xlu0 %v3504, 108
      %v3576 = vpop.permute.xlu0 %3575
      %v3577 = vsel %vm1041, %v3530, %v3532
      %v3578 = vsel %vm1041, %v3532, %v3534
      %v3579 = vsel %vm1041, %v3536, %v3538
      %v3580 = vsel %vm1041, %v3538, %v3540
      %v3581 = vsel %vm1041, %v3542, %v3544
      %v3582 = vsel %vm1041, %v3544, %v3546
      %v3583 = vsel %vm1041, %v3548, %v3550
      %v3584 = vsel %vm1041, %v3550, %v3552
      %v3585 = vsel %vm1041, %v3554, %v3556
      %v3586 = vsel %vm1041, %v3556, %v3558
      %v3587 = vsel %vm1041, %v3560, %v3562
      %v3588 = vsel %vm1041, %v3562, %v3564
      %v3589 = vsel %vm1041, %v3566, %v3568
      %v3590 = vsel %vm1041, %v3568, %v3570
      %v3591 = vsel %vm1041, %v3572, %v3574
      %v3592 = vsel %vm1041, %v3574, %v3576
      %3617 = vst [vmem:[#allocation2 + $0x3c0] sm:$0xff] %v3577
      %3618 = vst [vmem:[#allocation2 + $0x3c8] sm:$0xff] %v3578
      %3619 = vst.msk [vmem:[#allocation2 + $0x3d0] sm:$0xff] %vm278, %v3534
      %3620 = vst [vmem:[#allocation2 + $0x3d8] sm:$0xff] %v3579
      %3621 = vst [vmem:[#allocation2 + $0x3e0] sm:$0xff] %v3580
      %3622 = vst.msk [vmem:[#allocation2 + $0x3e8] sm:$0xff] %vm278, %v3540
      %3623 = vst [vmem:[#allocation2 + $0x3f0] sm:$0xff] %v3581
      %3624 = vst [vmem:[#allocation2 + $0x3f8] sm:$0xff] %v3582
      %3625 = vst.msk [vmem:[#allocation2 + $0x400] sm:$0xff] %vm278, %v3546
      %3626 = vst [vmem:[#allocation2 + $0x408] sm:$0xff] %v3583
      %3627 = vst [vmem:[#allocation2 + $0x410] sm:$0xff] %v3584
      %3628 = vst.msk [vmem:[#allocation2 + $0x418] sm:$0xff] %vm278, %v3552
      %3629 = vst [vmem:[#allocation2 + $0x420] sm:$0xff] %v3585
      %3630 = vst [vmem:[#allocation2 + $0x428] sm:$0xff] %v3586
      %3631 = vst.msk [vmem:[#allocation2 + $0x430] sm:$0xff] %vm278, %v3558
      %3632 = vst [vmem:[#allocation2 + $0x438] sm:$0xff] %v3587
      %3633 = vst [vmem:[#allocation2 + $0x440] sm:$0xff] %v3588
      %3634 = vst.msk [vmem:[#allocation2 + $0x448] sm:$0xff] %vm278, %v3564
      %3635 = vst [vmem:[#allocation2 + $0x450] sm:$0xff] %v3589
      %3636 = vst [vmem:[#allocation2 + $0x458] sm:$0xff] %v3590
      %3637 = vst.msk [vmem:[#allocation2 + $0x460] sm:$0xff] %vm278, %v3570
      %3638 = vst [vmem:[#allocation2 + $0x468] sm:$0xff] %v3591
      %3639 = vst [vmem:[#allocation2 + $0x470] sm:$0xff] %v3592
      %3640 = vst.msk [vmem:[#allocation2 + $0x478] sm:$0xff] %vm278, %v3576
      %v3641 = vld [vmem:[#allocation3] sm:$0xff]
      %v3642 = vld [vmem:[#allocation3 + $0x8] sm:$0xff]
      %v3643 = vld [vmem:[#allocation3 + $0x10] sm:$0xff]
      %v3644 = vld [vmem:[#allocation3 + $0x18] sm:$0xff]
      %v3645 = vld [vmem:[#allocation3 + $0x20] sm:$0xff]
      %v3646 = vld [vmem:[#allocation3 + $0x28] sm:$0xff]
      %v3647 = vld [vmem:[#allocation3 + $0x30] sm:$0xff]
      %v3648 = vld [vmem:[#allocation3 + $0x38] sm:$0xff]
      %v3649 = vld [vmem:[#allocation3 + $0x40] sm:$0xff]
      %v3650 = vld [vmem:[#allocation3 + $0x48] sm:$0xff]
      %v3651 = vld [vmem:[#allocation3 + $0x50] sm:$0xff]
      %v3652 = vld [vmem:[#allocation3 + $0x58] sm:$0xff]
      %v3653 = vld [vmem:[#allocation3 + $0x60] sm:$0xff]
      %v3654 = vld [vmem:[#allocation3 + $0x68] sm:$0xff]
      %v3655 = vld [vmem:[#allocation3 + $0x70] sm:$0xff]
      %v3656 = vld [vmem:[#allocation3 + $0x78] sm:$0xff]
      %v3657 = vld [vmem:[#allocation3 + $0x80] sm:$0xff]
      %v3658 = vld [vmem:[#allocation3 + $0x88] sm:$0xff]
      %v3659 = vld [vmem:[#allocation3 + $0x90] sm:$0xff]
      %v3660 = vld [vmem:[#allocation3 + $0x98] sm:$0xff]
      %v3661 = vld [vmem:[#allocation3 + $0xa0] sm:$0xff]
      %v3662 = vld [vmem:[#allocation3 + $0xa8] sm:$0xff]
      %v3663 = vld [vmem:[#allocation3 + $0xb0] sm:$0xff]
      %v3664 = vld [vmem:[#allocation3 + $0xb8] sm:$0xff]
      %3689 = vrot.lane.b32.xlu0 %v3641, 92
      %v3690 = vpop.permute.xlu0 %3689
      %3691 = vrot.lane.b32.xlu0 %v3642, 92
      %v3692 = vpop.permute.xlu0 %3691
      %3693 = vrot.lane.b32.xlu0 %v3643, 92
      %v3694 = vpop.permute.xlu0 %3693
      %3695 = vrot.lane.b32.xlu0 %v3644, 92
      %v3696 = vpop.permute.xlu0 %3695
      %3697 = vrot.lane.b32.xlu0 %v3645, 92
      %v3698 = vpop.permute.xlu0 %3697
      %3699 = vrot.lane.b32.xlu0 %v3646, 92
      %v3700 = vpop.permute.xlu0 %3699
      %3701 = vrot.lane.b32.xlu0 %v3647, 92
      %v3702 = vpop.permute.xlu0 %3701
      %3703 = vrot.lane.b32.xlu0 %v3648, 92
      %v3704 = vpop.permute.xlu0 %3703
      %3705 = vrot.lane.b32.xlu0 %v3649, 92
      %v3706 = vpop.permute.xlu0 %3705
      %3707 = vrot.lane.b32.xlu0 %v3650, 92
      %v3708 = vpop.permute.xlu0 %3707
      %3709 = vrot.lane.b32.xlu0 %v3651, 92
      %v3710 = vpop.permute.xlu0 %3709
      %3711 = vrot.lane.b32.xlu0 %v3652, 92
      %v3712 = vpop.permute.xlu0 %3711
      %3713 = vrot.lane.b32.xlu0 %v3653, 92
      %v3714 = vpop.permute.xlu0 %3713
      %3715 = vrot.lane.b32.xlu0 %v3654, 92
      %v3716 = vpop.permute.xlu0 %3715
      %3717 = vrot.lane.b32.xlu0 %v3655, 92
      %v3718 = vpop.permute.xlu0 %3717
      %3719 = vrot.lane.b32.xlu0 %v3656, 92
      %v3720 = vpop.permute.xlu0 %3719
      %3721 = vrot.lane.b32.xlu0 %v3657, 92
      %v3722 = vpop.permute.xlu0 %3721
      %3723 = vrot.lane.b32.xlu0 %v3658, 92
      %v3724 = vpop.permute.xlu0 %3723
      %3725 = vrot.lane.b32.xlu0 %v3659, 92
      %v3726 = vpop.permute.xlu0 %3725
      %3727 = vrot.lane.b32.xlu0 %v3660, 92
      %v3728 = vpop.permute.xlu0 %3727
      %3729 = vrot.lane.b32.xlu0 %v3661, 92
      %v3730 = vpop.permute.xlu0 %3729
      %3731 = vrot.lane.b32.xlu0 %v3662, 92
      %v3732 = vpop.permute.xlu0 %3731
      %3733 = vrot.lane.b32.xlu0 %v3663, 92
      %v3734 = vpop.permute.xlu0 %3733
      %3735 = vrot.lane.b32.xlu0 %v3664, 92
      %v3736 = vpop.permute.xlu0 %3735
      %v3737 = vsel %vm1202, %v3690, %v3692
      %v3738 = vsel %vm1202, %v3692, %v3694
      %v3739 = vsel %vm1202, %v3696, %v3698
      %v3740 = vsel %vm1202, %v3698, %v3700
      %v3741 = vsel %vm1202, %v3702, %v3704
      %v3742 = vsel %vm1202, %v3704, %v3706
      %v3743 = vsel %vm1202, %v3708, %v3710
      %v3744 = vsel %vm1202, %v3710, %v3712
      %v3745 = vsel %vm1202, %v3714, %v3716
      %v3746 = vsel %vm1202, %v3716, %v3718
      %v3747 = vsel %vm1202, %v3720, %v3722
      %v3748 = vsel %vm1202, %v3722, %v3724
      %v3749 = vsel %vm1202, %v3726, %v3728
      %v3750 = vsel %vm1202, %v3728, %v3730
      %v3751 = vsel %vm1202, %v3732, %v3734
      %v3752 = vsel %vm1202, %v3734, %v3736
      %3777 = vst [vmem:[#allocation2 + $0x480] sm:$0xff] %v3737
      %3778 = vst [vmem:[#allocation2 + $0x488] sm:$0xff] %v3738
      %3779 = vst.msk [vmem:[#allocation2 + $0x490] sm:$0xff] %vm278, %v3694
      %3780 = vst [vmem:[#allocation2 + $0x498] sm:$0xff] %v3739
      %3781 = vst [vmem:[#allocation2 + $0x4a0] sm:$0xff] %v3740
      %3782 = vst.msk [vmem:[#allocation2 + $0x4a8] sm:$0xff] %vm278, %v3700
      %3783 = vst [vmem:[#allocation2 + $0x4b0] sm:$0xff] %v3741
      %3784 = vst [vmem:[#allocation2 + $0x4b8] sm:$0xff] %v3742
      %3785 = vst.msk [vmem:[#allocation2 + $0x4c0] sm:$0xff] %vm278, %v3706
      %3786 = vst [vmem:[#allocation2 + $0x4c8] sm:$0xff] %v3743
      %3787 = vst [vmem:[#allocation2 + $0x4d0] sm:$0xff] %v3744
      %3788 = vst.msk [vmem:[#allocation2 + $0x4d8] sm:$0xff] %vm278, %v3712
      %3789 = vst [vmem:[#allocation2 + $0x4e0] sm:$0xff] %v3745
      %3790 = vst [vmem:[#allocation2 + $0x4e8] sm:$0xff] %v3746
      %3791 = vst.msk [vmem:[#allocation2 + $0x4f0] sm:$0xff] %vm278, %v3718
      %3792 = vst [vmem:[#allocation2 + $0x4f8] sm:$0xff] %v3747
      %3793 = vst [vmem:[#allocation2 + $0x500] sm:$0xff] %v3748
      %3794 = vst.msk [vmem:[#allocation2 + $0x508] sm:$0xff] %vm278, %v3724
      %3795 = vst [vmem:[#allocation2 + $0x510] sm:$0xff] %v3749
      %3796 = vst [vmem:[#allocation2 + $0x518] sm:$0xff] %v3750
      %3797 = vst.msk [vmem:[#allocation2 + $0x520] sm:$0xff] %vm278, %v3730
      %3798 = vst [vmem:[#allocation2 + $0x528] sm:$0xff] %v3751
      %3799 = vst [vmem:[#allocation2 + $0x530] sm:$0xff] %v3752
      %3800 = vst.msk [vmem:[#allocation2 + $0x538] sm:$0xff] %vm278, %v3736
      %v3801 = vld [vmem:[#allocation3] sm:$0xff]
      %v3802 = vld [vmem:[#allocation3 + $0x8] sm:$0xff]
      %v3803 = vld [vmem:[#allocation3 + $0x10] sm:$0xff]
      %v3804 = vld [vmem:[#allocation3 + $0x18] sm:$0xff]
      %v3805 = vld [vmem:[#allocation3 + $0x20] sm:$0xff]
      %v3806 = vld [vmem:[#allocation3 + $0x28] sm:$0xff]
      %v3807 = vld [vmem:[#allocation3 + $0x30] sm:$0xff]
      %v3808 = vld [vmem:[#allocation3 + $0x38] sm:$0xff]
      %v3809 = vld [vmem:[#allocation3 + $0x40] sm:$0xff]
      %v3810 = vld [vmem:[#allocation3 + $0x48] sm:$0xff]
      %v3811 = vld [vmem:[#allocation3 + $0x50] sm:$0xff]
      %v3812 = vld [vmem:[#allocation3 + $0x58] sm:$0xff]
      %v3813 = vld [vmem:[#allocation3 + $0x60] sm:$0xff]
      %v3814 = vld [vmem:[#allocation3 + $0x68] sm:$0xff]
      %v3815 = vld [vmem:[#allocation3 + $0x70] sm:$0xff]
      %v3816 = vld [vmem:[#allocation3 + $0x78] sm:$0xff]
      %v3817 = vld [vmem:[#allocation3 + $0x80] sm:$0xff]
      %v3818 = vld [vmem:[#allocation3 + $0x88] sm:$0xff]
      %v3819 = vld [vmem:[#allocation3 + $0x90] sm:$0xff]
      %v3820 = vld [vmem:[#allocation3 + $0x98] sm:$0xff]
      %v3821 = vld [vmem:[#allocation3 + $0xa0] sm:$0xff]
      %v3822 = vld [vmem:[#allocation3 + $0xa8] sm:$0xff]
      %v3823 = vld [vmem:[#allocation3 + $0xb0] sm:$0xff]
      %v3824 = vld [vmem:[#allocation3 + $0xb8] sm:$0xff]
      %3849 = vrot.lane.b32.xlu0 %v3801, 91
      %v3850 = vpop.permute.xlu0 %3849
      %3851 = vrot.lane.b32.xlu0 %v3802, 91
      %v3852 = vpop.permute.xlu0 %3851
      %3853 = vrot.lane.b32.xlu0 %v3803, 91
      %v3854 = vpop.permute.xlu0 %3853
      %3855 = vrot.lane.b32.xlu0 %v3804, 91
      %v3856 = vpop.permute.xlu0 %3855
      %3857 = vrot.lane.b32.xlu0 %v3805, 91
      %v3858 = vpop.permute.xlu0 %3857
      %3859 = vrot.lane.b32.xlu0 %v3806, 91
      %v3860 = vpop.permute.xlu0 %3859
      %3861 = vrot.lane.b32.xlu0 %v3807, 91
      %v3862 = vpop.permute.xlu0 %3861
      %3863 = vrot.lane.b32.xlu0 %v3808, 91
      %v3864 = vpop.permute.xlu0 %3863
      %3865 = vrot.lane.b32.xlu0 %v3809, 91
      %v3866 = vpop.permute.xlu0 %3865
      %3867 = vrot.lane.b32.xlu0 %v3810, 91
      %v3868 = vpop.permute.xlu0 %3867
      %3869 = vrot.lane.b32.xlu0 %v3811, 91
      %v3870 = vpop.permute.xlu0 %3869
      %3871 = vrot.lane.b32.xlu0 %v3812, 91
      %v3872 = vpop.permute.xlu0 %3871
      %3873 = vrot.lane.b32.xlu0 %v3813, 91
      %v3874 = vpop.permute.xlu0 %3873
      %3875 = vrot.lane.b32.xlu0 %v3814, 91
      %v3876 = vpop.permute.xlu0 %3875
      %3877 = vrot.lane.b32.xlu0 %v3815, 91
      %v3878 = vpop.permute.xlu0 %3877
      %3879 = vrot.lane.b32.xlu0 %v3816, 91
      %v3880 = vpop.permute.xlu0 %3879
      %3881 = vrot.lane.b32.xlu0 %v3817, 91
      %v3882 = vpop.permute.xlu0 %3881
      %3883 = vrot.lane.b32.xlu0 %v3818, 91
      %v3884 = vpop.permute.xlu0 %3883
      %3885 = vrot.lane.b32.xlu0 %v3819, 91
      %v3886 = vpop.permute.xlu0 %3885
      %3887 = vrot.lane.b32.xlu0 %v3820, 91
      %v3888 = vpop.permute.xlu0 %3887
      %3889 = vrot.lane.b32.xlu0 %v3821, 91
      %v3890 = vpop.permute.xlu0 %3889
      %3891 = vrot.lane.b32.xlu0 %v3822, 91
      %v3892 = vpop.permute.xlu0 %3891
      %3893 = vrot.lane.b32.xlu0 %v3823, 91
      %v3894 = vpop.permute.xlu0 %3893
      %3895 = vrot.lane.b32.xlu0 %v3824, 91
      %v3896 = vpop.permute.xlu0 %3895
      %v3897 = vsel %vm1363, %v3850, %v3852
      %v3898 = vsel %vm1363, %v3852, %v3854
      %v3899 = vsel %vm1363, %v3856, %v3858
      %v3900 = vsel %vm1363, %v3858, %v3860
      %v3901 = vsel %vm1363, %v3862, %v3864
      %v3902 = vsel %vm1363, %v3864, %v3866
      %v3903 = vsel %vm1363, %v3868, %v3870
      %v3904 = vsel %vm1363, %v3870, %v3872
      %v3905 = vsel %vm1363, %v3874, %v3876
      %v3906 = vsel %vm1363, %v3876, %v3878
      %v3907 = vsel %vm1363, %v3880, %v3882
      %v3908 = vsel %vm1363, %v3882, %v3884
      %v3909 = vsel %vm1363, %v3886, %v3888
      %v3910 = vsel %vm1363, %v3888, %v3890
      %v3911 = vsel %vm1363, %v3892, %v3894
      %v3912 = vsel %vm1363, %v3894, %v3896
      %3937 = vst [vmem:[#allocation2 + $0x540] sm:$0xff] %v3897
      %3938 = vst [vmem:[#allocation2 + $0x548] sm:$0xff] %v3898
      %3939 = vst.msk [vmem:[#allocation2 + $0x550] sm:$0xff] %vm278, %v3854
      %3940 = vst [vmem:[#allocation2 + $0x558] sm:$0xff] %v3899
      %3941 = vst [vmem:[#allocation2 + $0x560] sm:$0xff] %v3900
      %3942 = vst.msk [vmem:[#allocation2 + $0x568] sm:$0xff] %vm278, %v3860
      %3943 = vst [vmem:[#allocation2 + $0x570] sm:$0xff] %v3901
      %3944 = vst [vmem:[#allocation2 + $0x578] sm:$0xff] %v3902
      %3945 = vst.msk [vmem:[#allocation2 + $0x580] sm:$0xff] %vm278, %v3866
      %3946 = vst [vmem:[#allocation2 + $0x588] sm:$0xff] %v3903
      %3947 = vst [vmem:[#allocation2 + $0x590] sm:$0xff] %v3904
      %3948 = vst.msk [vmem:[#allocation2 + $0x598] sm:$0xff] %vm278, %v3872
      %3949 = vst [vmem:[#allocation2 + $0x5a0] sm:$0xff] %v3905
      %3950 = vst [vmem:[#allocation2 + $0x5a8] sm:$0xff] %v3906
      %3951 = vst.msk [vmem:[#allocation2 + $0x5b0] sm:$0xff] %vm278, %v3878
      %3952 = vst [vmem:[#allocation2 + $0x5b8] sm:$0xff] %v3907
      %3953 = vst [vmem:[#allocation2 + $0x5c0] sm:$0xff] %v3908
      %3954 = vst.msk [vmem:[#allocation2 + $0x5c8] sm:$0xff] %vm278, %v3884
      %3955 = vst [vmem:[#allocation2 + $0x5d0] sm:$0xff] %v3909
      %3956 = vst [vmem:[#allocation2 + $0x5d8] sm:$0xff] %v3910
      %3957 = vst.msk [vmem:[#allocation2 + $0x5e0] sm:$0xff] %vm278, %v3890
      %3958 = vst [vmem:[#allocation2 + $0x5e8] sm:$0xff] %v3911
      %3959 = vst [vmem:[#allocation2 + $0x5f0] sm:$0xff] %v3912
      %3960 = vst.msk [vmem:[#allocation2 + $0x5f8] sm:$0xff] %vm278, %v3896
      %v3961 = vld [vmem:[#allocation3] sm:$0xff]
      %v3962 = vld [vmem:[#allocation3 + $0x8] sm:$0xff]
      %v3963 = vld [vmem:[#allocation3 + $0x10] sm:$0xff]
      %v3964 = vld [vmem:[#allocation3 + $0x18] sm:$0xff]
      %v3965 = vld [vmem:[#allocation3 + $0x20] sm:$0xff]
      %v3966 = vld [vmem:[#allocation3 + $0x28] sm:$0xff]
      %v3967 = vld [vmem:[#allocation3 + $0x30] sm:$0xff]
      %v3968 = vld [vmem:[#allocation3 + $0x38] sm:$0xff]
      %v3969 = vld [vmem:[#allocation3 + $0x40] sm:$0xff]
      %v3970 = vld [vmem:[#allocation3 + $0x48] sm:$0xff]
      %v3971 = vld [vmem:[#allocation3 + $0x50] sm:$0xff]
      %v3972 = vld [vmem:[#allocation3 + $0x58] sm:$0xff]
      %v3973 = vld [vmem:[#allocation3 + $0x60] sm:$0xff]
      %v3974 = vld [vmem:[#allocation3 + $0x68] sm:$0xff]
      %v3975 = vld [vmem:[#allocation3 + $0x70] sm:$0xff]
      %v3976 = vld [vmem:[#allocation3 + $0x78] sm:$0xff]
      %v3977 = vld [vmem:[#allocation3 + $0x80] sm:$0xff]
      %v3978 = vld [vmem:[#allocation3 + $0x88] sm:$0xff]
      %v3979 = vld [vmem:[#allocation3 + $0x90] sm:$0xff]
      %v3980 = vld [vmem:[#allocation3 + $0x98] sm:$0xff]
      %v3981 = vld [vmem:[#allocation3 + $0xa0] sm:$0xff]
      %v3982 = vld [vmem:[#allocation3 + $0xa8] sm:$0xff]
      %v3983 = vld [vmem:[#allocation3 + $0xb0] sm:$0xff]
      %v3984 = vld [vmem:[#allocation3 + $0xb8] sm:$0xff]
      %4009 = vrot.lane.b32.xlu0 %v3961, 90
      %v4010 = vpop.permute.xlu0 %4009
      %4011 = vrot.lane.b32.xlu0 %v3962, 90
      %v4012 = vpop.permute.xlu0 %4011
      %4013 = vrot.lane.b32.xlu0 %v3963, 90
      %v4014 = vpop.permute.xlu0 %4013
      %4015 = vrot.lane.b32.xlu0 %v3964, 90
      %v4016 = vpop.permute.xlu0 %4015
      %4017 = vrot.lane.b32.xlu0 %v3965, 90
      %v4018 = vpop.permute.xlu0 %4017
      %4019 = vrot.lane.b32.xlu0 %v3966, 90
      %v4020 = vpop.permute.xlu0 %4019
      %4021 = vrot.lane.b32.xlu0 %v3967, 90
      %v4022 = vpop.permute.xlu0 %4021
      %4023 = vrot.lane.b32.xlu0 %v3968, 90
      %v4024 = vpop.permute.xlu0 %4023
      %4025 = vrot.lane.b32.xlu0 %v3969, 90
      %v4026 = vpop.permute.xlu0 %4025
      %4027 = vrot.lane.b32.xlu0 %v3970, 90
      %v4028 = vpop.permute.xlu0 %4027
      %4029 = vrot.lane.b32.xlu0 %v3971, 90
      %v4030 = vpop.permute.xlu0 %4029
      %4031 = vrot.lane.b32.xlu0 %v3972, 90
      %v4032 = vpop.permute.xlu0 %4031
      %4033 = vrot.lane.b32.xlu0 %v3973, 90
      %v4034 = vpop.permute.xlu0 %4033
      %4035 = vrot.lane.b32.xlu0 %v3974, 90
      %v4036 = vpop.permute.xlu0 %4035
      %4037 = vrot.lane.b32.xlu0 %v3975, 90
      %v4038 = vpop.permute.xlu0 %4037
      %4039 = vrot.lane.b32.xlu0 %v3976, 90
      %v4040 = vpop.permute.xlu0 %4039
      %4041 = vrot.lane.b32.xlu0 %v3977, 90
      %v4042 = vpop.permute.xlu0 %4041
      %4043 = vrot.lane.b32.xlu0 %v3978, 90
      %v4044 = vpop.permute.xlu0 %4043
      %4045 = vrot.lane.b32.xlu0 %v3979, 90
      %v4046 = vpop.permute.xlu0 %4045
      %4047 = vrot.lane.b32.xlu0 %v3980, 90
      %v4048 = vpop.permute.xlu0 %4047
      %4049 = vrot.lane.b32.xlu0 %v3981, 90
      %v4050 = vpop.permute.xlu0 %4049
      %4051 = vrot.lane.b32.xlu0 %v3982, 90
      %v4052 = vpop.permute.xlu0 %4051
      %4053 = vrot.lane.b32.xlu0 %v3983, 90
      %v4054 = vpop.permute.xlu0 %4053
      %4055 = vrot.lane.b32.xlu0 %v3984, 90
      %v4056 = vpop.permute.xlu0 %4055
      %v4057 = vsel %vm1524, %v4010, %v4012
      %v4058 = vsel %vm1524, %v4012, %v4014
      %v4059 = vsel %vm1524, %v4016, %v4018
      %v4060 = vsel %vm1524, %v4018, %v4020
      %v4061 = vsel %vm1524, %v4022, %v4024
      %v4062 = vsel %vm1524, %v4024, %v4026
      %v4063 = vsel %vm1524, %v4028, %v4030
      %v4064 = vsel %vm1524, %v4030, %v4032
      %v4065 = vsel %vm1524, %v4034, %v4036
      %v4066 = vsel %vm1524, %v4036, %v4038
      %v4067 = vsel %vm1524, %v4040, %v4042
      %v4068 = vsel %vm1524, %v4042, %v4044
      %v4069 = vsel %vm1524, %v4046, %v4048
      %v4070 = vsel %vm1524, %v4048, %v4050
      %v4071 = vsel %vm1524, %v4052, %v4054
      %v4072 = vsel %vm1524, %v4054, %v4056
      %4097 = vst [vmem:[#allocation2 + $0x600] sm:$0xff] %v4057
      %4098 = vst [vmem:[#allocation2 + $0x608] sm:$0xff] %v4058
      %4099 = vst.msk [vmem:[#allocation2 + $0x610] sm:$0xff] %vm278, %v4014
      %4100 = vst [vmem:[#allocation2 + $0x618] sm:$0xff] %v4059
      %4101 = vst [vmem:[#allocation2 + $0x620] sm:$0xff] %v4060
      %4102 = vst.msk [vmem:[#allocation2 + $0x628] sm:$0xff] %vm278, %v4020
      %4103 = vst [vmem:[#allocation2 + $0x630] sm:$0xff] %v4061
      %4104 = vst [vmem:[#allocation2 + $0x638] sm:$0xff] %v4062
      %4105 = vst.msk [vmem:[#allocation2 + $0x640] sm:$0xff] %vm278, %v4026
      %4106 = vst [vmem:[#allocation2 + $0x648] sm:$0xff] %v4063
      %4107 = vst [vmem:[#allocation2 + $0x650] sm:$0xff] %v4064
      %4108 = vst.msk [vmem:[#allocation2 + $0x658] sm:$0xff] %vm278, %v4032
      %4109 = vst [vmem:[#allocation2 + $0x660] sm:$0xff] %v4065
      %4110 = vst [vmem:[#allocation2 + $0x668] sm:$0xff] %v4066
      %4111 = vst.msk [vmem:[#allocation2 + $0x670] sm:$0xff] %vm278, %v4038
      %4112 = vst [vmem:[#allocation2 + $0x678] sm:$0xff] %v4067
      %4113 = vst [vmem:[#allocation2 + $0x680] sm:$0xff] %v4068
      %4114 = vst.msk [vmem:[#allocation2 + $0x688] sm:$0xff] %vm278, %v4044
      %4115 = vst [vmem:[#allocation2 + $0x690] sm:$0xff] %v4069
      %4116 = vst [vmem:[#allocation2 + $0x698] sm:$0xff] %v4070
      %4117 = vst.msk [vmem:[#allocation2 + $0x6a0] sm:$0xff] %vm278, %v4050
      %4118 = vst [vmem:[#allocation2 + $0x6a8] sm:$0xff] %v4071
      %4119 = vst [vmem:[#allocation2 + $0x6b0] sm:$0xff] %v4072
      %4120 = vst.msk [vmem:[#allocation2 + $0x6b8] sm:$0xff] %vm278, %v4056
      %v4121 = vld [vmem:[%s4] sm:$0xff]
      %v4122 = vld [vmem:[%s4 + $0x8] sm:$0xff]
      %v4123 = vld [vmem:[%s4 + $0x10] sm:$0xff]
      %v4124 = vld [vmem:[%s4 + $0x18] sm:$0xff]
      %v4125 = vld [vmem:[%s4 + $0x20] sm:$0xff]
      %v4126 = vld [vmem:[%s4 + $0x28] sm:$0xff]
      %v4127 = vld [vmem:[%s4 + $0x30] sm:$0xff]
      %v4128 = vld [vmem:[%s4 + $0x38] sm:$0xff]
      %v4129 = vld [vmem:[%s4 + $0x40] sm:$0xff]
      %v4130 = vld [vmem:[%s4 + $0x48] sm:$0xff]
      %v4131 = vld [vmem:[%s4 + $0x50] sm:$0xff]
      %v4132 = vld [vmem:[%s4 + $0x58] sm:$0xff]
      %v4133 = vld [vmem:[%s4 + $0x60] sm:$0xff]
      %v4134 = vld [vmem:[%s4 + $0x68] sm:$0xff]
      %v4135 = vld [vmem:[%s4 + $0x70] sm:$0xff]
      %v4136 = vld [vmem:[%s4 + $0x78] sm:$0xff]
      %v4137 = vld [vmem:[%s4 + $0x80] sm:$0xff]
      %v4138 = vld [vmem:[%s4 + $0x88] sm:$0xff]
      %v4139 = vld [vmem:[%s4 + $0x90] sm:$0xff]
      %v4140 = vld [vmem:[%s4 + $0x98] sm:$0xff]
      %v4141 = vld [vmem:[%s4 + $0xa0] sm:$0xff]
      %v4142 = vld [vmem:[%s4 + $0xa8] sm:$0xff]
      %v4143 = vld [vmem:[%s4 + $0xb0] sm:$0xff]
      %v4144 = vld [vmem:[%s4 + $0xb8] sm:$0xff]
      %v4145 = vld [vmem:[%s4 + $0xc0] sm:$0xff]
      %v4146 = vld [vmem:[%s4 + $0xc8] sm:$0xff]
      %v4147 = vld [vmem:[%s4 + $0xd0] sm:$0xff]
      %v4148 = vld [vmem:[%s4 + $0xd8] sm:$0xff]
      %v4149 = vld [vmem:[%s4 + $0xe0] sm:$0xff]
      %v4150 = vld [vmem:[%s4 + $0xe8] sm:$0xff]
      %v4151 = vld [vmem:[%s4 + $0xf0] sm:$0xff]
      %v4152 = vld [vmem:[%s4 + $0xf8] sm:$0xff]
      %v4153 = vld [vmem:[%s4 + $0x100] sm:$0xff]
      %v4154 = vld [vmem:[%s4 + $0x108] sm:$0xff]
      %v4155 = vld [vmem:[%s4 + $0x110] sm:$0xff]
      %v4156 = vld [vmem:[%s4 + $0x118] sm:$0xff]
      %v4157 = vld [vmem:[%s4 + $0x120] sm:$0xff]
      %v4158 = vld [vmem:[%s4 + $0x128] sm:$0xff]
      %v4159 = vld [vmem:[%s4 + $0x130] sm:$0xff]
      %v4160 = vld [vmem:[%s4 + $0x138] sm:$0xff]
      %v4161 = vld [vmem:[#allocation2] sm:$0xff]
      %v4162 = vld [vmem:[#allocation2 + $0x8] sm:$0xff]
      %v4163 = vld [vmem:[#allocation2 + $0x10] sm:$0xff]
      %v4164 = vld [vmem:[#allocation2 + $0x18] sm:$0xff]
      %v4165 = vld [vmem:[#allocation2 + $0x20] sm:$0xff]
      %v4166 = vld [vmem:[#allocation2 + $0x28] sm:$0xff]
      %v4167 = vld [vmem:[#allocation2 + $0x30] sm:$0xff]
      %v4168 = vld [vmem:[#allocation2 + $0x38] sm:$0xff]
      %v4169 = vld [vmem:[#allocation2 + $0x40] sm:$0xff]
      %v4170 = vld [vmem:[#allocation2 + $0x48] sm:$0xff]
      %v4171 = vld [vmem:[#allocation2 + $0x50] sm:$0xff]
      %v4172 = vld [vmem:[#allocation2 + $0x58] sm:$0xff]
      %v4173 = vld [vmem:[#allocation2 + $0x60] sm:$0xff]
      %v4174 = vld [vmem:[#allocation2 + $0x68] sm:$0xff]
      %v4175 = vld [vmem:[#allocation2 + $0x70] sm:$0xff]
      %v4176 = vld [vmem:[#allocation2 + $0x78] sm:$0xff]
      %v4177 = vld [vmem:[#allocation2 + $0x80] sm:$0xff]
      %v4178 = vld [vmem:[#allocation2 + $0x88] sm:$0xff]
      %v4179 = vld [vmem:[#allocation2 + $0x90] sm:$0xff]
      %v4180 = vld [vmem:[#allocation2 + $0x98] sm:$0xff]
      %v4181 = vld [vmem:[#allocation2 + $0xa0] sm:$0xff]
      %v4182 = vld [vmem:[#allocation2 + $0xa8] sm:$0xff]
      %v4183 = vld [vmem:[#allocation2 + $0xb0] sm:$0xff]
      %v4184 = vld [vmem:[#allocation2 + $0xb8] sm:$0xff]
      %v4185 = vld [vmem:[#allocation2 + $0xc0] sm:$0xff]
      %v4186 = vld [vmem:[#allocation2 + $0xc8] sm:$0xff]
      %v4187 = vld [vmem:[#allocation2 + $0xd0] sm:$0xff]
      %v4188 = vld [vmem:[#allocation2 + $0xd8] sm:$0xff]
      %v4189 = vld [vmem:[#allocation2 + $0xe0] sm:$0xff]
      %v4190 = vld [vmem:[#allocation2 + $0xe8] sm:$0xff]
      %v4191 = vld [vmem:[#allocation2 + $0xf0] sm:$0xff]
      %v4192 = vld [vmem:[#allocation2 + $0xf8] sm:$0xff]
      %v4193 = vld [vmem:[#allocation2 + $0x100] sm:$0xff]
      %v4194 = vld [vmem:[#allocation2 + $0x108] sm:$0xff]
      %v4195 = vld [vmem:[#allocation2 + $0x110] sm:$0xff]
      %v4196 = vld [vmem:[#allocation2 + $0x118] sm:$0xff]
      %v4197 = vld [vmem:[#allocation2 + $0x120] sm:$0xff]
      %v4198 = vld [vmem:[#allocation2 + $0x128] sm:$0xff]
      %v4199 = vld [vmem:[#allocation2 + $0x130] sm:$0xff]
      %v4200 = vld [vmem:[#allocation2 + $0x138] sm:$0xff]
      %v4201 = vld [vmem:[#allocation2 + $0x140] sm:$0xff]
      %v4202 = vld [vmem:[#allocation2 + $0x148] sm:$0xff]
      %v4203 = vld [vmem:[#allocation2 + $0x150] sm:$0xff]
      %v4204 = vld [vmem:[#allocation2 + $0x158] sm:$0xff]
      %v4205 = vld [vmem:[#allocation2 + $0x160] sm:$0xff]
      %v4206 = vld [vmem:[#allocation2 + $0x168] sm:$0xff]
      %v4207 = vld [vmem:[#allocation2 + $0x170] sm:$0xff]
      %v4208 = vld [vmem:[#allocation2 + $0x178] sm:$0xff]
      %v4209 = vld [vmem:[#allocation2 + $0x180] sm:$0xff]
      %v4210 = vld [vmem:[#allocation2 + $0x188] sm:$0xff]
      %v4211 = vld [vmem:[#allocation2 + $0x190] sm:$0xff]
      %v4212 = vld [vmem:[#allocation2 + $0x198] sm:$0xff]
      %v4213 = vld [vmem:[#allocation2 + $0x1a0] sm:$0xff]
      %v4214 = vld [vmem:[#allocation2 + $0x1a8] sm:$0xff]
      %v4215 = vld [vmem:[#allocation2 + $0x1b0] sm:$0xff]
      %v4216 = vld [vmem:[#allocation2 + $0x1b8] sm:$0xff]
      %v4217 = vld [vmem:[#allocation2 + $0x1c0] sm:$0xff]
      %v4218 = vld [vmem:[#allocation2 + $0x1c8] sm:$0xff]
      %v4219 = vld [vmem:[#allocation2 + $0x1d0] sm:$0xff]
      %v4220 = vld [vmem:[#allocation2 + $0x1d8] sm:$0xff]
      %v4221 = vld [vmem:[#allocation2 + $0x1e0] sm:$0xff]
      %v4222 = vld [vmem:[#allocation2 + $0x1e8] sm:$0xff]
      %v4223 = vld [vmem:[#allocation2 + $0x1f0] sm:$0xff]
      %v4224 = vld [vmem:[#allocation2 + $0x1f8] sm:$0xff]
      %v4225 = vld [vmem:[#allocation2 + $0x200] sm:$0xff]
      %v4226 = vld [vmem:[#allocation2 + $0x208] sm:$0xff]
      %v4227 = vld [vmem:[#allocation2 + $0x210] sm:$0xff]
      %v4228 = vld [vmem:[#allocation2 + $0x218] sm:$0xff]
      %v4229 = vld [vmem:[#allocation2 + $0x220] sm:$0xff]
      %v4230 = vld [vmem:[#allocation2 + $0x228] sm:$0xff]
      %v4231 = vld [vmem:[#allocation2 + $0x230] sm:$0xff]
      %v4232 = vld [vmem:[#allocation2 + $0x238] sm:$0xff]
      %v4233 = vld [vmem:[#allocation2 + $0x240] sm:$0xff]
      %v4234 = vld [vmem:[#allocation2 + $0x248] sm:$0xff]
      %v4235 = vld [vmem:[#allocation2 + $0x250] sm:$0xff]
      %v4236 = vld [vmem:[#allocation2 + $0x258] sm:$0xff]
      %v4237 = vld [vmem:[#allocation2 + $0x260] sm:$0xff]
      %v4238 = vld [vmem:[#allocation2 + $0x268] sm:$0xff]
      %v4239 = vld [vmem:[#allocation2 + $0x270] sm:$0xff]
      %v4240 = vld [vmem:[#allocation2 + $0x278] sm:$0xff]
      %v4241 = vld [vmem:[#allocation2 + $0x280] sm:$0xff]
      %v4242 = vld [vmem:[#allocation2 + $0x288] sm:$0xff]
      %v4243 = vld [vmem:[#allocation2 + $0x290] sm:$0xff]
      %v4244 = vld [vmem:[#allocation2 + $0x298] sm:$0xff]
      %v4245 = vld [vmem:[#allocation2 + $0x2a0] sm:$0xff]
      %v4246 = vld [vmem:[#allocation2 + $0x2a8] sm:$0xff]
      %v4247 = vld [vmem:[#allocation2 + $0x2b0] sm:$0xff]
      %v4248 = vld [vmem:[#allocation2 + $0x2b8] sm:$0xff]
      %v4249 = vld [vmem:[#allocation2 + $0x2c0] sm:$0xff]
      %v4250 = vld [vmem:[#allocation2 + $0x2c8] sm:$0xff]
      %v4251 = vld [vmem:[#allocation2 + $0x2d0] sm:$0xff]
      %v4252 = vld [vmem:[#allocation2 + $0x2d8] sm:$0xff]
      %v4253 = vld [vmem:[#allocation2 + $0x2e0] sm:$0xff]
      %v4254 = vld [vmem:[#allocation2 + $0x2e8] sm:$0xff]
      %v4255 = vld [vmem:[#allocation2 + $0x2f0] sm:$0xff]
      %v4256 = vld [vmem:[#allocation2 + $0x2f8] sm:$0xff]
      %v4257 = vld [vmem:[#allocation2 + $0x300] sm:$0xff]
      %v4258 = vld [vmem:[#allocation2 + $0x308] sm:$0xff]
      %v4259 = vld [vmem:[#allocation2 + $0x310] sm:$0xff]
      %v4260 = vld [vmem:[#allocation2 + $0x318] sm:$0xff]
      %v4261 = vld [vmem:[#allocation2 + $0x320] sm:$0xff]
      %v4262 = vld [vmem:[#allocation2 + $0x328] sm:$0xff]
      %v4263 = vld [vmem:[#allocation2 + $0x330] sm:$0xff]
      %v4264 = vld [vmem:[#allocation2 + $0x338] sm:$0xff]
      %v4265 = vld [vmem:[#allocation2 + $0x340] sm:$0xff]
      %v4266 = vld [vmem:[#allocation2 + $0x348] sm:$0xff]
      %v4267 = vld [vmem:[#allocation2 + $0x350] sm:$0xff]
      %v4268 = vld [vmem:[#allocation2 + $0x358] sm:$0xff]
      %v4269 = vld [vmem:[#allocation2 + $0x360] sm:$0xff]
      %v4270 = vld [vmem:[#allocation2 + $0x368] sm:$0xff]
      %v4271 = vld [vmem:[#allocation2 + $0x370] sm:$0xff]
      %v4272 = vld [vmem:[#allocation2 + $0x378] sm:$0xff]
      %v4273 = vld [vmem:[#allocation2 + $0x380] sm:$0xff]
      %v4274 = vld [vmem:[#allocation2 + $0x388] sm:$0xff]
      %v4275 = vld [vmem:[#allocation2 + $0x390] sm:$0xff]
      %v4276 = vld [vmem:[#allocation2 + $0x398] sm:$0xff]
      %v4277 = vld [vmem:[#allocation2 + $0x3a0] sm:$0xff]
      %v4278 = vld [vmem:[#allocation2 + $0x3a8] sm:$0xff]
      %v4279 = vld [vmem:[#allocation2 + $0x3b0] sm:$0xff]
      %v4280 = vld [vmem:[#allocation2 + $0x3b8] sm:$0xff]
      %v4281 = vld [vmem:[#allocation2 + $0x3c0] sm:$0xff]
      %v4282 = vld [vmem:[#allocation2 + $0x3c8] sm:$0xff]
      %v4283 = vld [vmem:[#allocation2 + $0x3d0] sm:$0xff]
      %v4284 = vld [vmem:[#allocation2 + $0x3d8] sm:$0xff]
      %v4285 = vld [vmem:[#allocation2 + $0x3e0] sm:$0xff]
      %v4286 = vld [vmem:[#allocation2 + $0x3e8] sm:$0xff]
      %v4287 = vld [vmem:[#allocation2 + $0x3f0] sm:$0xff]
      %v4288 = vld [vmem:[#allocation2 + $0x3f8] sm:$0xff]
      %v4289 = vld [vmem:[#allocation2 + $0x400] sm:$0xff]
      %v4290 = vld [vmem:[#allocation2 + $0x408] sm:$0xff]
      %v4291 = vld [vmem:[#allocation2 + $0x410] sm:$0xff]
      %v4292 = vld [vmem:[#allocation2 + $0x418] sm:$0xff]
      %v4293 = vld [vmem:[#allocation2 + $0x420] sm:$0xff]
      %v4294 = vld [vmem:[#allocation2 + $0x428] sm:$0xff]
      %v4295 = vld [vmem:[#allocation2 + $0x430] sm:$0xff]
      %v4296 = vld [vmem:[#allocation2 + $0x438] sm:$0xff]
      %v4297 = vld [vmem:[#allocation2 + $0x440] sm:$0xff]
      %v4298 = vld [vmem:[#allocation2 + $0x448] sm:$0xff]
      %v4299 = vld [vmem:[#allocation2 + $0x450] sm:$0xff]
      %v4300 = vld [vmem:[#allocation2 + $0x458] sm:$0xff]
      %v4301 = vld [vmem:[#allocation2 + $0x460] sm:$0xff]
      %v4302 = vld [vmem:[#allocation2 + $0x468] sm:$0xff]
      %v4303 = vld [vmem:[#allocation2 + $0x470] sm:$0xff]
      %v4304 = vld [vmem:[#allocation2 + $0x478] sm:$0xff]
      %v4305 = vld [vmem:[#allocation2 + $0x480] sm:$0xff]
      %v4306 = vld [vmem:[#allocation2 + $0x488] sm:$0xff]
      %v4307 = vld [vmem:[#allocation2 + $0x490] sm:$0xff]
      %v4308 = vld [vmem:[#allocation2 + $0x498] sm:$0xff]
      %v4309 = vld [vmem:[#allocation2 + $0x4a0] sm:$0xff]
      %v4310 = vld [vmem:[#allocation2 + $0x4a8] sm:$0xff]
      %v4311 = vld [vmem:[#allocation2 + $0x4b0] sm:$0xff]
      %v4312 = vld [vmem:[#allocation2 + $0x4b8] sm:$0xff]
      %v4313 = vld [vmem:[#allocation2 + $0x4c0] sm:$0xff]
      %v4314 = vld [vmem:[#allocation2 + $0x4c8] sm:$0xff]
      %v4315 = vld [vmem:[#allocation2 + $0x4d0] sm:$0xff]
      %v4316 = vld [vmem:[#allocation2 + $0x4d8] sm:$0xff]
      %v4317 = vld [vmem:[#allocation2 + $0x4e0] sm:$0xff]
      %v4318 = vld [vmem:[#allocation2 + $0x4e8] sm:$0xff]
      %v4319 = vld [vmem:[#allocation2 + $0x4f0] sm:$0xff]
      %v4320 = vld [vmem:[#allocation2 + $0x4f8] sm:$0xff]
      %v4321 = vld [vmem:[#allocation2 + $0x500] sm:$0xff]
      %v4322 = vld [vmem:[#allocation2 + $0x508] sm:$0xff]
      %v4323 = vld [vmem:[#allocation2 + $0x510] sm:$0xff]
      %v4324 = vld [vmem:[#allocation2 + $0x518] sm:$0xff]
      %v4325 = vld [vmem:[#allocation2 + $0x520] sm:$0xff]
      %v4326 = vld [vmem:[#allocation2 + $0x528] sm:$0xff]
      %v4327 = vld [vmem:[#allocation2 + $0x530] sm:$0xff]
      %v4328 = vld [vmem:[#allocation2 + $0x538] sm:$0xff]
      %v4329 = vld [vmem:[#allocation2 + $0x540] sm:$0xff]
      %v4330 = vld [vmem:[#allocation2 + $0x548] sm:$0xff]
      %v4331 = vld [vmem:[#allocation2 + $0x550] sm:$0xff]
      %v4332 = vld [vmem:[#allocation2 + $0x558] sm:$0xff]
      %v4333 = vld [vmem:[#allocation2 + $0x560] sm:$0xff]
      %v4334 = vld [vmem:[#allocation2 + $0x568] sm:$0xff]
      %v4335 = vld [vmem:[#allocation2 + $0x570] sm:$0xff]
      %v4336 = vld [vmem:[#allocation2 + $0x578] sm:$0xff]
      %v4337 = vld [vmem:[#allocation2 + $0x580] sm:$0xff]
      %v4338 = vld [vmem:[#allocation2 + $0x588] sm:$0xff]
      %v4339 = vld [vmem:[#allocation2 + $0x590] sm:$0xff]
      %v4340 = vld [vmem:[#allocation2 + $0x598] sm:$0xff]
      %v4341 = vld [vmem:[#allocation2 + $0x5a0] sm:$0xff]
      %v4342 = vld [vmem:[#allocation2 + $0x5a8] sm:$0xff]
      %v4343 = vld [vmem:[#allocation2 + $0x5b0] sm:$0xff]
      %v4344 = vld [vmem:[#allocation2 + $0x5b8] sm:$0xff]
      %v4345 = vld [vmem:[#allocation2 + $0x5c0] sm:$0xff]
      %v4346 = vld [vmem:[#allocation2 + $0x5c8] sm:$0xff]
      %v4347 = vld [vmem:[#allocation2 + $0x5d0] sm:$0xff]
      %v4348 = vld [vmem:[#allocation2 + $0x5d8] sm:$0xff]
      %v4349 = vld [vmem:[#allocation2 + $0x5e0] sm:$0xff]
      %v4350 = vld [vmem:[#allocation2 + $0x5e8] sm:$0xff]
      %v4351 = vld [vmem:[#allocation2 + $0x5f0] sm:$0xff]
      %v4352 = vld [vmem:[#allocation2 + $0x5f8] sm:$0xff]
      %v4353 = vld [vmem:[#allocation2 + $0x600] sm:$0xff]
      %v4354 = vld [vmem:[#allocation2 + $0x608] sm:$0xff]
      %v4355 = vld [vmem:[#allocation2 + $0x610] sm:$0xff]
      %v4356 = vld [vmem:[#allocation2 + $0x618] sm:$0xff]
      %v4357 = vld [vmem:[#allocation2 + $0x620] sm:$0xff]
      %v4358 = vld [vmem:[#allocation2 + $0x628] sm:$0xff]
      %v4359 = vld [vmem:[#allocation2 + $0x630] sm:$0xff]
      %v4360 = vld [vmem:[#allocation2 + $0x638] sm:$0xff]
      %v4361 = vld [vmem:[#allocation2 + $0x640] sm:$0xff]
      %v4362 = vld [vmem:[#allocation2 + $0x648] sm:$0xff]
      %v4363 = vld [vmem:[#allocation2 + $0x650] sm:$0xff]
      %v4364 = vld [vmem:[#allocation2 + $0x658] sm:$0xff]
      %v4365 = vld [vmem:[#allocation2 + $0x660] sm:$0xff]
      %v4366 = vld [vmem:[#allocation2 + $0x668] sm:$0xff]
      %v4367 = vld [vmem:[#allocation2 + $0x670] sm:$0xff]
      %v4368 = vld [vmem:[#allocation2 + $0x678] sm:$0xff]
      %v4369 = vld [vmem:[#allocation2 + $0x680] sm:$0xff]
      %v4370 = vld [vmem:[#allocation2 + $0x688] sm:$0xff]
      %v4371 = vld [vmem:[#allocation2 + $0x690] sm:$0xff]
      %v4372 = vld [vmem:[#allocation2 + $0x698] sm:$0xff]
      %v4373 = vld [vmem:[#allocation2 + $0x6a0] sm:$0xff]
      %v4374 = vld [vmem:[#allocation2 + $0x6a8] sm:$0xff]
      %v4375 = vld [vmem:[#allocation2 + $0x6b0] sm:$0xff]
      %v4376 = vld [vmem:[#allocation2 + $0x6b8] sm:$0xff]
      %v4377 = vld [vmem:[%s5] sm:$0xff]
      %v4378 = vld [vmem:[%s5 + $0x8] sm:$0xff]
      %v4379 = vld [vmem:[%s5 + $0x10] sm:$0xff]
      %v4380 = vld [vmem:[%s5 + $0x18] sm:$0xff]
      %v4381 = vld [vmem:[%s5 + $0x20] sm:$0xff]
      %v4382 = vld [vmem:[%s5 + $0x28] sm:$0xff]
      %v4383 = vld [vmem:[%s5 + $0x30] sm:$0xff]
      %v4384 = vld [vmem:[%s5 + $0x38] sm:$0xff]
      %4386 = vset.pattern.permute.xlu0 0
      %4387 = vperm.xlu0 %4386, %v4377
      %v4388 = vpop.permute.xlu0 %4387
      %4391 = vset.pattern.permute.xlu0 0
      %4392 = vperm.xlu0 %4391, %v4378
      %v4393 = vpop.permute.xlu0 %4392
      %4396 = vset.pattern.permute.xlu0 0
      %4397 = vperm.xlu0 %4396, %v4379
      %v4398 = vpop.permute.xlu0 %4397
      %4401 = vset.pattern.permute.xlu0 0
      %4402 = vperm.xlu0 %4401, %v4380
      %v4403 = vpop.permute.xlu0 %4402
      %4406 = vset.pattern.permute.xlu0 0
      %4407 = vperm.xlu0 %4406, %v4381
      %v4408 = vpop.permute.xlu0 %4407
      %4411 = vset.pattern.permute.xlu0 0
      %4412 = vperm.xlu0 %4411, %v4382
      %v4413 = vpop.permute.xlu0 %4412
      %4416 = vset.pattern.permute.xlu0 0
      %4417 = vperm.xlu0 %4416, %v4383
      %v4418 = vpop.permute.xlu0 %4417
      %4421 = vset.pattern.permute.xlu0 0
      %4422 = vperm.xlu0 %4421, %v4384
      %v4423 = vpop.permute.xlu0 %4422
      %v4426 = vsel %vm1893, %v4125, 0
      %v4429 = vsel %vm1893, %v4130, 0
      %v4432 = vsel %vm1893, %v4135, 0
      %v4435 = vsel %vm1893, %v4140, 0
      %v4438 = vsel %vm1893, %v4145, 0
      %v4441 = vsel %vm1893, %v4150, 0
      %v4444 = vsel %vm1893, %v4155, 0
      %v4447 = vsel %vm1893, %v4160, 0
      %4449 = vmatprep.subr.mxu0 %v4207
      %4450 = vmatpush1.msra.mxu0 %v4206
      %4451 = vmatprep.subr.mxu0 %v4204
      %4452 = vmatpush1.msra.mxu0 %v4203
      %4453 = vmatprep.subr.mxu0 %v4201
      %4454 = vmatpush1.msra.mxu0 %v4200
      %4455 = vmatprep.subr.mxu0 %v4198
      %4456 = vmatpush1.msra.mxu0 %v4197
      %4457 = vmatprep.subr.mxu0 %v4195
      %4458 = vmatpush1.msra.mxu0 %v4194
      %4459 = vmatprep.subr.mxu0 %v4192
      %4460 = vmatpush1.msra.mxu0 %v4191
      %4461 = vmatprep.subr.mxu0 %v4189
      %4462 = vmatpush1.msra.mxu0 %v4188
      %4463 = vmatprep.subr.mxu0 %v4186
      %4464 = vmatpush1.msra.mxu0 %v4185
      %4465 = vmatprep.subr.mxu0 %v4183
      %4466 = vmatpush1.msra.mxu0 %v4182
      %4467 = vmatprep.subr.mxu0 %v4180
      %4468 = vmatpush1.msra.mxu0 %v4179
      %4469 = vmatprep.subr.mxu0 %v4177
      %4470 = vmatpush1.msra.mxu0 %v4176
      %4471 = vmatprep.subr.mxu0 %v4174
      %4472 = vmatpush1.msra.mxu0 %v4173
      %4473 = vmatprep.subr.mxu0 %v4171
      %4474 = vmatpush1.msra.mxu0 %v4170
      %4475 = vmatprep.subr.mxu0 %v4168
      %4476 = vmatpush1.msra.mxu0 %v4167
      %4477 = vmatprep.subr.mxu0 %v4165
      %4478 = vmatpush1.msra.mxu0 %v4164
      %4479 = vmatprep.subr.mxu0 %v4162
      %4480 = vmatpush1.msra.mxu0 %v4161
      %4481 = vmatprep.subr.mxu0 %v4255
      %4482 = vmatpush2.msra.mxu0 %v4254
      %4483 = vmatprep.subr.mxu0 %v4252
      %4484 = vmatpush2.msra.mxu0 %v4251
      %4485 = vmatprep.subr.mxu0 %v4249
      %4486 = vmatpush2.msra.mxu0 %v4248
      %4487 = vmatprep.subr.mxu0 %v4246
      %4488 = vmatpush2.msra.mxu0 %v4245
      %4489 = vmatprep.subr.mxu0 %v4243
      %4490 = vmatpush2.msra.mxu0 %v4242
      %4491 = vmatprep.subr.mxu0 %v4240
      %4492 = vmatpush2.msra.mxu0 %v4239
      %4493 = vmatprep.subr.mxu0 %v4237
      %4494 = vmatpush2.msra.mxu0 %v4236
      %4495 = vmatprep.subr.mxu0 %v4234
      %4496 = vmatpush2.msra.mxu0 %v4233
      %4497 = vmatprep.subr.mxu0 %v4231
      %4498 = vmatpush2.msra.mxu0 %v4230
      %4499 = vmatprep.subr.mxu0 %v4228
      %4500 = vmatpush2.msra.mxu0 %v4227
      %4501 = vmatprep.subr.mxu0 %v4225
      %4502 = vmatpush2.msra.mxu0 %v4224
      %4503 = vmatprep.subr.mxu0 %v4222
      %4504 = vmatpush2.msra.mxu0 %v4221
      %4505 = vmatprep.subr.mxu0 %v4219
      %4506 = vmatpush2.msra.mxu0 %v4218
      %4507 = vmatprep.subr.mxu0 %v4216
      %4508 = vmatpush2.msra.mxu0 %v4215
      %4509 = vmatprep.subr.mxu0 %v4213
      %4510 = vmatpush2.msra.mxu0 %v4212
      %4511 = vmatprep.subr.mxu0 %v4210
      %4512 = vmatpush2.msra.mxu0 %v4209
      %4513 = vmatprep.mubr.f32.mxu0 %v4122
      %4514 = vmatmul.mubr.f32.gmra.mxu0 %v4121
      %v4515 = vpop.f32.mrf.mxu0
      %v4516 = vadd.f32 %v4388, %v4515
      %v4517 = vpop.f32.mrf.mxu0
      %v4518 = vadd.f32 %v4388, %v4517
      %4519 = vmatprep.mubr.f32.mxu0 %v4127
      %4520 = vmatmul.mubr.f32.gmra.mxu0 %v4126
      %v4521 = vpop.f32.mrf.mxu0
      %v4522 = vadd.f32 %v4393, %v4521
      %v4523 = vpop.f32.mrf.mxu0
      %v4524 = vadd.f32 %v4393, %v4523
      %4525 = vmatprep.mubr.f32.mxu0 %v4132
      %4526 = vmatmul.mubr.f32.gmra.mxu0 %v4131
      %v4527 = vpop.f32.mrf.mxu0
      %v4528 = vadd.f32 %v4398, %v4527
      %v4529 = vpop.f32.mrf.mxu0
      %v4530 = vadd.f32 %v4398, %v4529
      %4531 = vmatprep.mubr.f32.mxu0 %v4137
      %4532 = vmatmul.mubr.f32.gmra.mxu0 %v4136
      %v4533 = vpop.f32.mrf.mxu0
      %v4534 = vadd.f32 %v4403, %v4533
      %v4535 = vpop.f32.mrf.mxu0
      %v4536 = vadd.f32 %v4403, %v4535
      %4537 = vmatprep.mubr.f32.mxu0 %v4142
      %4538 = vmatmul.mubr.f32.gmra.mxu0 %v4141
      %v4539 = vpop.f32.mrf.mxu0
      %v4540 = vadd.f32 %v4408, %v4539
      %v4541 = vpop.f32.mrf.mxu0
      %v4542 = vadd.f32 %v4408, %v4541
      %4543 = vmatprep.mubr.f32.mxu0 %v4147
      %4544 = vmatmul.mubr.f32.gmra.mxu0 %v4146
      %v4545 = vpop.f32.mrf.mxu0
      %v4546 = vadd.f32 %v4413, %v4545
      %v4547 = vpop.f32.mrf.mxu0
      %v4548 = vadd.f32 %v4413, %v4547
      %4549 = vmatprep.mubr.f32.mxu0 %v4152
      %4550 = vmatmul.mubr.f32.gmra.mxu0 %v4151
      %v4551 = vpop.f32.mrf.mxu0
      %v4552 = vadd.f32 %v4418, %v4551
      %v4553 = vpop.f32.mrf.mxu0
      %v4554 = vadd.f32 %v4418, %v4553
      %4555 = vmatprep.mubr.f32.mxu0 %v4157
      %4556 = vmatmul.mubr.f32.gmra.mxu0 %v4156
      %v4557 = vpop.f32.mrf.mxu0
      %v4558 = vadd.f32 %v4423, %v4557
      %v4559 = vpop.f32.mrf.mxu0
      %v4560 = vadd.f32 %v4423, %v4559
      %4561 = vdwg.mxu0
      %4562 = vmatprep.subr.mxu0 %v4303
      %4563 = vmatpush1.msra.mxu0 %v4302
      %4564 = vmatprep.subr.mxu0 %v4300
      %4565 = vmatpush1.msra.mxu0 %v4299
      %4566 = vmatprep.subr.mxu0 %v4297
      %4567 = vmatpush1.msra.mxu0 %v4296
      %4568 = vmatprep.subr.mxu0 %v4294
      %4569 = vmatpush1.msra.mxu0 %v4293
      %4570 = vmatprep.subr.mxu0 %v4291
      %4571 = vmatpush1.msra.mxu0 %v4290
      %4572 = vmatprep.subr.mxu0 %v4288
      %4573 = vmatpush1.msra.mxu0 %v4287
      %4574 = vmatprep.subr.mxu0 %v4285
      %4575 = vmatpush1.msra.mxu0 %v4284
      %4576 = vmatprep.subr.mxu0 %v4282
      %4577 = vmatpush1.msra.mxu0 %v4281
      %4578 = vmatprep.subr.mxu0 %v4279
      %4579 = vmatpush1.msra.mxu0 %v4278
      %4580 = vmatprep.subr.mxu0 %v4276
      %4581 = vmatpush1.msra.mxu0 %v4275
      %4582 = vmatprep.subr.mxu0 %v4273
      %4583 = vmatpush1.msra.mxu0 %v4272
      %4584 = vmatprep.subr.mxu0 %v4270
      %4585 = vmatpush1.msra.mxu0 %v4269
      %4586 = vmatprep.subr.mxu0 %v4267
      %4587 = vmatpush1.msra.mxu0 %v4266
      %4588 = vmatprep.subr.mxu0 %v4264
      %4589 = vmatpush1.msra.mxu0 %v4263
      %4590 = vmatprep.subr.mxu0 %v4261
      %4591 = vmatpush1.msra.mxu0 %v4260
      %4592 = vmatprep.subr.mxu0 %v4258
      %4593 = vmatpush1.msra.mxu0 %v4257
      %4594 = vmatprep.subr.mxu0 %v4351
      %4595 = vmatpush2.msra.mxu0 %v4350
      %4596 = vmatprep.subr.mxu0 %v4348
      %4597 = vmatpush2.msra.mxu0 %v4347
      %4598 = vmatprep.subr.mxu0 %v4345
      %4599 = vmatpush2.msra.mxu0 %v4344
      %4600 = vmatprep.subr.mxu0 %v4342
      %4601 = vmatpush2.msra.mxu0 %v4341
      %4602 = vmatprep.subr.mxu0 %v4339
      %4603 = vmatpush2.msra.mxu0 %v4338
      %4604 = vmatprep.subr.mxu0 %v4336
      %4605 = vmatpush2.msra.mxu0 %v4335
      %4606 = vmatprep.subr.mxu0 %v4333
      %4607 = vmatpush2.msra.mxu0 %v4332
      %4608 = vmatprep.subr.mxu0 %v4330
      %4609 = vmatpush2.msra.mxu0 %v4329
      %4610 = vmatprep.subr.mxu0 %v4327
      %4611 = vmatpush2.msra.mxu0 %v4326
      %4612 = vmatprep.subr.mxu0 %v4324
      %4613 = vmatpush2.msra.mxu0 %v4323
      %4614 = vmatprep.subr.mxu0 %v4321
      %4615 = vmatpush2.msra.mxu0 %v4320
      %4616 = vmatprep.subr.mxu0 %v4318
      %4617 = vmatpush2.msra.mxu0 %v4317
      %4618 = vmatprep.subr.mxu0 %v4315
      %4619 = vmatpush2.msra.mxu0 %v4314
      %4620 = vmatprep.subr.mxu0 %v4312
      %4621 = vmatpush2.msra.mxu0 %v4311
      %4622 = vmatprep.subr.mxu0 %v4309
      %4623 = vmatpush2.msra.mxu0 %v4308
      %4624 = vmatprep.subr.mxu0 %v4306
      %4625 = vmatpush2.msra.mxu0 %v4305
      %4626 = vmatprep.mubr.f32.mxu0 %v4124
      %4627 = vmatmul.mubr.f32.gmra.mxu0 %v4123
      %v4628 = vpop.f32.mrf.mxu0
      %v4629 = vadd.f32 %v4516, %v4628
      %v4630 = vpop.f32.mrf.mxu0
      %v4631 = vadd.f32 %v4518, %v4630
      %4632 = vmatprep.mubr.f32.mxu0 %v4129
      %4633 = vmatmul.mubr.f32.gmra.mxu0 %v4128
      %v4634 = vpop.f32.mrf.mxu0
      %v4635 = vadd.f32 %v4522, %v4634
      %v4636 = vpop.f32.mrf.mxu0
      %v4637 = vadd.f32 %v4524, %v4636
      %4638 = vmatprep.mubr.f32.mxu0 %v4134
      %4639 = vmatmul.mubr.f32.gmra.mxu0 %v4133
      %v4640 = vpop.f32.mrf.mxu0
      %v4641 = vadd.f32 %v4528, %v4640
      %v4642 = vpop.f32.mrf.mxu0
      %v4643 = vadd.f32 %v4530, %v4642
      %4644 = vmatprep.mubr.f32.mxu0 %v4139
      %4645 = vmatmul.mubr.f32.gmra.mxu0 %v4138
      %v4646 = vpop.f32.mrf.mxu0
      %v4647 = vadd.f32 %v4534, %v4646
      %v4648 = vpop.f32.mrf.mxu0
      %v4649 = vadd.f32 %v4536, %v4648
      %4650 = vmatprep.mubr.f32.mxu0 %v4144
      %4651 = vmatmul.mubr.f32.gmra.mxu0 %v4143
      %v4652 = vpop.f32.mrf.mxu0
      %v4653 = vadd.f32 %v4540, %v4652
      %v4654 = vpop.f32.mrf.mxu0
      %v4655 = vadd.f32 %v4542, %v4654
      %4656 = vmatprep.mubr.f32.mxu0 %v4149
      %4657 = vmatmul.mubr.f32.gmra.mxu0 %v4148
      %v4658 = vpop.f32.mrf.mxu0
      %v4659 = vadd.f32 %v4546, %v4658
      %v4660 = vpop.f32.mrf.mxu0
      %v4661 = vadd.f32 %v4548, %v4660
      %4662 = vmatprep.mubr.f32.mxu0 %v4154
      %4663 = vmatmul.mubr.f32.gmra.mxu0 %v4153
      %v4664 = vpop.f32.mrf.mxu0
      %v4665 = vadd.f32 %v4552, %v4664
      %v4666 = vpop.f32.mrf.mxu0
      %v4667 = vadd.f32 %v4554, %v4666
      %4668 = vmatprep.mubr.f32.mxu0 %v4159
      %4669 = vmatmul.mubr.f32.gmra.mxu0 %v4158
      %v4670 = vpop.f32.mrf.mxu0
      %v4671 = vadd.f32 %v4558, %v4670
      %v4672 = vpop.f32.mrf.mxu0
      %v4673 = vadd.f32 %v4560, %v4672
      %4674 = vdwg.mxu0
      %4675 = vmatprep.subr.mxu0 0.0
      %4676 = vmatpush1.msra.mxu0 0.0
      %4677 = vmatprep.subr.mxu0 0.0
      %4678 = vmatpush1.msra.mxu0 0.0
      %4679 = vmatprep.subr.mxu0 0.0
      %4680 = vmatpush1.msra.mxu0 0.0
      %4681 = vmatprep.subr.mxu0 0.0
      %4682 = vmatpush1.msra.mxu0 0.0
      %4683 = vmatprep.subr.mxu0 0.0
      %4684 = vmatpush1.msra.mxu0 0.0
      %4685 = vmatprep.subr.mxu0 0.0
      %4686 = vmatpush1.msra.mxu0 0.0
      %4687 = vmatprep.subr.mxu0 0.0
      %4688 = vmatpush1.msra.mxu0 0.0
      %4689 = vmatprep.subr.mxu0 0.0
      %4690 = vmatpush1.msra.mxu0 0.0
      %4691 = vmatprep.subr.mxu0 %v4375
      %4692 = vmatpush1.msra.mxu0 %v4374
      %4693 = vmatprep.subr.mxu0 %v4372
      %4694 = vmatpush1.msra.mxu0 %v4371
      %4695 = vmatprep.subr.mxu0 %v4369
      %4696 = vmatpush1.msra.mxu0 %v4368
      %4697 = vmatprep.subr.mxu0 %v4366
      %4698 = vmatpush1.msra.mxu0 %v4365
      %4699 = vmatprep.subr.mxu0 %v4363
      %4700 = vmatpush1.msra.mxu0 %v4362
      %4701 = vmatprep.subr.mxu0 %v4360
      %4702 = vmatpush1.msra.mxu0 %v4359
      %4703 = vmatprep.subr.mxu0 %v4357
      %4704 = vmatpush1.msra.mxu0 %v4356
      %4705 = vmatprep.subr.mxu0 %v4354
      %4706 = vmatpush1.msra.mxu0 %v4353
      %4707 = vmatprep.subr.mxu0 0.0
      %4708 = vmatpush2.msra.mxu0 0.0
      %4709 = vmatprep.subr.mxu0 0.0
      %4710 = vmatpush2.msra.mxu0 0.0
      %4711 = vmatprep.subr.mxu0 0.0
      %4712 = vmatpush2.msra.mxu0 0.0
      %4713 = vmatprep.subr.mxu0 0.0
      %4714 = vmatpush2.msra.mxu0 0.0
      %4715 = vmatprep.subr.mxu0 0.0
      %4716 = vmatpush2.msra.mxu0 0.0
      %4717 = vmatprep.subr.mxu0 0.0
      %4718 = vmatpush2.msra.mxu0 0.0
      %4719 = vmatprep.subr.mxu0 0.0
      %4720 = vmatpush2.msra.mxu0 0.0
      %4721 = vmatprep.subr.mxu0 0.0
      %4722 = vmatpush2.msra.mxu0 0.0
      %4723 = vmatprep.subr.mxu0 0.0
      %4724 = vmatpush2.msra.mxu0 0.0
      %4725 = vmatprep.subr.mxu0 0.0
      %4726 = vmatpush2.msra.mxu0 0.0
      %4727 = vmatprep.subr.mxu0 0.0
      %4728 = vmatpush2.msra.mxu0 0.0
      %4729 = vmatprep.subr.mxu0 0.0
      %4730 = vmatpush2.msra.mxu0 0.0
      %4731 = vmatprep.subr.mxu0 0.0
      %4732 = vmatpush2.msra.mxu0 0.0
      %4733 = vmatprep.subr.mxu0 0.0
      %4734 = vmatpush2.msra.mxu0 0.0
      %4735 = vmatprep.subr.mxu0 0.0
      %4736 = vmatpush2.msra.mxu0 0.0
      %4737 = vmatprep.subr.mxu0 0.0
      %4738 = vmatpush2.msra.mxu0 0.0
      %4739 = vmatprep.mubr.f32.mxu0 0.0
      %4740 = vmatmul.mubr.f32.gmra.mxu0 %v4426
      %v4741 = vpop.f32.mrf.mxu0
      %v4742 = vadd.f32 %v4629, %v4741
      %v4743 = vpop.f32.mrf.mxu0
      %v4744 = vadd.f32 %v4631, %v4743
      %4745 = vmatprep.mubr.f32.mxu0 0.0
      %4746 = vmatmul.mubr.f32.gmra.mxu0 %v4429
      %v4747 = vpop.f32.mrf.mxu0
      %v4748 = vadd.f32 %v4635, %v4747
      %v4749 = vpop.f32.mrf.mxu0
      %v4750 = vadd.f32 %v4637, %v4749
      %4751 = vmatprep.mubr.f32.mxu0 0.0
      %4752 = vmatmul.mubr.f32.gmra.mxu0 %v4432
      %v4753 = vpop.f32.mrf.mxu0
      %v4754 = vadd.f32 %v4641, %v4753
      %v4755 = vpop.f32.mrf.mxu0
      %v4756 = vadd.f32 %v4643, %v4755
      %4757 = vmatprep.mubr.f32.mxu0 0.0
      %4758 = vmatmul.mubr.f32.gmra.mxu0 %v4435
      %v4759 = vpop.f32.mrf.mxu0
      %v4760 = vadd.f32 %v4647, %v4759
      %v4761 = vpop.f32.mrf.mxu0
      %v4762 = vadd.f32 %v4649, %v4761
      %4763 = vmatprep.mubr.f32.mxu0 0.0
      %4764 = vmatmul.mubr.f32.gmra.mxu0 %v4438
      %v4765 = vpop.f32.mrf.mxu0
      %v4766 = vadd.f32 %v4653, %v4765
      %v4767 = vpop.f32.mrf.mxu0
      %v4768 = vadd.f32 %v4655, %v4767
      %4769 = vmatprep.mubr.f32.mxu0 0.0
      %4770 = vmatmul.mubr.f32.gmra.mxu0 %v4441
      %v4771 = vpop.f32.mrf.mxu0
      %v4772 = vadd.f32 %v4659, %v4771
      %v4773 = vpop.f32.mrf.mxu0
      %v4774 = vadd.f32 %v4661, %v4773
      %4775 = vmatprep.mubr.f32.mxu0 0.0
      %4776 = vmatmul.mubr.f32.gmra.mxu0 %v4444
      %v4777 = vpop.f32.mrf.mxu0
      %v4778 = vadd.f32 %v4665, %v4777
      %v4779 = vpop.f32.mrf.mxu0
      %v4780 = vadd.f32 %v4667, %v4779
      %4781 = vmatprep.mubr.f32.mxu0 0.0
      %4782 = vmatmul.mubr.f32.gmra.mxu0 %v4447
      %v4783 = vpop.f32.mrf.mxu0
      %v4784 = vadd.f32 %v4671, %v4783
      %v4785 = vpop.f32.mrf.mxu0
      %v4786 = vadd.f32 %v4673, %v4785
      %4787 = vdwg.mxu0
      %4788 = vmatprep.subr.mxu0 0.0
      %4789 = vmatpush1.msra.mxu0 %v4208
      %4790 = vmatprep.subr.mxu0 0.0
      %4791 = vmatpush1.msra.mxu0 %v4205
      %4792 = vmatprep.subr.mxu0 0.0
      %4793 = vmatpush1.msra.mxu0 %v4202
      %4794 = vmatprep.subr.mxu0 0.0
      %4795 = vmatpush1.msra.mxu0 %v4199
      %4796 = vmatprep.subr.mxu0 0.0
      %4797 = vmatpush1.msra.mxu0 %v4196
      %4798 = vmatprep.subr.mxu0 0.0
      %4799 = vmatpush1.msra.mxu0 %v4193
      %4800 = vmatprep.subr.mxu0 0.0
      %4801 = vmatpush1.msra.mxu0 %v4190
      %4802 = vmatprep.subr.mxu0 0.0
      %4803 = vmatpush1.msra.mxu0 %v4187
      %4804 = vmatprep.subr.mxu0 0.0
      %4805 = vmatpush1.msra.mxu0 %v4184
      %4806 = vmatprep.subr.mxu0 0.0
      %4807 = vmatpush1.msra.mxu0 %v4181
      %4808 = vmatprep.subr.mxu0 0.0
      %4809 = vmatpush1.msra.mxu0 %v4178
      %4810 = vmatprep.subr.mxu0 0.0
      %4811 = vmatpush1.msra.mxu0 %v4175
      %4812 = vmatprep.subr.mxu0 0.0
      %4813 = vmatpush1.msra.mxu0 %v4172
      %4814 = vmatprep.subr.mxu0 0.0
      %4815 = vmatpush1.msra.mxu0 %v4169
      %4816 = vmatprep.subr.mxu0 0.0
      %4817 = vmatpush1.msra.mxu0 %v4166
      %4818 = vmatprep.subr.mxu0 0.0
      %4819 = vmatpush1.msra.mxu0 %v4163
      %4820 = vmatprep.subr.mxu0 0.0
      %4821 = vmatpush2.msra.mxu0 %v4256
      %4822 = vmatprep.subr.mxu0 0.0
      %4823 = vmatpush2.msra.mxu0 %v4253
      %4824 = vmatprep.subr.mxu0 0.0
      %4825 = vmatpush2.msra.mxu0 %v4250
      %4826 = vmatprep.subr.mxu0 0.0
      %4827 = vmatpush2.msra.mxu0 %v4247
      %4828 = vmatprep.subr.mxu0 0.0
      %4829 = vmatpush2.msra.mxu0 %v4244
      %4830 = vmatprep.subr.mxu0 0.0
      %4831 = vmatpush2.msra.mxu0 %v4241
      %4832 = vmatprep.subr.mxu0 0.0
      %4833 = vmatpush2.msra.mxu0 %v4238
      %4834 = vmatprep.subr.mxu0 0.0
      %4835 = vmatpush2.msra.mxu0 %v4235
      %4836 = vmatprep.subr.mxu0 0.0
      %4837 = vmatpush2.msra.mxu0 %v4232
      %4838 = vmatprep.subr.mxu0 0.0
      %4839 = vmatpush2.msra.mxu0 %v4229
      %4840 = vmatprep.subr.mxu0 0.0
      %4841 = vmatpush2.msra.mxu0 %v4226
      %4842 = vmatprep.subr.mxu0 0.0
      %4843 = vmatpush2.msra.mxu0 %v4223
      %4844 = vmatprep.subr.mxu0 0.0
      %4845 = vmatpush2.msra.mxu0 %v4220
      %4846 = vmatprep.subr.mxu0 0.0
      %4847 = vmatpush2.msra.mxu0 %v4217
      %4848 = vmatprep.subr.mxu0 0.0
      %4849 = vmatpush2.msra.mxu0 %v4214
      %4850 = vmatprep.subr.mxu0 0.0
      %4851 = vmatpush2.msra.mxu0 %v4211
      %4852 = vmatprep.mubr.f32.mxu0 %v4122
      %4853 = vmatmul.mubr.f32.gmra.mxu0 %v4121
      %v4854 = vpop.f32.mrf.mxu0
      %v4855 = vadd.f32 %v4388, %v4854
      %v4856 = vpop.f32.mrf.mxu0
      %4857 = vmatprep.mubr.f32.mxu0 %v4127
      %4858 = vmatmul.mubr.f32.gmra.mxu0 %v4126
      %v4859 = vpop.f32.mrf.mxu0
      %v4860 = vadd.f32 %v4393, %v4859
      %v4861 = vpop.f32.mrf.mxu0
      %4862 = vmatprep.mubr.f32.mxu0 %v4132
      %4863 = vmatmul.mubr.f32.gmra.mxu0 %v4131
      %v4864 = vpop.f32.mrf.mxu0
      %v4865 = vadd.f32 %v4398, %v4864
      %v4866 = vpop.f32.mrf.mxu0
      %4867 = vmatprep.mubr.f32.mxu0 %v4137
      %4868 = vmatmul.mubr.f32.gmra.mxu0 %v4136
      %v4869 = vpop.f32.mrf.mxu0
      %v4870 = vadd.f32 %v4403, %v4869
      %v4871 = vpop.f32.mrf.mxu0
      %4872 = vmatprep.mubr.f32.mxu0 %v4142
      %4873 = vmatmul.mubr.f32.gmra.mxu0 %v4141
      %v4874 = vpop.f32.mrf.mxu0
      %v4875 = vadd.f32 %v4408, %v4874
      %v4876 = vpop.f32.mrf.mxu0
      %4877 = vmatprep.mubr.f32.mxu0 %v4147
      %4878 = vmatmul.mubr.f32.gmra.mxu0 %v4146
      %v4879 = vpop.f32.mrf.mxu0
      %v4880 = vadd.f32 %v4413, %v4879
      %v4881 = vpop.f32.mrf.mxu0
      %4882 = vmatprep.mubr.f32.mxu0 %v4152
      %4883 = vmatmul.mubr.f32.gmra.mxu0 %v4151
      %v4884 = vpop.f32.mrf.mxu0
      %v4885 = vadd.f32 %v4418, %v4884
      %v4886 = vpop.f32.mrf.mxu0
      %4887 = vmatprep.mubr.f32.mxu0 %v4157
      %4888 = vmatmul.mubr.f32.gmra.mxu0 %v4156
      %v4889 = vpop.f32.mrf.mxu0
      %v4890 = vadd.f32 %v4423, %v4889
      %v4891 = vpop.f32.mrf.mxu0
      %4892 = vdwg.mxu0
      %4893 = vmatprep.subr.mxu0 0.0
      %4894 = vmatpush1.msra.mxu0 %v4304
      %4895 = vmatprep.subr.mxu0 0.0
      %4896 = vmatpush1.msra.mxu0 %v4301
      %4897 = vmatprep.subr.mxu0 0.0
      %4898 = vmatpush1.msra.mxu0 %v4298
      %4899 = vmatprep.subr.mxu0 0.0
      %4900 = vmatpush1.msra.mxu0 %v4295
      %4901 = vmatprep.subr.mxu0 0.0
      %4902 = vmatpush1.msra.mxu0 %v4292
      %4903 = vmatprep.subr.mxu0 0.0
      %4904 = vmatpush1.msra.mxu0 %v4289
      %4905 = vmatprep.subr.mxu0 0.0
      %4906 = vmatpush1.msra.mxu0 %v4286
      %4907 = vmatprep.subr.mxu0 0.0
      %4908 = vmatpush1.msra.mxu0 %v4283
      %4909 = vmatprep.subr.mxu0 0.0
      %4910 = vmatpush1.msra.mxu0 %v4280
      %4911 = vmatprep.subr.mxu0 0.0
      %4912 = vmatpush1.msra.mxu0 %v4277
      %4913 = vmatprep.subr.mxu0 0.0
      %4914 = vmatpush1.msra.mxu0 %v4274
      %4915 = vmatprep.subr.mxu0 0.0
      %4916 = vmatpush1.msra.mxu0 %v4271
      %4917 = vmatprep.subr.mxu0 0.0
      %4918 = vmatpush1.msra.mxu0 %v4268
      %4919 = vmatprep.subr.mxu0 0.0
      %4920 = vmatpush1.msra.mxu0 %v4265
      %4921 = vmatprep.subr.mxu0 0.0
      %4922 = vmatpush1.msra.mxu0 %v4262
      %4923 = vmatprep.subr.mxu0 0.0
      %4924 = vmatpush1.msra.mxu0 %v4259
      %4925 = vmatprep.subr.mxu0 0.0
      %4926 = vmatpush2.msra.mxu0 %v4352
      %4927 = vmatprep.subr.mxu0 0.0
      %4928 = vmatpush2.msra.mxu0 %v4349
      %4929 = vmatprep.subr.mxu0 0.0
      %4930 = vmatpush2.msra.mxu0 %v4346
      %4931 = vmatprep.subr.mxu0 0.0
      %4932 = vmatpush2.msra.mxu0 %v4343
      %4933 = vmatprep.subr.mxu0 0.0
      %4934 = vmatpush2.msra.mxu0 %v4340
      %4935 = vmatprep.subr.mxu0 0.0
      %4936 = vmatpush2.msra.mxu0 %v4337
      %4937 = vmatprep.subr.mxu0 0.0
      %4938 = vmatpush2.msra.mxu0 %v4334
      %4939 = vmatprep.subr.mxu0 0.0
      %4940 = vmatpush2.msra.mxu0 %v4331
      %4941 = vmatprep.subr.mxu0 0.0
      %4942 = vmatpush2.msra.mxu0 %v4328
      %4943 = vmatprep.subr.mxu0 0.0
      %4944 = vmatpush2.msra.mxu0 %v4325
      %4945 = vmatprep.subr.mxu0 0.0
      %4946 = vmatpush2.msra.mxu0 %v4322
      %4947 = vmatprep.subr.mxu0 0.0
      %4948 = vmatpush2.msra.mxu0 %v4319
      %4949 = vmatprep.subr.mxu0 0.0
      %4950 = vmatpush2.msra.mxu0 %v4316
      %4951 = vmatprep.subr.mxu0 0.0
      %4952 = vmatpush2.msra.mxu0 %v4313
      %4953 = vmatprep.subr.mxu0 0.0
      %4954 = vmatpush2.msra.mxu0 %v4310
      %4955 = vmatprep.subr.mxu0 0.0
      %4956 = vmatpush2.msra.mxu0 %v4307
      %4957 = vmatprep.mubr.f32.mxu0 %v4124
      %4958 = vmatmul.mubr.f32.gmra.mxu0 %v4123
      %v4959 = vpop.f32.mrf.mxu0
      %v4960 = vadd.f32 %v4855, %v4959
      %v4961 = vpop.f32.mrf.mxu0
      %4962 = vmatprep.mubr.f32.mxu0 %v4129
      %4963 = vmatmul.mubr.f32.gmra.mxu0 %v4128
      %v4964 = vpop.f32.mrf.mxu0
      %v4965 = vadd.f32 %v4860, %v4964
      %v4966 = vpop.f32.mrf.mxu0
      %4967 = vmatprep.mubr.f32.mxu0 %v4134
      %4968 = vmatmul.mubr.f32.gmra.mxu0 %v4133
      %v4969 = vpop.f32.mrf.mxu0
      %v4970 = vadd.f32 %v4865, %v4969
      %v4971 = vpop.f32.mrf.mxu0
      %4972 = vmatprep.mubr.f32.mxu0 %v4139
      %4973 = vmatmul.mubr.f32.gmra.mxu0 %v4138
      %v4974 = vpop.f32.mrf.mxu0
      %v4975 = vadd.f32 %v4870, %v4974
      %v4976 = vpop.f32.mrf.mxu0
      %4977 = vmatprep.mubr.f32.mxu0 %v4144
      %4978 = vmatmul.mubr.f32.gmra.mxu0 %v4143
      %v4979 = vpop.f32.mrf.mxu0
      %v4980 = vadd.f32 %v4875, %v4979
      %v4981 = vpop.f32.mrf.mxu0
      %4982 = vmatprep.mubr.f32.mxu0 %v4149
      %4983 = vmatmul.mubr.f32.gmra.mxu0 %v4148
      %v4984 = vpop.f32.mrf.mxu0
      %v4985 = vadd.f32 %v4880, %v4984
      %v4986 = vpop.f32.mrf.mxu0
      %4987 = vmatprep.mubr.f32.mxu0 %v4154
      %4988 = vmatmul.mubr.f32.gmra.mxu0 %v4153
      %v4989 = vpop.f32.mrf.mxu0
      %v4990 = vadd.f32 %v4885, %v4989
      %v4991 = vpop.f32.mrf.mxu0
      %4992 = vmatprep.mubr.f32.mxu0 %v4159
      %4993 = vmatmul.mubr.f32.gmra.mxu0 %v4158
      %v4994 = vpop.f32.mrf.mxu0
      %v4995 = vadd.f32 %v4890, %v4994
      %v4996 = vpop.f32.mrf.mxu0
      %4997 = vdwg.mxu0
      %4998 = vmatprep.subr.mxu0 0.0
      %4999 = vmatpush1.msra.mxu0 0.0
      %5000 = vmatprep.subr.mxu0 0.0
      %5001 = vmatpush1.msra.mxu0 0.0
      %5002 = vmatprep.subr.mxu0 0.0
      %5003 = vmatpush1.msra.mxu0 0.0
      %5004 = vmatprep.subr.mxu0 0.0
      %5005 = vmatpush1.msra.mxu0 0.0
      %5006 = vmatprep.subr.mxu0 0.0
      %5007 = vmatpush1.msra.mxu0 0.0
      %5008 = vmatprep.subr.mxu0 0.0
      %5009 = vmatpush1.msra.mxu0 0.0
      %5010 = vmatprep.subr.mxu0 0.0
      %5011 = vmatpush1.msra.mxu0 0.0
      %5012 = vmatprep.subr.mxu0 0.0
      %5013 = vmatpush1.msra.mxu0 0.0
      %5014 = vmatprep.subr.mxu0 0.0
      %5015 = vmatpush1.msra.mxu0 %v4376
      %5016 = vmatprep.subr.mxu0 0.0
      %5017 = vmatpush1.msra.mxu0 %v4373
      %5018 = vmatprep.subr.mxu0 0.0
      %5019 = vmatpush1.msra.mxu0 %v4370
      %5020 = vmatprep.subr.mxu0 0.0
      %5021 = vmatpush1.msra.mxu0 %v4367
      %5022 = vmatprep.subr.mxu0 0.0
      %5023 = vmatpush1.msra.mxu0 %v4364
      %5024 = vmatprep.subr.mxu0 0.0
      %5025 = vmatpush1.msra.mxu0 %v4361
      %5026 = vmatprep.subr.mxu0 0.0
      %5027 = vmatpush1.msra.mxu0 %v4358
      %5028 = vmatprep.subr.mxu0 0.0
      %5029 = vmatpush1.msra.mxu0 %v4355
      %5030 = vmatprep.subr.mxu0 0.0
      %5031 = vmatpush2.msra.mxu0 0.0
      %5032 = vmatprep.subr.mxu0 0.0
      %5033 = vmatpush2.msra.mxu0 0.0
      %5034 = vmatprep.subr.mxu0 0.0
      %5035 = vmatpush2.msra.mxu0 0.0
      %5036 = vmatprep.subr.mxu0 0.0
      %5037 = vmatpush2.msra.mxu0 0.0
      %5038 = vmatprep.subr.mxu0 0.0
      %5039 = vmatpush2.msra.mxu0 0.0
      %5040 = vmatprep.subr.mxu0 0.0
      %5041 = vmatpush2.msra.mxu0 0.0
      %5042 = vmatprep.subr.mxu0 0.0
      %5043 = vmatpush2.msra.mxu0 0.0
      %5044 = vmatprep.subr.mxu0 0.0
      %5045 = vmatpush2.msra.mxu0 0.0
      %5046 = vmatprep.subr.mxu0 0.0
      %5047 = vmatpush2.msra.mxu0 0.0
      %5048 = vmatprep.subr.mxu0 0.0
      %5049 = vmatpush2.msra.mxu0 0.0
      %5050 = vmatprep.subr.mxu0 0.0
      %5051 = vmatpush2.msra.mxu0 0.0
      %5052 = vmatprep.subr.mxu0 0.0
      %5053 = vmatpush2.msra.mxu0 0.0
      %5054 = vmatprep.subr.mxu0 0.0
      %5055 = vmatpush2.msra.mxu0 0.0
      %5056 = vmatprep.subr.mxu0 0.0
      %5057 = vmatpush2.msra.mxu0 0.0
      %5058 = vmatprep.subr.mxu0 0.0
      %5059 = vmatpush2.msra.mxu0 0.0
      %5060 = vmatprep.subr.mxu0 0.0
      %5061 = vmatpush2.msra.mxu0 0.0
      %5062 = vmatprep.mubr.f32.mxu0 0.0
      %5063 = vmatmul.mubr.f32.gmra.mxu0 %v4426
      %v5064 = vpop.f32.mrf.mxu0
      %v5065 = vadd.f32 %v4960, %v5064
      %v5066 = vpop.f32.mrf.mxu0
      %5067 = vmatprep.mubr.f32.mxu0 0.0
      %5068 = vmatmul.mubr.f32.gmra.mxu0 %v4429
      %v5069 = vpop.f32.mrf.mxu0
      %v5070 = vadd.f32 %v4965, %v5069
      %v5071 = vpop.f32.mrf.mxu0
      %5072 = vmatprep.mubr.f32.mxu0 0.0
      %5073 = vmatmul.mubr.f32.gmra.mxu0 %v4432
      %v5074 = vpop.f32.mrf.mxu0
      %v5075 = vadd.f32 %v4970, %v5074
      %v5076 = vpop.f32.mrf.mxu0
      %5077 = vmatprep.mubr.f32.mxu0 0.0
      %5078 = vmatmul.mubr.f32.gmra.mxu0 %v4435
      %v5079 = vpop.f32.mrf.mxu0
      %v5080 = vadd.f32 %v4975, %v5079
      %v5081 = vpop.f32.mrf.mxu0
      %5082 = vmatprep.mubr.f32.mxu0 0.0
      %5083 = vmatmul.mubr.f32.gmra.mxu0 %v4438
      %v5084 = vpop.f32.mrf.mxu0
      %v5085 = vadd.f32 %v4980, %v5084
      %v5086 = vpop.f32.mrf.mxu0
      %5087 = vmatprep.mubr.f32.mxu0 0.0
      %5088 = vmatmul.mubr.f32.gmra.mxu0 %v4441
      %v5089 = vpop.f32.mrf.mxu0
      %v5090 = vadd.f32 %v4985, %v5089
      %v5091 = vpop.f32.mrf.mxu0
      %5092 = vmatprep.mubr.f32.mxu0 0.0
      %5093 = vmatmul.mubr.f32.gmra.mxu0 %v4444
      %v5094 = vpop.f32.mrf.mxu0
      %v5095 = vadd.f32 %v4990, %v5094
      %v5096 = vpop.f32.mrf.mxu0
      %5097 = vmatprep.mubr.f32.mxu0 0.0
      %5098 = vmatmul.mubr.f32.gmra.mxu0 %v4447
      %v5099 = vpop.f32.mrf.mxu0
      %v5100 = vadd.f32 %v4995, %v5099
      %v5101 = vpop.f32.mrf.mxu0
      %5102 = vdwg.mxu0
      %v5103 = vld [vmem:[%s246] sm:$0xff]
      %v5104 = vld [vmem:[%s246 + $0x8] sm:$0xff]
      %v5105 = vld [vmem:[%s246 + $0x10] sm:$0xff]
      %v5106 = vld [vmem:[%s246 + $0x18] sm:$0xff]
      %v5107 = vld [vmem:[%s246 + $0x20] sm:$0xff]
      %v5108 = vld [vmem:[%s246 + $0x28] sm:$0xff]
      %v5109 = vld [vmem:[%s246 + $0x30] sm:$0xff]
      %v5110 = vld [vmem:[%s246 + $0x38] sm:$0xff]
      %v5111 = vld [vmem:[%s246 + $0x40] sm:$0xff]
      %v5112 = vld [vmem:[%s246 + $0x48] sm:$0xff]
      %v5113 = vld [vmem:[%s246 + $0x50] sm:$0xff]
      %v5114 = vld [vmem:[%s246 + $0x58] sm:$0xff]
      %v5115 = vld [vmem:[%s246 + $0x60] sm:$0xff]
      %v5116 = vld [vmem:[%s246 + $0x68] sm:$0xff]
      %v5117 = vld [vmem:[%s246 + $0x70] sm:$0xff]
      %v5118 = vld [vmem:[%s246 + $0x78] sm:$0xff]
      %v5119 = vld [vmem:[%s246 + $0x80] sm:$0xff]
      %v5120 = vld [vmem:[%s246 + $0x88] sm:$0xff]
      %v5121 = vld [vmem:[%s246 + $0x90] sm:$0xff]
      %v5122 = vld [vmem:[%s246 + $0x98] sm:$0xff]
      %v5123 = vld [vmem:[%s246 + $0xa0] sm:$0xff]
      %v5124 = vld [vmem:[%s246 + $0xa8] sm:$0xff]
      %v5125 = vld [vmem:[%s246 + $0xb0] sm:$0xff]
      %v5126 = vld [vmem:[%s246 + $0xb8] sm:$0xff]
      %v5127 = vmul.f32 %v4742, 0.1
      %v5128 = vmul.f32 %v4744, 0.1
      %v5129 = vmul.f32 %v5065, 0.1
      %v5130 = vmul.f32 %v4748, 0.1
      %v5131 = vmul.f32 %v4750, 0.1
      %v5132 = vmul.f32 %v5070, 0.1
      %v5133 = vmul.f32 %v4754, 0.1
      %v5134 = vmul.f32 %v4756, 0.1
      %v5135 = vmul.f32 %v5075, 0.1
      %v5136 = vmul.f32 %v4760, 0.1
      %v5137 = vmul.f32 %v4762, 0.1
      %v5138 = vmul.f32 %v5080, 0.1
      %v5139 = vmul.f32 %v4766, 0.1
      %v5140 = vmul.f32 %v4768, 0.1
      %v5141 = vmul.f32 %v5085, 0.1
      %v5142 = vmul.f32 %v4772, 0.1
      %v5143 = vmul.f32 %v4774, 0.1
      %v5144 = vmul.f32 %v5090, 0.1
      %v5145 = vmul.f32 %v4778, 0.1
      %v5146 = vmul.f32 %v4780, 0.1
      %v5147 = vmul.f32 %v5095, 0.1
      %v5148 = vmul.f32 %v4784, 0.1
      %v5149 = vmul.f32 %v4786, 0.1
      %v5150 = vmul.f32 %v5100, 0.1
      %5175 = vrot.lane.b32.xlu0 %v5103, 109
      %v5176 = vpop.permute.xlu0 %5175
      %5177 = vrot.lane.b32.xlu0 %v5104, 109
      %v5178 = vpop.permute.xlu0 %5177
      %5179 = vrot.lane.b32.xlu0 %v5105, 109
      %v5180 = vpop.permute.xlu0 %5179
      %5181 = vrot.lane.b32.xlu0 %v5106, 109
      %v5182 = vpop.permute.xlu0 %5181
      %5183 = vrot.lane.b32.xlu0 %v5107, 109
      %v5184 = vpop.permute.xlu0 %5183
      %5185 = vrot.lane.b32.xlu0 %v5108, 109
      %v5186 = vpop.permute.xlu0 %5185
      %5187 = vrot.lane.b32.xlu0 %v5109, 109
      %v5188 = vpop.permute.xlu0 %5187
      %5189 = vrot.lane.b32.xlu0 %v5110, 109
      %v5190 = vpop.permute.xlu0 %5189
      %5191 = vrot.lane.b32.xlu0 %v5111, 109
      %v5192 = vpop.permute.xlu0 %5191
      %5193 = vrot.lane.b32.xlu0 %v5112, 109
      %v5194 = vpop.permute.xlu0 %5193
      %5195 = vrot.lane.b32.xlu0 %v5113, 109
      %v5196 = vpop.permute.xlu0 %5195
      %5197 = vrot.lane.b32.xlu0 %v5114, 109
      %v5198 = vpop.permute.xlu0 %5197
      %5199 = vrot.lane.b32.xlu0 %v5115, 109
      %v5200 = vpop.permute.xlu0 %5199
      %5201 = vrot.lane.b32.xlu0 %v5116, 109
      %v5202 = vpop.permute.xlu0 %5201
      %5203 = vrot.lane.b32.xlu0 %v5117, 109
      %v5204 = vpop.permute.xlu0 %5203
      %5205 = vrot.lane.b32.xlu0 %v5118, 109
      %v5206 = vpop.permute.xlu0 %5205
      %5207 = vrot.lane.b32.xlu0 %v5119, 109
      %v5208 = vpop.permute.xlu0 %5207
      %5209 = vrot.lane.b32.xlu0 %v5120, 109
      %v5210 = vpop.permute.xlu0 %5209
      %5211 = vrot.lane.b32.xlu0 %v5121, 109
      %v5212 = vpop.permute.xlu0 %5211
      %5213 = vrot.lane.b32.xlu0 %v5122, 109
      %v5214 = vpop.permute.xlu0 %5213
      %5215 = vrot.lane.b32.xlu0 %v5123, 109
      %v5216 = vpop.permute.xlu0 %5215
      %5217 = vrot.lane.b32.xlu0 %v5124, 109
      %v5218 = vpop.permute.xlu0 %5217
      %5219 = vrot.lane.b32.xlu0 %v5125, 109
      %v5220 = vpop.permute.xlu0 %5219
      %5221 = vrot.lane.b32.xlu0 %v5126, 109
      %v5222 = vpop.permute.xlu0 %5221
      %v5223 = vsel %vm880, %v5176, %v5178
      %v5224 = vsel %vm880, %v5178, %v5180
      %v5225 = vsel %vm880, %v5182, %v5184
      %v5226 = vsel %vm880, %v5184, %v5186
      %v5227 = vsel %vm880, %v5188, %v5190
      %v5228 = vsel %vm880, %v5190, %v5192
      %v5229 = vsel %vm880, %v5194, %v5196
      %v5230 = vsel %vm880, %v5196, %v5198
      %v5231 = vsel %vm880, %v5200, %v5202
      %v5232 = vsel %vm880, %v5202, %v5204
      %v5233 = vsel %vm880, %v5206, %v5208
      %v5234 = vsel %vm880, %v5208, %v5210
      %v5235 = vsel %vm880, %v5212, %v5214
      %v5236 = vsel %vm880, %v5214, %v5216
      %v5237 = vsel %vm880, %v5218, %v5220
      %v5238 = vsel %vm880, %v5220, %v5222
      %v5263 = vadd.f32 %v5127, %v5223
      %v5264 = vadd.f32 %v5128, %v5224
      %v5265 = vadd.f32 %v5129, %v5180
      %v5266 = vadd.f32 %v5130, %v5225
      %v5267 = vadd.f32 %v5131, %v5226
      %v5268 = vadd.f32 %v5132, %v5186
      %v5269 = vadd.f32 %v5133, %v5227
      %v5270 = vadd.f32 %v5134, %v5228
      %v5271 = vadd.f32 %v5135, %v5192
      %v5272 = vadd.f32 %v5136, %v5229
      %v5273 = vadd.f32 %v5137, %v5230
      %v5274 = vadd.f32 %v5138, %v5198
      %v5275 = vadd.f32 %v5139, %v5231
      %v5276 = vadd.f32 %v5140, %v5232
      %v5277 = vadd.f32 %v5141, %v5204
      %v5278 = vadd.f32 %v5142, %v5233
      %v5279 = vadd.f32 %v5143, %v5234
      %v5280 = vadd.f32 %v5144, %v5210
      %v5281 = vadd.f32 %v5145, %v5235
      %v5282 = vadd.f32 %v5146, %v5236
      %v5283 = vadd.f32 %v5147, %v5216
      %v5284 = vadd.f32 %v5148, %v5237
      %v5285 = vadd.f32 %v5149, %v5238
      %v5286 = vadd.f32 %v5150, %v5222
      %5287 = vst [vmem:[%s251] sm:$0xff] %v5263
      %5288 = vst [vmem:[%s251 + $0x8] sm:$0xff] %v5264
      %5289 = vst.msk [vmem:[%s251 + $0x10] sm:$0xff] %vm278, %v5265
      %5290 = vst [vmem:[%s251 + $0x18] sm:$0xff] %v5266
      %5291 = vst [vmem:[%s251 + $0x20] sm:$0xff] %v5267
      %5292 = vst.msk [vmem:[%s251 + $0x28] sm:$0xff] %vm278, %v5268
      %5293 = vst [vmem:[%s251 + $0x30] sm:$0xff] %v5269
      %5294 = vst [vmem:[%s251 + $0x38] sm:$0xff] %v5270
      %5295 = vst.msk [vmem:[%s251 + $0x40] sm:$0xff] %vm278, %v5271
      %5296 = vst [vmem:[%s251 + $0x48] sm:$0xff] %v5272
      %5297 = vst [vmem:[%s251 + $0x50] sm:$0xff] %v5273
      %5298 = vst.msk [vmem:[%s251 + $0x58] sm:$0xff] %vm278, %v5274
      %5299 = vst [vmem:[%s251 + $0x60] sm:$0xff] %v5275
      %5300 = vst [vmem:[%s251 + $0x68] sm:$0xff] %v5276
      %5301 = vst.msk [vmem:[%s251 + $0x70] sm:$0xff] %vm278, %v5277
      %5302 = vst [vmem:[%s251 + $0x78] sm:$0xff] %v5278
      %5303 = vst [vmem:[%s251 + $0x80] sm:$0xff] %v5279
      %5304 = vst.msk [vmem:[%s251 + $0x88] sm:$0xff] %vm278, %v5280
      %5305 = vst [vmem:[%s251 + $0x90] sm:$0xff] %v5281
      %5306 = vst [vmem:[%s251 + $0x98] sm:$0xff] %v5282
      %5307 = vst.msk [vmem:[%s251 + $0xa0] sm:$0xff] %vm278, %v5283
      %5308 = vst [vmem:[%s251 + $0xa8] sm:$0xff] %v5284
      %5309 = vst [vmem:[%s251 + $0xb0] sm:$0xff] %v5285
      %5310 = vst.msk [vmem:[%s251 + $0xb8] sm:$0xff] %vm278, %v5286
      %p5311 = scmp.lt.s32.totalorder %s17, 1
      %s5312 = scalar_select %p5311, %s17, 1
      %s5313 = smul.addr %s5312, 24
      %s5314 = smul.addr %s5313, 8
      %s5315 = scalar_lea.vmem %s6, %s5314
      // Predicated region
      $region45: #{conv_relu_res_block_scale01.1} parent=43 // pred_check
        %p5316 = pneg %p166
      $region46: #{conv_relu_res_block_scale01.1} parent=43 // pred_check_branch
        %5318 = sbr.rel (%p5316) target = $region48
      $region47: #{conv_relu_res_block_scale01.1} parent=43 // pred_region
        _
      $region48: #{conv_relu_res_block_scale01.1} parent=43 // pred_fallthru
        _
    $region44: #{conv_relu_res_block_scale01.1} parent=5 // pred_fallthru
      _
    %p5319 = scmp.le.s32.totalorder 2, %s12
    // Predicated region
    $region49: #{conv_relu_res_block_scale01.1} parent=5 // pred_check
      %p5320 = pneg %p5319
    $region50: #{conv_relu_res_block_scale01.1} parent=5 // pred_check_branch
      %5322 = sbr.rel (%p5320) target = $region52
    $region51: #{conv_relu_res_block_scale01.1} parent=5 // pred_region
      %s5323 = ssub.s32 %s12, 2
      // Predicated region
      $region53: #{conv_relu_res_block_scale01.1} parent=51 // pred_check
        %p5324 = pneg %p172
      $region54: #{conv_relu_res_block_scale01.1} parent=51 // pred_check_branch
        %5326 = sbr.rel (%p5324) target = $region56
      $region55: #{conv_relu_res_block_scale01.1} parent=51 // pred_region
        %p5327 = scmp.lt.s32.totalorder %s18, 1
        %s5328 = scalar_select %p5327, %s18, 1
        %s5329 = smul.addr %s5328, 24
        %s5330 = smul.addr %s5329, 8
        %s5331 = scalar_lea.vmem %s6, %s5330
      $region56: #{conv_relu_res_block_scale01.1} parent=51 // pred_fallthru
        _
    $region52: #{conv_relu_res_block_scale01.1} parent=5 // pred_fallthru
      _
  $region6: #{conv_relu_res_block_scale01.1} parent=0 // loop_footer
    %s16 = sadd.s32 1, %s12
  $region7: #{conv_relu_res_block_scale01.1} parent=0 // loop_footer_branch
    %11 = sbr.rel target = $region3
  $region8: #{conv_relu_res_block_scale01.1} parent=0 // loop_exit
    _

</llo_original>
